<compile_context>
chip_gen: v6e
topology: v6e:2x2x1
jax: 0.10.0
libtpu: 0.0.40
codegen_flags: <defaults>
</compile_context>

<pallas_src>
import jax
import jax.numpy as jnp
from jax.experimental import pallas as pl
from jax.experimental.pallas import tpu as pltpu

HP = 128  # padded hidden width (lanes)
LP = 128  # padded latent width (lanes)


def _round_up(v, m):
    return (v + m - 1) // m * m


def _pack_params(params, fp):
    """Concatenate all weights/biases into one [rows, 128] bf16 slab."""
    w1r, b1r, w2r, b2r, w1c, b1c, wmu, bmu, wls, bls = params
    h = w1r.shape[1]
    l = w2r.shape[1]
    assert h <= HP and l <= LP

    def pad_mat(w, rows):
        out = jnp.zeros((rows, 128), jnp.float32)
        return out.at[: w.shape[0], : w.shape[1]].set(w)

    bias_blk = jnp.zeros((8, 128), jnp.float32)
    for i, (b, width) in enumerate(
        [(b1r, h), (b1c, h), (b2r, l), (bmu, l), (bls, l)]
    ):
        bias_blk = bias_blk.at[i, :width].set(b)

    slab = jnp.concatenate(
        [
            pad_mat(w1r, fp),
            pad_mat(w1c, fp),
            pad_mat(w2r, HP),
            pad_mat(wmu, HP),
            pad_mat(wls, HP),
            bias_blk,
        ],
        axis=0,
    ).astype(jnp.bfloat16)

    off = {
        "w1r": 0,
        "w1c": fp,
        "w2r": 2 * fp,
        "wmu": 2 * fp + HP,
        "wls": 2 * fp + 2 * HP,
        "bias": 2 * fp + 3 * HP,
    }
    return slab, off


def _make_kernel(fp, off):
    def kernel(ax_ref, ac_ref, x_ref, p_ref, reg_ref, mu_ref, ls_ref):
        tb, n, _ = x_ref.shape
        rows = tb * n

        # fold the graph-batch dim into rows for the weight matmuls
        x2 = x_ref[...].reshape(rows, fp)  # bf16 [rows, Fp]
        ax = ax_ref[...]                   # bf16 [tb, n, n]
        ac = ac_ref[...]

        # single-slab parameters; static slices in VMEM are free
        w1r = p_ref[off["w1r"]: off["w1r"] + fp, :]
        w1c = p_ref[off["w1c"]: off["w1c"] + fp, :]
        w2r = p_ref[off["w2r"]: off["w2r"] + HP, :]
        wmu = p_ref[off["wmu"]: off["wmu"] + HP, :]
        wls = p_ref[off["wls"]: off["wls"] + HP, :]
        bias = p_ref[off["bias"]: off["bias"] + 8, :].astype(jnp.float32)
        b1r, b1c, b2r, bmu, bls = (bias[i:i + 1, :] for i in range(5))

        def aggregate(a, m):
            # per-graph A_hat @ M with f32 accumulation
            c = m.shape[-1]
            m3 = m.astype(jnp.bfloat16).reshape(tb, n, c)
            out = jnp.einsum(
                "bij,bjc->bic", a, m3, preferred_element_type=jnp.float32
            )
            return out.reshape(rows, c)

        # layer 1 (conv1 of each encoder) + ReLU
        h_r = jnp.maximum(
            aggregate(ax, jnp.dot(x2, w1r, preferred_element_type=jnp.float32))
            + b1r,
            0.0,
        ).astype(jnp.bfloat16)
        h_c = jnp.maximum(
            aggregate(ac, jnp.dot(x2, w1c, preferred_element_type=jnp.float32))
            + b1c,
            0.0,
        ).astype(jnp.bfloat16)

        # layer 2: reg conv_mu, recon conv_mu, recon conv_logstd
        z_reg = aggregate(
            ax, jnp.dot(h_r, w2r, preferred_element_type=jnp.float32)
        ) + b2r
        z_mu = aggregate(
            ac, jnp.dot(h_c, wmu, preferred_element_type=jnp.float32)
        ) + bmu
        z_ls = aggregate(
            ac, jnp.dot(h_c, wls, preferred_element_type=jnp.float32)
        ) + bls

        reg_ref[...] = z_reg.reshape(tb, n, LP).astype(reg_ref.dtype)
        mu_ref[...] = z_mu.reshape(tb, n, LP).astype(mu_ref.dtype)
        ls_ref[...] = z_ls.reshape(tb, n, LP).astype(ls_ref.dtype)

    return kernel


def cgvae_forward(a_x, a_c, x, params, *, tile_graphs=16):
    """Fused CGVAE forward (eval mode) for a batch of graphs.

    a_x, a_c: [B, N, N] normalized dense adjacencies (x-edges / combined edges)
    x:        [B, N, F] node features
    Returns (z, regularization_mu, recon_mu, recon_logstd), each [B, N, L].
    """
    w1r, b1r, w2r, b2r, w1c, b1c, wmu, bmu, wls, bls = params
    B, N, F = x.shape
    L = w2r.shape[1]

    TB = tile_graphs
    Fp = _round_up(F, 8)
    Np = _round_up(N, 8)
    Bp = _round_up(B, TB)

    # bf16 inputs (half the HBM/VMEM traffic, bf16-native MXU); f32 accumulation
    xb = jnp.zeros((Bp, Np, Fp), jnp.bfloat16).at[:B, :N, :F].set(
        x.astype(jnp.bfloat16)
    )
    axb = jnp.zeros((Bp, Np, Np), jnp.bfloat16).at[:B, :N, :N].set(
        a_x.astype(jnp.bfloat16)
    )
    acb = jnp.zeros((Bp, Np, Np), jnp.bfloat16).at[:B, :N, :N].set(
        a_c.astype(jnp.bfloat16)
    )

    slab, off = _pack_params(params, Fp)
    kernel = _make_kernel(Fp, off)

    num_tiles = Bp // TB
    out_sds = jax.ShapeDtypeStruct((Bp, Np, LP), jnp.float32)

    reg_mu, recon_mu, recon_logstd = pl.pallas_call(
        kernel,
        out_shape=(out_sds, out_sds, out_sds),
        grid=(num_tiles,),
        in_specs=[
            pl.BlockSpec((TB, Np, Np), lambda g: (g, 0, 0)),   # A_x tile
            pl.BlockSpec((TB, Np, Np), lambda g: (g, 0, 0)),   # A_c tile
            pl.BlockSpec((TB, Np, Fp), lambda g: (g, 0, 0)),   # X tile
            pl.BlockSpec(slab.shape, lambda g: (0, 0)),        # params, resident
        ],
        out_specs=(
            pl.BlockSpec((TB, Np, LP), lambda g: (g, 0, 0)),
            pl.BlockSpec((TB, Np, LP), lambda g: (g, 0, 0)),
            pl.BlockSpec((TB, Np, LP), lambda g: (g, 0, 0)),
        ),
        compiler_params=pltpu.CompilerParams(
            dimension_semantics=("parallel",),     # shards batch tiles on v7x's 2 TCs
            vmem_limit_bytes=32 * 1024 * 1024,
        ),
    )(axb, acb, xb, slab)

    reg_mu = reg_mu[:B, :N, :L]
    recon_mu = recon_mu[:B, :N, :L]
    recon_logstd = recon_logstd[:B, :N, :L]
    z = recon_mu  # reparametrize, eval mode (training would add eps*exp(logstd))
    return z, reg_mu, recon_mu, recon_logstd


def build_normalized_adjacency(edge_index, num_nodes):
    """Plain-JAX glue: dense A_hat = D^-1/2 (A + I) D^-1/2 (PyG gcn_norm).
    Note: duplicate edges collapse to weight 1 (simple graphs only)."""
    src, dst = edge_index[0], edge_index[1]
    a = jnp.zeros((num_nodes, num_nodes), jnp.float32)
    a = a.at[dst, src].set(1.0)                      # message flows src -> dst
    a = jnp.maximum(a, jnp.eye(num_nodes, dtype=jnp.float32))  # self loops
    deg = jnp.sum(a, axis=1)
    d_inv_sqrt = jnp.where(deg > 0, jax.lax.rsqrt(deg), 0.0)
    return d_inv_sqrt[:, None] * a * d_inv_sqrt[None, :]


def init_params(key, in_channels, hidden_size, latent_size):
    ks = jax.random.split(key, 10)

    def glorot(k, fi, fo):
        lim = jnp.sqrt(6.0 / (fi + fo))
        return jax.random.uniform(k, (fi, fo), jnp.float32, minval=-lim, maxval=lim)

    w1r = glorot(ks[0], in_channels, hidden_size)
    w2r = glorot(ks[1], hidden_size, latent_size)
    w1c = glorot(ks[2], in_channels, hidden_size)
    wmu = glorot(ks[3], hidden_size, latent_size)
    wls = glorot(ks[4], hidden_size, latent_size)
    # small nonzero biases so the bias path is exercised
    b1r = 0.02 * jax.random.normal(ks[5], (hidden_size,), jnp.float32)
    b1c = 0.02 * jax.random.normal(ks[6], (hidden_size,), jnp.float32)
    b2r = 0.02 * jax.random.normal(ks[7], (latent_size,), jnp.float32)
    bmu = 0.02 * jax.random.normal(ks[8], (latent_size,), jnp.float32)
    bls = 0.02 * jax.random.normal(ks[9], (latent_size,), jnp.float32)
    return (w1r, b1r, w2r, b2r, w1c, b1c, wmu, bmu, wls, bls)


def ref_forward(a_x, a_c, x, params):
    """Pure-JAX f32 reference of the CGVAE eval-mode forward."""
    w1r, b1r, w2r, b2r, w1c, b1c, wmu, bmu, wls, bls = params
    agg = lambda a, m: jnp.einsum("bij,bjc->bic", a, m)
    h_r = jnp.maximum(agg(a_x, x @ w1r) + b1r, 0.0)
    z_reg = agg(a_x, h_r @ w2r) + b2r
    h_c = jnp.maximum(agg(a_c, x @ w1c) + b1c, 0.0)
    z_mu = agg(a_c, h_c @ wmu) + bmu
    z_ls = agg(a_c, h_c @ wls) + bls
    return z_reg, z_mu, z_ls


if __name__ == "__main__":
    key = jax.random.PRNGKey(0)
    k_x, k_p = jax.random.split(key)

    # batch of small graphs: 32 graphs x 8 nodes = 256 rows folded onto the MXU
    B, N = 32, 8
    F, H, L = 4, 32, 16
    TB = 16  # graphs per grid step -> 128 folded rows per step, grid=(2,)

    x = jax.random.normal(k_x, (B, N, F), dtype=jnp.float32)

    # masked_x edges: ring (both directions); masked_y edges: skip-2 ring (disjoint)
    s = jnp.arange(N)
    t = (s + 1) % N
    u = (s + 2) % N
    ei_x = jnp.concatenate([jnp.stack([s, t]), jnp.stack([t, s])], axis=1)
    ei_y = jnp.concatenate([jnp.stack([s, u]), jnp.stack([u, s])], axis=1)

    a_x = build_normalized_adjacency(ei_x, N)                                  # [N, N]
    a_c = build_normalized_adjacency(jnp.concatenate([ei_x, ei_y], axis=1), N)
    a_x = jnp.broadcast_to(a_x, (B, N, N))
    a_c = jnp.broadcast_to(a_c, (B, N, N))

    params = init_params(k_p, F, H, L)

    z, reg_mu, recon_mu, recon_logstd = cgvae_forward(
        a_x, a_c, x, params, tile_graphs=TB
    )
    jax.block_until_ready((z, reg_mu, recon_mu, recon_logstd))

    # pure-JAX f32 reference (kernel runs in bf16 with f32 accumulation)
    ref_reg, ref_mu, ref_ls = ref_forward(a_x, a_c, x, params)
    assert z.shape == (B, N, L)
    assert jnp.allclose(reg_mu, ref_reg, atol=5e-2, rtol=5e-2)
    assert jnp.allclose(recon_mu, ref_mu, atol=5e-2, rtol=5e-2)
    assert jnp.allclose(recon_logstd, ref_ls, atol=5e-2, rtol=5e-2)
    assert jnp.allclose(z, recon_mu)

    print("KERNEL_OK")
</pallas_src>

<mosaic_0001>
module attributes {stable_mosaic.version = 11 : i64} {
  func.func @kernel(%arg0: i32, %arg1: memref<16x8x8xbf16, #tpu.memory_space<vmem>>, %arg2: memref<16x8x8xbf16, #tpu.memory_space<vmem>>, %arg3: memref<16x8x8xbf16, #tpu.memory_space<vmem>>, %arg4: memref<408x128xbf16, #tpu.memory_space<vmem>>, %arg5: memref<16x8x128xf32, #tpu.memory_space<vmem>>, %arg6: memref<16x8x128xf32, #tpu.memory_space<vmem>>, %arg7: memref<16x8x128xf32, #tpu.memory_space<vmem>>) attributes {dimension_semantics = [#tpu.dimension_semantics<parallel>], iteration_bounds = array<i64: 2>, scalar_prefetch = 0 : i64, scratch_operands = 0 : i64, tpu.core_type = #tpu.core_type<tc>, window_params = [{transform_indices = @transform_0, window_bounds = array<i64: 16, 8, 8>}, {transform_indices = @transform_1, window_bounds = array<i64: 16, 8, 8>}, {transform_indices = @transform_2, window_bounds = array<i64: 16, 8, 8>}, {pipeline_mode = #tpu.pipeline_mode<synchronous>, transform_indices = @transform_3, window_bounds = array<i64: 408, 128>}, {transform_indices = @transform_4, window_bounds = array<i64: 16, 8, 128>}, {transform_indices = @transform_5, window_bounds = array<i64: 16, 8, 128>}, {transform_indices = @transform_6, window_bounds = array<i64: 16, 8, 128>}]} {
    %c0 = arith.constant 0 : index
    %c0_0 = arith.constant 0 : index
    %c0_1 = arith.constant 0 : index
    %0 = vector.load %arg3[%c0, %c0_0, %c0_1] : memref<16x8x8xbf16, #tpu.memory_space<vmem>>, vector<16x8x8xbf16>
    %1 = vector.shape_cast %0 : vector<16x8x8xbf16> to vector<128x8xbf16>
    %c0_2 = arith.constant 0 : index
    %c0_3 = arith.constant 0 : index
    %c0_4 = arith.constant 0 : index
    %2 = vector.load %arg1[%c0_2, %c0_3, %c0_4] : memref<16x8x8xbf16, #tpu.memory_space<vmem>>, vector<16x8x8xbf16>
    %c0_5 = arith.constant 0 : index
    %c0_6 = arith.constant 0 : index
    %c0_7 = arith.constant 0 : index
    %3 = vector.load %arg2[%c0_5, %c0_6, %c0_7] : memref<16x8x8xbf16, #tpu.memory_space<vmem>>, vector<16x8x8xbf16>
    %c0_8 = arith.constant 0 : index
    %c0_9 = arith.constant 0 : index
    %4 = vector.load %arg4[%c0_8, %c0_9] : memref<408x128xbf16, #tpu.memory_space<vmem>>, vector<8x128xbf16>
    %c8 = arith.constant 8 : index
    %c0_10 = arith.constant 0 : index
    %5 = vector.load %arg4[%c8, %c0_10] : memref<408x128xbf16, #tpu.memory_space<vmem>>, vector<8x128xbf16>
    %c16 = arith.constant 16 : index
    %c0_11 = arith.constant 0 : index
    %6 = vector.load %arg4[%c16, %c0_11] : memref<408x128xbf16, #tpu.memory_space<vmem>>, vector<128x128xbf16>
    %c144 = arith.constant 144 : index
    %c0_12 = arith.constant 0 : index
    %7 = vector.load %arg4[%c144, %c0_12] : memref<408x128xbf16, #tpu.memory_space<vmem>>, vector<128x128xbf16>
    %c272 = arith.constant 272 : index
    %c0_13 = arith.constant 0 : index
    %8 = vector.load %arg4[%c272, %c0_13] : memref<408x128xbf16, #tpu.memory_space<vmem>>, vector<128x128xbf16>
    %c400 = arith.constant 400 : index
    %c0_14 = arith.constant 0 : index
    %9 = vector.load %arg4[%c400, %c0_14] : memref<408x128xbf16, #tpu.memory_space<vmem>>, vector<8x128xbf16>
    %10 = arith.extf %9 : vector<8x128xbf16> to vector<8x128xf32>
    %11 = vector.extract_strided_slice %10 {offsets = [0, 0], sizes = [1, 128], strides = [1, 1]} : vector<8x128xf32> to vector<1x128xf32>
    %12 = vector.extract_strided_slice %10 {offsets = [1, 0], sizes = [1, 128], strides = [1, 1]} : vector<8x128xf32> to vector<1x128xf32>
    %13 = vector.extract_strided_slice %10 {offsets = [2, 0], sizes = [1, 128], strides = [1, 1]} : vector<8x128xf32> to vector<1x128xf32>
    %14 = vector.extract_strided_slice %10 {offsets = [3, 0], sizes = [1, 128], strides = [1, 1]} : vector<8x128xf32> to vector<1x128xf32>
    %15 = vector.extract_strided_slice %10 {offsets = [4, 0], sizes = [1, 128], strides = [1, 1]} : vector<8x128xf32> to vector<1x128xf32>
    %cst = arith.constant dense<0.000000e+00> : vector<128x128xf32>
    %16 = tpu.matmul %1, %4, %cst {dimension_numbers = #tpu.dot_dimension_numbers<[1], [0], [0], [1], [0, 0, 1, 1], [], []>} : vector<128x8xbf16>, vector<8x128xbf16>, vector<128x128xf32> -> vector<128x128xf32>
    %17 = arith.truncf %16 : vector<128x128xf32> to vector<128x128xbf16>
    %18 = vector.shape_cast %17 : vector<128x128xbf16> to vector<16x8x128xbf16>
    "tpu.trace_start"() <{level = 10 : i32, message = "bij,bjc->bic"}> : () -> ()
    %cst_15 = arith.constant dense<0.000000e+00> : vector<16x8x128xf32>
    %19 = tpu.matmul %2, %18, %cst_15 {dimension_numbers = #tpu.dot_dimension_numbers<[2], [1], [1], [2], [0, 0, 0, 1, 1, 2], [0], [0]>} : vector<16x8x8xbf16>, vector<16x8x128xbf16>, vector<16x8x128xf32> -> vector<16x8x128xf32>
    "tpu.trace_stop"() : () -> ()
    %20 = vector.shape_cast %19 : vector<16x8x128xf32> to vector<128x128xf32>
    %21 = vector.broadcast %11 : vector<1x128xf32> to vector<128x128xf32>
    %22 = arith.addf %20, %21 : vector<128x128xf32>
    %cst_16 = arith.constant 0.000000e+00 : f32
    %23 = vector.broadcast %cst_16 : f32 to vector<128x128xf32>
    %24 = arith.maximumf %22, %23 : vector<128x128xf32>
    %25 = arith.truncf %24 : vector<128x128xf32> to vector<128x128xbf16>
    %cst_17 = arith.constant dense<0.000000e+00> : vector<128x128xf32>
    %26 = tpu.matmul %1, %5, %cst_17 {dimension_numbers = #tpu.dot_dimension_numbers<[1], [0], [0], [1], [0, 0, 1, 1], [], []>} : vector<128x8xbf16>, vector<8x128xbf16>, vector<128x128xf32> -> vector<128x128xf32>
    %27 = arith.truncf %26 : vector<128x128xf32> to vector<128x128xbf16>
    %28 = vector.shape_cast %27 : vector<128x128xbf16> to vector<16x8x128xbf16>
    "tpu.trace_start"() <{level = 10 : i32, message = "bij,bjc->bic"}> : () -> ()
    %cst_18 = arith.constant dense<0.000000e+00> : vector<16x8x128xf32>
    %29 = tpu.matmul %3, %28, %cst_18 {dimension_numbers = #tpu.dot_dimension_numbers<[2], [1], [1], [2], [0, 0, 0, 1, 1, 2], [0], [0]>} : vector<16x8x8xbf16>, vector<16x8x128xbf16>, vector<16x8x128xf32> -> vector<16x8x128xf32>
    "tpu.trace_stop"() : () -> ()
    %30 = vector.shape_cast %29 : vector<16x8x128xf32> to vector<128x128xf32>
    %31 = vector.broadcast %12 : vector<1x128xf32> to vector<128x128xf32>
    %32 = arith.addf %30, %31 : vector<128x128xf32>
    %cst_19 = arith.constant 0.000000e+00 : f32
    %33 = vector.broadcast %cst_19 : f32 to vector<128x128xf32>
    %34 = arith.maximumf %32, %33 : vector<128x128xf32>
    %35 = arith.truncf %34 : vector<128x128xf32> to vector<128x128xbf16>
    %cst_20 = arith.constant dense<0.000000e+00> : vector<128x128xf32>
    %36 = tpu.matmul %25, %6, %cst_20 {dimension_numbers = #tpu.dot_dimension_numbers<[1], [0], [0], [1], [0, 0, 1, 1], [], []>} : vector<128x128xbf16>, vector<128x128xbf16>, vector<128x128xf32> -> vector<128x128xf32>
    %37 = arith.truncf %36 : vector<128x128xf32> to vector<128x128xbf16>
    %38 = vector.shape_cast %37 : vector<128x128xbf16> to vector<16x8x128xbf16>
    "tpu.trace_start"() <{level = 10 : i32, message = "bij,bjc->bic"}> : () -> ()
    %cst_21 = arith.constant dense<0.000000e+00> : vector<16x8x128xf32>
    %39 = tpu.matmul %2, %38, %cst_21 {dimension_numbers = #tpu.dot_dimension_numbers<[2], [1], [1], [2], [0, 0, 0, 1, 1, 2], [0], [0]>} : vector<16x8x8xbf16>, vector<16x8x128xbf16>, vector<16x8x128xf32> -> vector<16x8x128xf32>
    "tpu.trace_stop"() : () -> ()
    %40 = vector.shape_cast %39 : vector<16x8x128xf32> to vector<128x128xf32>
    %41 = vector.broadcast %13 : vector<1x128xf32> to vector<128x128xf32>
    %42 = arith.addf %40, %41 : vector<128x128xf32>
    %cst_22 = arith.constant dense<0.000000e+00> : vector<128x128xf32>
    %43 = tpu.matmul %35, %7, %cst_22 {dimension_numbers = #tpu.dot_dimension_numbers<[1], [0], [0], [1], [0, 0, 1, 1], [], []>} : vector<128x128xbf16>, vector<128x128xbf16>, vector<128x128xf32> -> vector<128x128xf32>
    %44 = arith.truncf %43 : vector<128x128xf32> to vector<128x128xbf16>
    %45 = vector.shape_cast %44 : vector<128x128xbf16> to vector<16x8x128xbf16>
    "tpu.trace_start"() <{level = 10 : i32, message = "bij,bjc->bic"}> : () -> ()
    %cst_23 = arith.constant dense<0.000000e+00> : vector<16x8x128xf32>
    %46 = tpu.matmul %3, %45, %cst_23 {dimension_numbers = #tpu.dot_dimension_numbers<[2], [1], [1], [2], [0, 0, 0, 1, 1, 2], [0], [0]>} : vector<16x8x8xbf16>, vector<16x8x128xbf16>, vector<16x8x128xf32> -> vector<16x8x128xf32>
    "tpu.trace_stop"() : () -> ()
    %47 = vector.shape_cast %46 : vector<16x8x128xf32> to vector<128x128xf32>
    %48 = vector.broadcast %14 : vector<1x128xf32> to vector<128x128xf32>
    %49 = arith.addf %47, %48 : vector<128x128xf32>
    %cst_24 = arith.constant dense<0.000000e+00> : vector<128x128xf32>
    %50 = tpu.matmul %35, %8, %cst_24 {dimension_numbers = #tpu.dot_dimension_numbers<[1], [0], [0], [1], [0, 0, 1, 1], [], []>} : vector<128x128xbf16>, vector<128x128xbf16>, vector<128x128xf32> -> vector<128x128xf32>
    %51 = arith.truncf %50 : vector<128x128xf32> to vector<128x128xbf16>
    %52 = vector.shape_cast %51 : vector<128x128xbf16> to vector<16x8x128xbf16>
    "tpu.trace_start"() <{level = 10 : i32, message = "bij,bjc->bic"}> : () -> ()
    %cst_25 = arith.constant dense<0.000000e+00> : vector<16x8x128xf32>
    %53 = tpu.matmul %3, %52, %cst_25 {dimension_numbers = #tpu.dot_dimension_numbers<[2], [1], [1], [2], [0, 0, 0, 1, 1, 2], [0], [0]>} : vector<16x8x8xbf16>, vector<16x8x128xbf16>, vector<16x8x128xf32> -> vector<16x8x128xf32>
    "tpu.trace_stop"() : () -> ()
    %54 = vector.shape_cast %53 : vector<16x8x128xf32> to vector<128x128xf32>
    %55 = vector.broadcast %15 : vector<1x128xf32> to vector<128x128xf32>
    %56 = arith.addf %54, %55 : vector<128x128xf32>
    %57 = vector.shape_cast %42 : vector<128x128xf32> to vector<16x8x128xf32>
    %c0_26 = arith.constant 0 : index
    %c0_27 = arith.constant 0 : index
    %c0_28 = arith.constant 0 : index
    %58 = vector.load %arg5[%c0_26, %c0_27, %c0_28] : memref<16x8x128xf32, #tpu.memory_space<vmem>>, vector<16x8x128xf32>
    tpu.vector_store %arg5[%c0_26, %c0_27, %c0_28], %57 {strides = array<i32>} : memref<16x8x128xf32, #tpu.memory_space<vmem>>, vector<16x8x128xf32>,
    %59 = vector.shape_cast %49 : vector<128x128xf32> to vector<16x8x128xf32>
    %c0_29 = arith.constant 0 : index
    %c0_30 = arith.constant 0 : index
    %c0_31 = arith.constant 0 : index
    %60 = vector.load %arg6[%c0_29, %c0_30, %c0_31] : memref<16x8x128xf32, #tpu.memory_space<vmem>>, vector<16x8x128xf32>
    tpu.vector_store %arg6[%c0_29, %c0_30, %c0_31], %59 {strides = array<i32>} : memref<16x8x128xf32, #tpu.memory_space<vmem>>, vector<16x8x128xf32>,
    %61 = vector.shape_cast %56 : vector<128x128xf32> to vector<16x8x128xf32>
    %c0_32 = arith.constant 0 : index
    %c0_33 = arith.constant 0 : index
    %c0_34 = arith.constant 0 : index
    %62 = vector.load %arg7[%c0_32, %c0_33, %c0_34] : memref<16x8x128xf32, #tpu.memory_space<vmem>>, vector<16x8x128xf32>
    tpu.vector_store %arg7[%c0_32, %c0_33, %c0_34], %61 {strides = array<i32>} : memref<16x8x128xf32, #tpu.memory_space<vmem>>, vector<16x8x128xf32>,
    return
  }
  func.func @transform_0(%arg0: i32) -> (i32, i32, i32) {
    %c0_i32 = arith.constant 0 : i32
    %c0_i32_0 = arith.constant 0 : i32
    %c0_i32_1 = arith.constant 0 : i32
    return %arg0, %c0_i32, %c0_i32_0 : i32, i32, i32
  }
  func.func @transform_1(%arg0: i32) -> (i32, i32, i32) {
    %c0_i32 = arith.constant 0 : i32
    %c0_i32_0 = arith.constant 0 : i32
    %c0_i32_1 = arith.constant 0 : i32
    return %arg0, %c0_i32, %c0_i32_0 : i32, i32, i32
  }
  func.func @transform_2(%arg0: i32) -> (i32, i32, i32) {
    %c0_i32 = arith.constant 0 : i32
    %c0_i32_0 = arith.constant 0 : i32
    %c0_i32_1 = arith.constant 0 : i32
    return %arg0, %c0_i32, %c0_i32_0 : i32, i32, i32
  }
  func.func @transform_3(%arg0: i32) -> (i32, i32) {
    %c0_i32 = arith.constant 0 : i32
    %c0_i32_0 = arith.constant 0 : i32
    %c0_i32_1 = arith.constant 0 : i32
    return %c0_i32, %c0_i32_0 : i32, i32
  }
  func.func @transform_4(%arg0: i32) -> (i32, i32, i32) {
    %c0_i32 = arith.constant 0 : i32
    %c0_i32_0 = arith.constant 0 : i32
    %c0_i32_1 = arith.constant 0 : i32
    return %arg0, %c0_i32, %c0_i32_0 : i32, i32, i32
  }
  func.func @transform_5(%arg0: i32) -> (i32, i32, i32) {
    %c0_i32 = arith.constant 0 : i32
    %c0_i32_0 = arith.constant 0 : i32
    %c0_i32_1 = arith.constant 0 : i32
    return %arg0, %c0_i32, %c0_i32_0 : i32, i32, i32
  }
  func.func @transform_6(%arg0: i32) -> (i32, i32, i32) {
    %c0_i32 = arith.constant 0 : i32
    %c0_i32_0 = arith.constant 0 : i32
    %c0_i32_1 = arith.constant 0 : i32
    return %arg0, %c0_i32, %c0_i32_0 : i32, i32, i32
  }
}

</mosaic_0001>

<llo_original>
// kernel: tpu_custom_call.1
$region0: #{tpu_custom_call.1}
  #allocation0 [shape = 'u32[]', space=smem, size = 0x4, offset = 0x4, fixed_abs, tag = 'smem constant byte address 0x4 - core index']
  #allocation1 [shape = 'u32[144,128]{1,0:T(1,128)}', space=vmem, size = 0x12000, scoped, tag = 'internal scratch']
  %s0 = inlined_call_operand.vmem [shape: bf16[32,8,8], index: 0, kind: input, shape index: {}]
  %s1 = inlined_call_operand.vmem [shape: bf16[32,8,8], index: 1, kind: input, shape index: {}]
  %s2 = inlined_call_operand.vmem [shape: bf16[32,8,8], index: 2, kind: input, shape index: {}]
  %s3 = inlined_call_operand.vmem [shape: bf16[408,128], index: 3, kind: input, shape index: {}]
  %s4 = inlined_call_operand.hbm [shape: f32[32,8,128], index: 4, kind: output, shape index: {0}]
  %s5 = inlined_call_operand.hbm [shape: f32[32,8,128], index: 5, kind: output, shape index: {1}]
  %s6 = inlined_call_operand.hbm [shape: f32[32,8,128], index: 6, kind: output, shape index: {2}]
  %7 = xla_tuple %s4, %s5, %s6
  %s8 = sld [smem:[#allocation0]]
  $region65: #{tpu_custom_call.1} parent=0
    _
  %s10 = ssub.s32 1, %s8
  %s11 = scalar_select 0, %s10, %s8
  $region1: #{tpu_custom_call.1} parent=0
    #allocation2 [shape = 'u8[131072]{0}', space=vmem, size = 0x20000, scoped, tag = 'output window, operand 0']
    #allocation3 [shape = 's32[2]{0}', space=sflag, size = 0x8, scoped, tag = 'scoped memory for tpu_custom_call.1']
    #allocation4 [shape = 'u8[131072]{0}', space=vmem, size = 0x20000, scoped, tag = 'output window, operand 1']
    #allocation5 [shape = 's32[2]{0}', space=sflag, size = 0x8, scoped, tag = 'scoped memory for tpu_custom_call.1']
    #allocation6 [shape = 'u8[131072]{0}', space=vmem, size = 0x20000, scoped, tag = 'output window, operand 2']
    %12 = vsyncpa [#allocation3], 0
    %s13 = scalar_lea.sflag [#allocation3], 1
    %14 = vsyncpa %s13, 0
    %15 = vsyncpa [#allocation5], 0
    %s16 = scalar_lea.sflag [#allocation5], 1
    %17 = vsyncpa %s16, 0
    loop: start=0, step=1, limit=4
    $region2: #{tpu_custom_call.1} parent=1 // loop_pre_header
      _
    $region3: #{tpu_custom_call.1} parent=1 // loop_header
      %s19 = sphi 0, %s23
      %p20 = scmp.ge.s32.totalorder %s19, 4
      %s29 = sphi 0, %s31
      %s32 = sphi 0, %s29
      %s33 = sphi 0, %s32
      %s49 = sphi 0, %s33
      %s55 = sphi 0, %s57
      %s58 = sphi 0, %s55
      %s59 = sphi 0, %s58
      %s75 = sphi 0, %s59
      %s81 = sphi 0, %s83
      %s84 = sphi 0, %s81
      %s85 = sphi 0, %s84
      %s101 = sphi 0, %s85
      %s105 = sphi 0, %s105
      %s107 = sphi 0, %s105
      %s108 = sphi 0, %s107
      %s122 = sphi 0, %s108
      %s128 = sphi 0, %s130
      %s131 = sphi 0, %s128
      %s132 = sphi 0, %s131
      %s148 = sphi 0, %s132
      %s154 = sphi 0, %s156
      %s157 = sphi 0, %s154
      %s158 = sphi 0, %s157
      %s174 = sphi 0, %s158
      %s180 = sphi 0, %s182
      %s183 = sphi 0, %s180
      %s184 = sphi 0, %s183
      %s200 = sphi 0, %s184
    $region4: #{tpu_custom_call.1} parent=1 // loop_header_branch
      %22 = sbr.rel (%p20) target = $region8
    $region5: #{tpu_custom_call.1} parent=1 // loop_body
      %s24 = ssub.s32 %s19, 1
      %s25 = ssub.s32 %s19, 2
      %s26 = sadd.s32 %s19, 1
      %s27 = ssub.s32 %s19, %s26
      %p28 = scmp.eq.s32.totalorder %s27, 0
      %s30 = sadd.s32 %s29, 1
      %s31 = scalar_select %p28, %s29, %s30
      %p34 = pneg %p28
      %p35 = scmp.eq.s32.totalorder %s19, 1
      %p36 = por %p34, %p35
      %p37 = scmp.ne.s32.totalorder %s29, %s32
      %p38 = scmp.eq.s32.totalorder %s19, 0
      %p39 = por %p37, %p38
      %p40 = scmp.ne.s32.totalorder %s29, %s32
      %p41 = scmp.eq.s32.totalorder %s24, 1
      %p42 = por %p40, %p41
      %p43 = scmp.ne.s32.totalorder %s32, %s33
      %p44 = scmp.eq.s32.totalorder %s24, 0
      %p45 = por %p43, %p44
      %p46 = scmp.ne.s32.totalorder %s32, %s33
      %p47 = scmp.eq.s32.totalorder %s25, 1
      %p48 = por %p46, %p47
      %p50 = scmp.ne.s32.totalorder %s33, %s49
      %p51 = scmp.eq.s32.totalorder %s25, 0
      %p52 = por %p50, %p51
      %s53 = ssub.s32 %s19, %s26
      %p54 = scmp.eq.s32.totalorder %s53, 0
      %s56 = sadd.s32 %s55, 1
      %s57 = scalar_select %p54, %s55, %s56
      %p60 = pneg %p54
      %p61 = scmp.eq.s32.totalorder %s19, 1
      %p62 = por %p60, %p61
      %p63 = scmp.ne.s32.totalorder %s55, %s58
      %p64 = scmp.eq.s32.totalorder %s19, 0
      %p65 = por %p63, %p64
      %p66 = scmp.ne.s32.totalorder %s55, %s58
      %p67 = scmp.eq.s32.totalorder %s24, 1
      %p68 = por %p66, %p67
      %p69 = scmp.ne.s32.totalorder %s58, %s59
      %p70 = scmp.eq.s32.totalorder %s24, 0
      %p71 = por %p69, %p70
      %p72 = scmp.ne.s32.totalorder %s58, %s59
      %p73 = scmp.eq.s32.totalorder %s25, 1
      %p74 = por %p72, %p73
      %p76 = scmp.ne.s32.totalorder %s59, %s75
      %p77 = scmp.eq.s32.totalorder %s25, 0
      %p78 = por %p76, %p77
      %s79 = ssub.s32 %s19, %s26
      %p80 = scmp.eq.s32.totalorder %s79, 0
      %s82 = sadd.s32 %s81, 1
      %s83 = scalar_select %p80, %s81, %s82
      %p86 = pneg %p80
      %p87 = scmp.eq.s32.totalorder %s19, 1
      %p88 = por %p86, %p87
      %p89 = scmp.ne.s32.totalorder %s81, %s84
      %p90 = scmp.eq.s32.totalorder %s19, 0
      %p91 = por %p89, %p90
      %p92 = scmp.ne.s32.totalorder %s81, %s84
      %p93 = scmp.eq.s32.totalorder %s24, 1
      %p94 = por %p92, %p93
      %p95 = scmp.ne.s32.totalorder %s84, %s85
      %p96 = scmp.eq.s32.totalorder %s24, 0
      %p97 = por %p95, %p96
      %p98 = scmp.ne.s32.totalorder %s84, %s85
      %p99 = scmp.eq.s32.totalorder %s25, 1
      %p100 = por %p98, %p99
      %p102 = scmp.ne.s32.totalorder %s85, %s101
      %p103 = scmp.eq.s32.totalorder %s25, 0
      %p104 = por %p102, %p103
      %s106 = sadd.s32 %s105, 1
      %p109 = scmp.eq.s32.totalorder %s19, 1
      %p110 = scmp.ne.s32.totalorder %s105, %s107
      %p111 = scmp.eq.s32.totalorder %s19, 0
      %p112 = por %p110, %p111
      %p113 = scmp.ne.s32.totalorder %s105, %s107
      %p114 = scmp.eq.s32.totalorder %s24, 1
      %p115 = por %p113, %p114
      %p116 = scmp.ne.s32.totalorder %s107, %s108
      %p117 = scmp.eq.s32.totalorder %s24, 0
      %p118 = por %p116, %p117
      %p119 = scmp.ne.s32.totalorder %s107, %s108
      %p120 = scmp.eq.s32.totalorder %s25, 1
      %p121 = por %p119, %p120
      %p123 = scmp.ne.s32.totalorder %s108, %s122
      %p124 = scmp.eq.s32.totalorder %s25, 0
      %p125 = por %p123, %p124
      %s126 = ssub.s32 %s19, %s26
      %p127 = scmp.eq.s32.totalorder %s126, 0
      %s129 = sadd.s32 %s128, 1
      %s130 = scalar_select %p127, %s128, %s129
      %p133 = pneg %p127
      %p134 = scmp.eq.s32.totalorder %s19, 1
      %p135 = por %p133, %p134
      %p136 = scmp.ne.s32.totalorder %s128, %s131
      %p137 = scmp.eq.s32.totalorder %s19, 0
      %p138 = por %p136, %p137
      %p139 = scmp.ne.s32.totalorder %s128, %s131
      %p140 = scmp.eq.s32.totalorder %s24, 1
      %p141 = por %p139, %p140
      %p142 = scmp.ne.s32.totalorder %s131, %s132
      %p143 = scmp.eq.s32.totalorder %s24, 0
      %p144 = por %p142, %p143
      %p145 = scmp.ne.s32.totalorder %s131, %s132
      %p146 = scmp.eq.s32.totalorder %s25, 1
      %p147 = por %p145, %p146
      %p149 = scmp.ne.s32.totalorder %s132, %s148
      %p150 = scmp.eq.s32.totalorder %s25, 0
      %p151 = por %p149, %p150
      %s152 = ssub.s32 %s19, %s26
      %p153 = scmp.eq.s32.totalorder %s152, 0
      %s155 = sadd.s32 %s154, 1
      %s156 = scalar_select %p153, %s154, %s155
      %p159 = pneg %p153
      %p160 = scmp.eq.s32.totalorder %s19, 1
      %p161 = por %p159, %p160
      %p162 = scmp.ne.s32.totalorder %s154, %s157
      %p163 = scmp.eq.s32.totalorder %s19, 0
      %p164 = por %p162, %p163
      %p165 = scmp.ne.s32.totalorder %s154, %s157
      %p166 = scmp.eq.s32.totalorder %s24, 1
      %p167 = por %p165, %p166
      %p168 = scmp.ne.s32.totalorder %s157, %s158
      %p169 = scmp.eq.s32.totalorder %s24, 0
      %p170 = por %p168, %p169
      %p171 = scmp.ne.s32.totalorder %s157, %s158
      %p172 = scmp.eq.s32.totalorder %s25, 1
      %p173 = por %p171, %p172
      %p175 = scmp.ne.s32.totalorder %s158, %s174
      %p176 = scmp.eq.s32.totalorder %s25, 0
      %p177 = por %p175, %p176
      %s178 = ssub.s32 %s19, %s26
      %p179 = scmp.eq.s32.totalorder %s178, 0
      %s181 = sadd.s32 %s180, 1
      %s182 = scalar_select %p179, %s180, %s181
      %p185 = pneg %p179
      %p186 = scmp.eq.s32.totalorder %s19, 1
      %p187 = por %p185, %p186
      %p188 = scmp.ne.s32.totalorder %s180, %s183
      %p189 = scmp.eq.s32.totalorder %s19, 0
      %p190 = por %p188, %p189
      %p191 = scmp.ne.s32.totalorder %s180, %s183
      %p192 = scmp.eq.s32.totalorder %s24, 1
      %p193 = por %p191, %p192
      %p194 = scmp.ne.s32.totalorder %s183, %s184
      %p195 = scmp.eq.s32.totalorder %s24, 0
      %p196 = por %p194, %p195
      %p197 = scmp.ne.s32.totalorder %s183, %s184
      %p198 = scmp.eq.s32.totalorder %s25, 1
      %p199 = por %p197, %p198
      %p201 = scmp.ne.s32.totalorder %s184, %s200
      %p202 = scmp.eq.s32.totalorder %s25, 0
      %p203 = por %p201, %p202
      %p204 = scmp.le.s32.totalorder 1, %s19
      %p205 = scmp.lt.s32.totalorder %s19, 3
      %p206 = pnand %p204, %p205
      %p207 = pneg %p206
      // Predicated region
      $region9: #{tpu_custom_call.1} parent=5 // pred_check
        _
      $region10: #{tpu_custom_call.1} parent=5 // pred_check_branch
        %209 = sbr.rel (%p206) target = $region12
      $region11: #{tpu_custom_call.1} parent=5 // pred_region
        %s210 = ssub.s32 %s19, 1
        // Predicated region
        $region13: #{tpu_custom_call.1} parent=11 // pred_check
          %p211 = pneg %p118
        $region14: #{tpu_custom_call.1} parent=11 // pred_check_branch
          %213 = sbr.rel (%p211) target = $region16
        $region15: #{tpu_custom_call.1} parent=11 // pred_region
          _
        $region16: #{tpu_custom_call.1} parent=11 // pred_fallthru
          _
      $region12: #{tpu_custom_call.1} parent=5 // pred_fallthru
        _
      %p214 = scmp.lt.s32.totalorder %s19, 2
      // Predicated region
      $region17: #{tpu_custom_call.1} parent=5 // pred_check
        %p215 = pneg %p214
      $region18: #{tpu_custom_call.1} parent=5 // pred_check_branch
        %217 = sbr.rel (%p215) target = $region20
      $region19: #{tpu_custom_call.1} parent=5 // pred_region
        // Predicated region
        $region21: #{tpu_custom_call.1} parent=19 // pred_check
          %p218 = pneg %p39
        $region22: #{tpu_custom_call.1} parent=19 // pred_check_branch
          %220 = sbr.rel (%p218) target = $region24
        $region23: #{tpu_custom_call.1} parent=19 // pred_region
          %s221 = smul.u32 16, %s19
          %p222 = scmp.lt.s32.totalorder %s221, 31
          %s223 = scalar_select %p222, %s221, 31
          %s224 = smul.addr %s223, 4
          %s225 = scalar_lea.vmem %s0, %s224
          %s226 = smul.u32 16, %s19
        $region24: #{tpu_custom_call.1} parent=19 // pred_fallthru
          _
        // Predicated region
        $region25: #{tpu_custom_call.1} parent=19 // pred_check
          %p227 = pneg %p65
        $region26: #{tpu_custom_call.1} parent=19 // pred_check_branch
          %229 = sbr.rel (%p227) target = $region28
        $region27: #{tpu_custom_call.1} parent=19 // pred_region
          %s230 = smul.u32 16, %s19
          %p231 = scmp.lt.s32.totalorder %s230, 31
          %s232 = scalar_select %p231, %s230, 31
          %s233 = smul.addr %s232, 4
          %s234 = scalar_lea.vmem %s1, %s233
          %s235 = smul.u32 16, %s19
        $region28: #{tpu_custom_call.1} parent=19 // pred_fallthru
          _
        // Predicated region
        $region29: #{tpu_custom_call.1} parent=19 // pred_check
          %p236 = pneg %p91
        $region30: #{tpu_custom_call.1} parent=19 // pred_check_branch
          %238 = sbr.rel (%p236) target = $region32
        $region31: #{tpu_custom_call.1} parent=19 // pred_region
          %s239 = smul.u32 16, %s19
          %p240 = scmp.lt.s32.totalorder %s239, 31
          %s241 = scalar_select %p240, %s239, 31
          %s242 = smul.addr %s241, 4
          %s243 = scalar_lea.vmem %s2, %s242
          %s244 = smul.u32 16, %s19
        $region32: #{tpu_custom_call.1} parent=19 // pred_fallthru
          _
      $region20: #{tpu_custom_call.1} parent=5 // pred_fallthru
        _
      %p245 = scmp.le.s32.totalorder 1, %s19
      %p246 = scmp.lt.s32.totalorder %s19, 3
      %p247 = pnand %p245, %p246
      %p248 = pneg %p247
      // Predicated region
      $region33: #{tpu_custom_call.1} parent=5 // pred_check
        _
      $region34: #{tpu_custom_call.1} parent=5 // pred_check_branch
        %250 = sbr.rel (%p247) target = $region36
      $region35: #{tpu_custom_call.1} parent=5 // pred_region
        %s251 = ssub.s32 %s19, 1
        %s252 = smul.u32 16, %s24
        %p253 = scmp.lt.s32.totalorder %s252, 31
        %s254 = scalar_select %p253, %s252, 31
        %s255 = smul.addr %s254, 4
        %s256 = scalar_lea.vmem %s0, %s255
        %p257 = pneg %p45
        %p258 = pneg %p42
        %s259 = smul.u32 16, %s24
        %p260 = scmp.lt.s32.totalorder %s259, 31
        %s261 = scalar_select %p260, %s259, 31
        %s262 = smul.addr %s261, 4
        %s263 = scalar_lea.vmem %s1, %s262
        %p264 = pneg %p71
        %p265 = pneg %p68
        %s266 = smul.u32 16, %s24
        %p267 = scmp.lt.s32.totalorder %s266, 31
        %s268 = scalar_select %p267, %s266, 31
        %s269 = smul.addr %s268, 4
        %s270 = scalar_lea.vmem %s2, %s269
        %p271 = pneg %p97
        %p272 = pneg %p94
        %p273 = pneg %p118
        %p274 = pneg %p115
        %p275 = pneg %p144
        %p276 = pneg %p141
        %s277 = sand.u32 %s131, 1
        %s278 = scalar_lea.sflag [#allocation3], %s277
        %s279 = sand.u32 %s131, 1
        %s280 = smul.addr %s279, 128
        %s281 = scalar_lea.vmem [#allocation2], %s280
        %p282 = pneg %p170
        %p283 = pneg %p167
        %s284 = sand.u32 %s24, 1
        %s285 = scalar_lea.sflag [#allocation5], %s284
        %s286 = sand.u32 %s157, 1
        %s287 = smul.addr %s286, 128
        %s288 = scalar_lea.vmem [#allocation4], %s287
        %p289 = pneg %p196
        %p290 = pneg %p193
        %s291 = sand.u32 %s24, 1
        %s292 = scalar_lea.sflag [#allocation5], %s291
        %s293 = sand.u32 %s183, 1
        %s294 = smul.addr %s293, 128
        %s295 = scalar_lea.vmem [#allocation6], %s294
        %s296 = smul.u32 16, %s24
        %p297 = scmp.lt.s32.totalorder %s296, 31
        %s298 = scalar_select %p297, %s296, 31
        %s299 = smul.addr %s298, 4
        %s300 = scalar_lea.vmem %s0, %s299
        %s301 = smul.u32 16, %s24
        %s302 = smul.u32 16, %s24
        %p303 = scmp.lt.s32.totalorder %s302, 31
        %s304 = scalar_select %p303, %s302, 31
        %s305 = smul.addr %s304, 4
        %s306 = scalar_lea.vmem %s1, %s305
        %s307 = smul.u32 16, %s24
        %s308 = smul.u32 16, %s24
        %p309 = scmp.lt.s32.totalorder %s308, 31
        %s310 = scalar_select %p309, %s308, 31
        %s311 = smul.addr %s310, 4
        %s312 = scalar_lea.vmem %s2, %s311
        %s313 = smul.u32 16, %s24
        %s314 = smul.u32 16, %s24
        %s315 = smul.u32 16, %s24
        %s316 = smul.u32 16, %s24
        %v318 = vld [vmem:[%s312] sm:$0xf]
        %v319 = vld [vmem:[%s312 + $0x4] sm:$0xf]
        %v320 = vld [vmem:[%s312 + $0x8] sm:$0xf]
        %v321 = vld [vmem:[%s312 + $0xc] sm:$0xf]
        %v322 = vld [vmem:[%s312 + $0x10] sm:$0xf]
        %v323 = vld [vmem:[%s312 + $0x14] sm:$0xf]
        %v324 = vld [vmem:[%s312 + $0x18] sm:$0xf]
        %v325 = vld [vmem:[%s312 + $0x1c] sm:$0xf]
        %v326 = vld [vmem:[%s312 + $0x20] sm:$0xf]
        %v327 = vld [vmem:[%s312 + $0x24] sm:$0xf]
        %v328 = vld [vmem:[%s312 + $0x28] sm:$0xf]
        %v329 = vld [vmem:[%s312 + $0x2c] sm:$0xf]
        %v330 = vld [vmem:[%s312 + $0x30] sm:$0xf]
        %v331 = vld [vmem:[%s312 + $0x34] sm:$0xf]
        %v332 = vld [vmem:[%s312 + $0x38] sm:$0xf]
        %v333 = vld [vmem:[%s312 + $0x3c] sm:$0xf]
        %v334 = vld [vmem:[%s300] sm:$0xf]
        %v335 = vld [vmem:[%s300 + $0x4] sm:$0xf]
        %v336 = vld [vmem:[%s300 + $0x8] sm:$0xf]
        %v337 = vld [vmem:[%s300 + $0xc] sm:$0xf]
        %v338 = vld [vmem:[%s300 + $0x10] sm:$0xf]
        %v339 = vld [vmem:[%s300 + $0x14] sm:$0xf]
        %v340 = vld [vmem:[%s300 + $0x18] sm:$0xf]
        %v341 = vld [vmem:[%s300 + $0x1c] sm:$0xf]
        %v342 = vld [vmem:[%s300 + $0x20] sm:$0xf]
        %v343 = vld [vmem:[%s300 + $0x24] sm:$0xf]
        %v344 = vld [vmem:[%s300 + $0x28] sm:$0xf]
        %v345 = vld [vmem:[%s300 + $0x2c] sm:$0xf]
        %v346 = vld [vmem:[%s300 + $0x30] sm:$0xf]
        %v347 = vld [vmem:[%s300 + $0x34] sm:$0xf]
        %v348 = vld [vmem:[%s300 + $0x38] sm:$0xf]
        %v349 = vld [vmem:[%s300 + $0x3c] sm:$0xf]
        %v350 = vld [vmem:[%s306] sm:$0xf]
        %v351 = vld [vmem:[%s306 + $0x4] sm:$0xf]
        %v352 = vld [vmem:[%s306 + $0x8] sm:$0xf]
        %v353 = vld [vmem:[%s306 + $0xc] sm:$0xf]
        %v354 = vld [vmem:[%s306 + $0x10] sm:$0xf]
        %v355 = vld [vmem:[%s306 + $0x14] sm:$0xf]
        %v356 = vld [vmem:[%s306 + $0x18] sm:$0xf]
        %v357 = vld [vmem:[%s306 + $0x1c] sm:$0xf]
        %v358 = vld [vmem:[%s306 + $0x20] sm:$0xf]
        %v359 = vld [vmem:[%s306 + $0x24] sm:$0xf]
        %v360 = vld [vmem:[%s306 + $0x28] sm:$0xf]
        %v361 = vld [vmem:[%s306 + $0x2c] sm:$0xf]
        %v362 = vld [vmem:[%s306 + $0x30] sm:$0xf]
        %v363 = vld [vmem:[%s306 + $0x34] sm:$0xf]
        %v364 = vld [vmem:[%s306 + $0x38] sm:$0xf]
        %v365 = vld [vmem:[%s306 + $0x3c] sm:$0xf]
        %v366 = vld [vmem:[%s3] sm:$0xf]
        %v367 = vld [vmem:[%s3 + $0x4] sm:$0xf]
        %v368 = vld [vmem:[%s3 + $0x8] sm:$0xf]
        %v369 = vld [vmem:[%s3 + $0xc] sm:$0xf]
        %v370 = vld [vmem:[%s3 + $0x10] sm:$0xf]
        %v371 = vld [vmem:[%s3 + $0x14] sm:$0xf]
        %v372 = vld [vmem:[%s3 + $0x18] sm:$0xf]
        %v373 = vld [vmem:[%s3 + $0x1c] sm:$0xf]
        %v374 = vld [vmem:[%s3 + $0x20] sm:$0xf]
        %v375 = vld [vmem:[%s3 + $0x24] sm:$0xf]
        %v376 = vld [vmem:[%s3 + $0x28] sm:$0xf]
        %v377 = vld [vmem:[%s3 + $0x2c] sm:$0xf]
        %v378 = vld [vmem:[%s3 + $0x30] sm:$0xf]
        %v379 = vld [vmem:[%s3 + $0x34] sm:$0xf]
        %v380 = vld [vmem:[%s3 + $0x38] sm:$0xf]
        %v381 = vld [vmem:[%s3 + $0x3c] sm:$0xf]
        %v382 = vld [vmem:[%s3 + $0x40] sm:$0xf]
        %v383 = vld [vmem:[%s3 + $0x44] sm:$0xf]
        %v384 = vld [vmem:[%s3 + $0x48] sm:$0xf]
        %v385 = vld [vmem:[%s3 + $0x4c] sm:$0xf]
        %v386 = vld [vmem:[%s3 + $0x50] sm:$0xf]
        %v387 = vld [vmem:[%s3 + $0x54] sm:$0xf]
        %v388 = vld [vmem:[%s3 + $0x58] sm:$0xf]
        %v389 = vld [vmem:[%s3 + $0x5c] sm:$0xf]
        %v390 = vld [vmem:[%s3 + $0x60] sm:$0xf]
        %v391 = vld [vmem:[%s3 + $0x64] sm:$0xf]
        %v392 = vld [vmem:[%s3 + $0x68] sm:$0xf]
        %v393 = vld [vmem:[%s3 + $0x6c] sm:$0xf]
        %v394 = vld [vmem:[%s3 + $0x70] sm:$0xf]
        %v395 = vld [vmem:[%s3 + $0x74] sm:$0xf]
        %v396 = vld [vmem:[%s3 + $0x78] sm:$0xf]
        %v397 = vld [vmem:[%s3 + $0x7c] sm:$0xf]
        %v398 = vld [vmem:[%s3 + $0x80] sm:$0xf]
        %v399 = vld [vmem:[%s3 + $0x84] sm:$0xf]
        %v400 = vld [vmem:[%s3 + $0x88] sm:$0xf]
        %v401 = vld [vmem:[%s3 + $0x8c] sm:$0xf]
        %v402 = vld [vmem:[%s3 + $0x90] sm:$0xf]
        %v403 = vld [vmem:[%s3 + $0x94] sm:$0xf]
        %v404 = vld [vmem:[%s3 + $0x98] sm:$0xf]
        %v405 = vld [vmem:[%s3 + $0x9c] sm:$0xf]
        %v406 = vld [vmem:[%s3 + $0xa0] sm:$0xf]
        %v407 = vld [vmem:[%s3 + $0xa4] sm:$0xf]
        %v408 = vld [vmem:[%s3 + $0xa8] sm:$0xf]
        %v409 = vld [vmem:[%s3 + $0xac] sm:$0xf]
        %v410 = vld [vmem:[%s3 + $0xb0] sm:$0xf]
        %v411 = vld [vmem:[%s3 + $0xb4] sm:$0xf]
        %v412 = vld [vmem:[%s3 + $0xb8] sm:$0xf]
        %v413 = vld [vmem:[%s3 + $0xbc] sm:$0xf]
        %v414 = vld [vmem:[%s3 + $0xc0] sm:$0xf]
        %v415 = vld [vmem:[%s3 + $0xc4] sm:$0xf]
        %v416 = vld [vmem:[%s3 + $0xc8] sm:$0xf]
        %v417 = vunpack.c.l.bf16 %v416
        %v434 = vunpack.c.l.b16 %v318
        %v435 = vunpack.c.l.b16 %v319
        %v436 = vunpack.c.l.b16 %v320
        %v437 = vunpack.c.l.b16 %v321
        %v438 = vunpack.c.l.b16 %v322
        %v439 = vunpack.c.l.b16 %v323
        %v440 = vunpack.c.l.b16 %v324
        %v441 = vunpack.c.l.b16 %v325
        %v442 = vunpack.c.l.b16 %v326
        %v443 = vunpack.c.l.b16 %v327
        %v444 = vunpack.c.l.b16 %v328
        %v445 = vunpack.c.l.b16 %v329
        %v446 = vunpack.c.l.b16 %v330
        %v447 = vunpack.c.l.b16 %v331
        %v448 = vunpack.c.l.b16 %v332
        %v449 = vunpack.c.l.b16 %v333
        %v450 = vpack.c.b16 %v435, %v434
        %v451 = vpack.c.b16 %v437, %v436
        %v452 = vpack.c.b16 %v439, %v438
        %v453 = vpack.c.b16 %v441, %v440
        %v454 = vpack.c.b16 %v443, %v442
        %v455 = vpack.c.b16 %v445, %v444
        %v456 = vpack.c.b16 %v447, %v446
        %v457 = vpack.c.b16 %v449, %v448
        %vm458 = vcmask 64512
        %v460 = vsel %vm458, %v450, 0
        %v463 = vsel %vm458, %v451, 0
        %v466 = vsel %vm458, %v452, 0
        %v469 = vsel %vm458, %v453, 0
        %v472 = vsel %vm458, %v454, 0
        %v475 = vsel %vm458, %v455, 0
        %v478 = vsel %vm458, %v456, 0
        %v481 = vsel %vm458, %v457, 0
        %vm483 = vcmask 1043456
        %v485 = vsel %vm483, %v366, 0
        %487 = vmatprep.subr.bf16.mxu0 0
        %488 = vmatpush1.bf16.msra.mxu0 0
        %489 = vmatprep.subr.bf16.mxu0 0
        %490 = vmatpush1.bf16.msra.mxu0 0
        %491 = vmatprep.subr.bf16.mxu0 0
        %492 = vmatpush1.bf16.msra.mxu0 0
        %493 = vmatprep.subr.bf16.mxu0 0
        %494 = vmatpush1.bf16.msra.mxu0 0
        %495 = vmatprep.subr.bf16.mxu0 0
        %496 = vmatpush1.bf16.msra.mxu0 0
        %497 = vmatprep.subr.bf16.mxu0 0
        %498 = vmatpush1.bf16.msra.mxu0 0
        %499 = vmatprep.subr.bf16.mxu0 0
        %500 = vmatpush1.bf16.msra.mxu0 0
        %501 = vmatprep.subr.bf16.mxu0 0
        %502 = vmatpush1.bf16.msra.mxu0 %v485
        %503 = vmatprep.subr.bf16.mxu0 0
        %504 = vmatpush2.bf16.msra.mxu0 0
        %505 = vmatprep.subr.bf16.mxu0 0
        %506 = vmatpush2.bf16.msra.mxu0 0
        %507 = vmatprep.subr.bf16.mxu0 0
        %508 = vmatpush2.bf16.msra.mxu0 0
        %509 = vmatprep.subr.bf16.mxu0 0
        %510 = vmatpush2.bf16.msra.mxu0 0
        %511 = vmatprep.subr.bf16.mxu0 0
        %512 = vmatpush2.bf16.msra.mxu0 0
        %513 = vmatprep.subr.bf16.mxu0 0
        %514 = vmatpush2.bf16.msra.mxu0 0
        %515 = vmatprep.subr.bf16.mxu0 0
        %516 = vmatpush2.bf16.msra.mxu0 0
        %517 = vmatprep.subr.bf16.mxu0 0
        %518 = vmatpush2.bf16.msra.mxu0 0
        %519 = vmatprep.mubr.bf16.mxu0 0
        %520 = vmatmul.mubr.bf16.gmra.mxu0 %v460
        %v521 = vpop.f32.mrf.mxu0
        %v522 = vadd.f32 0.0, %v521
        %v523 = vpop.f32.mrf.mxu0
        %v524 = vpop.f32.mrf.mxu0
        %v525 = vadd.f32 0.0, %v524
        %v526 = vpop.f32.mrf.mxu0
        %527 = vmatprep.mubr.bf16.mxu0 0
        %528 = vmatmul.mubr.bf16.gmra.mxu0 %v463
        %v529 = vpop.f32.mrf.mxu0
        %v530 = vadd.f32 0.0, %v529
        %v531 = vpop.f32.mrf.mxu0
        %v532 = vpop.f32.mrf.mxu0
        %v533 = vadd.f32 0.0, %v532
        %v534 = vpop.f32.mrf.mxu0
        %535 = vmatprep.mubr.bf16.mxu0 0
        %536 = vmatmul.mubr.bf16.gmra.mxu0 %v466
        %v537 = vpop.f32.mrf.mxu0
        %v538 = vadd.f32 0.0, %v537
        %v539 = vpop.f32.mrf.mxu0
        %v540 = vpop.f32.mrf.mxu0
        %v541 = vadd.f32 0.0, %v540
        %v542 = vpop.f32.mrf.mxu0
        %543 = vmatprep.mubr.bf16.mxu0 0
        %544 = vmatmul.mubr.bf16.gmra.mxu0 %v469
        %v545 = vpop.f32.mrf.mxu0
        %v546 = vadd.f32 0.0, %v545
        %v547 = vpop.f32.mrf.mxu0
        %v548 = vpop.f32.mrf.mxu0
        %v549 = vadd.f32 0.0, %v548
        %v550 = vpop.f32.mrf.mxu0
        %551 = vmatprep.mubr.bf16.mxu0 0
        %552 = vmatmul.mubr.bf16.gmra.mxu0 %v472
        %v553 = vpop.f32.mrf.mxu0
        %v554 = vadd.f32 0.0, %v553
        %v555 = vpop.f32.mrf.mxu0
        %v556 = vpop.f32.mrf.mxu0
        %v557 = vadd.f32 0.0, %v556
        %v558 = vpop.f32.mrf.mxu0
        %559 = vmatprep.mubr.bf16.mxu0 0
        %560 = vmatmul.mubr.bf16.gmra.mxu0 %v475
        %v561 = vpop.f32.mrf.mxu0
        %v562 = vadd.f32 0.0, %v561
        %v563 = vpop.f32.mrf.mxu0
        %v564 = vpop.f32.mrf.mxu0
        %v565 = vadd.f32 0.0, %v564
        %v566 = vpop.f32.mrf.mxu0
        %567 = vmatprep.mubr.bf16.mxu0 0
        %568 = vmatmul.mubr.bf16.gmra.mxu0 %v478
        %v569 = vpop.f32.mrf.mxu0
        %v570 = vadd.f32 0.0, %v569
        %v571 = vpop.f32.mrf.mxu0
        %v572 = vpop.f32.mrf.mxu0
        %v573 = vadd.f32 0.0, %v572
        %v574 = vpop.f32.mrf.mxu0
        %575 = vmatprep.mubr.bf16.mxu0 0
        %576 = vmatmul.mubr.bf16.gmra.mxu0 %v481
        %v577 = vpop.f32.mrf.mxu0
        %v578 = vadd.f32 0.0, %v577
        %v579 = vpop.f32.mrf.mxu0
        %v580 = vpop.f32.mrf.mxu0
        %v581 = vadd.f32 0.0, %v580
        %v582 = vpop.f32.mrf.mxu0
        %583 = vdwg.mxu0
        %v584 = vpack.c.bf16 %v525, %v522
        %v585 = vpack.c.bf16 %v533, %v530
        %v586 = vpack.c.bf16 %v541, %v538
        %v587 = vpack.c.bf16 %v549, %v546
        %v588 = vpack.c.bf16 %v557, %v554
        %v589 = vpack.c.bf16 %v565, %v562
        %v590 = vpack.c.bf16 %v573, %v570
        %v591 = vpack.c.bf16 %v581, %v578
        %v600 = vunpack.c.l.b16 %v584
        %v601 = vunpack.c.h.b16 %v584
        %v602 = vunpack.c.l.b16 %v585
        %v603 = vunpack.c.h.b16 %v585
        %v604 = vunpack.c.l.b16 %v586
        %v605 = vunpack.c.h.b16 %v586
        %v606 = vunpack.c.l.b16 %v587
        %v607 = vunpack.c.h.b16 %v587
        %v608 = vunpack.c.l.b16 %v588
        %v609 = vunpack.c.h.b16 %v588
        %v610 = vunpack.c.l.b16 %v589
        %v611 = vunpack.c.h.b16 %v589
        %v612 = vunpack.c.l.b16 %v590
        %v613 = vunpack.c.h.b16 %v590
        %v614 = vunpack.c.l.b16 %v591
        %v615 = vunpack.c.h.b16 %v591
        %v616 = vpack.c.b16 %v600, %v600
        %v617 = vpack.c.b16 %v601, %v601
        %v618 = vpack.c.b16 %v602, %v602
        %v619 = vpack.c.b16 %v603, %v603
        %v620 = vpack.c.b16 %v604, %v604
        %v621 = vpack.c.b16 %v605, %v605
        %v622 = vpack.c.b16 %v606, %v606
        %v623 = vpack.c.b16 %v607, %v607
        %v624 = vpack.c.b16 %v608, %v608
        %v625 = vpack.c.b16 %v609, %v609
        %v626 = vpack.c.b16 %v610, %v610
        %v627 = vpack.c.b16 %v611, %v611
        %v628 = vpack.c.b16 %v612, %v612
        %v629 = vpack.c.b16 %v613, %v613
        %v630 = vpack.c.b16 %v614, %v614
        %v631 = vpack.c.b16 %v615, %v615
        %v633 = vsel %vm458, %v334, 0
        %v636 = vsel %vm483, %v616, 0
        %638 = vmatprep.subr.bf16.mxu0 0
        %639 = vmatpush1.bf16.msra.mxu0 0
        %640 = vmatprep.subr.bf16.mxu0 0
        %641 = vmatpush1.bf16.msra.mxu0 0
        %642 = vmatprep.subr.bf16.mxu0 0
        %643 = vmatpush1.bf16.msra.mxu0 0
        %644 = vmatprep.subr.bf16.mxu0 0
        %645 = vmatpush1.bf16.msra.mxu0 0
        %646 = vmatprep.subr.bf16.mxu0 0
        %647 = vmatpush1.bf16.msra.mxu0 0
        %648 = vmatprep.subr.bf16.mxu0 0
        %649 = vmatpush1.bf16.msra.mxu0 0
        %650 = vmatprep.subr.bf16.mxu0 0
        %651 = vmatpush1.bf16.msra.mxu0 0
        %652 = vmatprep.subr.bf16.mxu0 0
        %653 = vmatpush1.bf16.msra.mxu0 %v636
        %654 = vmatprep.subr.bf16.mxu0 0
        %655 = vmatpush2.bf16.msra.mxu0 0
        %656 = vmatprep.subr.bf16.mxu0 0
        %657 = vmatpush2.bf16.msra.mxu0 0
        %658 = vmatprep.subr.bf16.mxu0 0
        %659 = vmatpush2.bf16.msra.mxu0 0
        %660 = vmatprep.subr.bf16.mxu0 0
        %661 = vmatpush2.bf16.msra.mxu0 0
        %662 = vmatprep.subr.bf16.mxu0 0
        %663 = vmatpush2.bf16.msra.mxu0 0
        %664 = vmatprep.subr.bf16.mxu0 0
        %665 = vmatpush2.bf16.msra.mxu0 0
        %666 = vmatprep.subr.bf16.mxu0 0
        %667 = vmatpush2.bf16.msra.mxu0 0
        %668 = vmatprep.subr.bf16.mxu0 0
        %669 = vmatpush2.bf16.msra.mxu0 0
        %670 = vmatprep.mubr.bf16.mxu0 0
        %671 = vmatmul.mubr.bf16.gmra.mxu0 %v633
        %v672 = vpop.f32.mrf.mxu0
        %v673 = vadd.f32 0.0, %v672
        %v674 = vpop.f32.mrf.mxu0
        %v675 = vpop.f32.mrf.mxu0
        %v676 = vpop.f32.mrf.mxu0
        %677 = vdwg.mxu0
        %v679 = vsel %vm458, %v335, 0
        %v682 = vsel %vm483, %v617, 0
        %684 = vmatprep.subr.bf16.mxu0 0
        %685 = vmatpush1.bf16.msra.mxu0 0
        %686 = vmatprep.subr.bf16.mxu0 0
        %687 = vmatpush1.bf16.msra.mxu0 0
        %688 = vmatprep.subr.bf16.mxu0 0
        %689 = vmatpush1.bf16.msra.mxu0 0
        %690 = vmatprep.subr.bf16.mxu0 0
        %691 = vmatpush1.bf16.msra.mxu0 0
        %692 = vmatprep.subr.bf16.mxu0 0
        %693 = vmatpush1.bf16.msra.mxu0 0
        %694 = vmatprep.subr.bf16.mxu0 0
        %695 = vmatpush1.bf16.msra.mxu0 0
        %696 = vmatprep.subr.bf16.mxu0 0
        %697 = vmatpush1.bf16.msra.mxu0 0
        %698 = vmatprep.subr.bf16.mxu0 0
        %699 = vmatpush1.bf16.msra.mxu0 %v682
        %700 = vmatprep.subr.bf16.mxu0 0
        %701 = vmatpush2.bf16.msra.mxu0 0
        %702 = vmatprep.subr.bf16.mxu0 0
        %703 = vmatpush2.bf16.msra.mxu0 0
        %704 = vmatprep.subr.bf16.mxu0 0
        %705 = vmatpush2.bf16.msra.mxu0 0
        %706 = vmatprep.subr.bf16.mxu0 0
        %707 = vmatpush2.bf16.msra.mxu0 0
        %708 = vmatprep.subr.bf16.mxu0 0
        %709 = vmatpush2.bf16.msra.mxu0 0
        %710 = vmatprep.subr.bf16.mxu0 0
        %711 = vmatpush2.bf16.msra.mxu0 0
        %712 = vmatprep.subr.bf16.mxu0 0
        %713 = vmatpush2.bf16.msra.mxu0 0
        %714 = vmatprep.subr.bf16.mxu0 0
        %715 = vmatpush2.bf16.msra.mxu0 0
        %716 = vmatprep.mubr.bf16.mxu0 0
        %717 = vmatmul.mubr.bf16.gmra.mxu0 %v679
        %v718 = vpop.f32.mrf.mxu0
        %v719 = vadd.f32 0.0, %v718
        %v720 = vpop.f32.mrf.mxu0
        %v721 = vpop.f32.mrf.mxu0
        %v722 = vpop.f32.mrf.mxu0
        %723 = vdwg.mxu0
        %v725 = vsel %vm458, %v336, 0
        %v728 = vsel %vm483, %v618, 0
        %730 = vmatprep.subr.bf16.mxu0 0
        %731 = vmatpush1.bf16.msra.mxu0 0
        %732 = vmatprep.subr.bf16.mxu0 0
        %733 = vmatpush1.bf16.msra.mxu0 0
        %734 = vmatprep.subr.bf16.mxu0 0
        %735 = vmatpush1.bf16.msra.mxu0 0
        %736 = vmatprep.subr.bf16.mxu0 0
        %737 = vmatpush1.bf16.msra.mxu0 0
        %738 = vmatprep.subr.bf16.mxu0 0
        %739 = vmatpush1.bf16.msra.mxu0 0
        %740 = vmatprep.subr.bf16.mxu0 0
        %741 = vmatpush1.bf16.msra.mxu0 0
        %742 = vmatprep.subr.bf16.mxu0 0
        %743 = vmatpush1.bf16.msra.mxu0 0
        %744 = vmatprep.subr.bf16.mxu0 0
        %745 = vmatpush1.bf16.msra.mxu0 %v728
        %746 = vmatprep.subr.bf16.mxu0 0
        %747 = vmatpush2.bf16.msra.mxu0 0
        %748 = vmatprep.subr.bf16.mxu0 0
        %749 = vmatpush2.bf16.msra.mxu0 0
        %750 = vmatprep.subr.bf16.mxu0 0
        %751 = vmatpush2.bf16.msra.mxu0 0
        %752 = vmatprep.subr.bf16.mxu0 0
        %753 = vmatpush2.bf16.msra.mxu0 0
        %754 = vmatprep.subr.bf16.mxu0 0
        %755 = vmatpush2.bf16.msra.mxu0 0
        %756 = vmatprep.subr.bf16.mxu0 0
        %757 = vmatpush2.bf16.msra.mxu0 0
        %758 = vmatprep.subr.bf16.mxu0 0
        %759 = vmatpush2.bf16.msra.mxu0 0
        %760 = vmatprep.subr.bf16.mxu0 0
        %761 = vmatpush2.bf16.msra.mxu0 0
        %762 = vmatprep.mubr.bf16.mxu0 0
        %763 = vmatmul.mubr.bf16.gmra.mxu0 %v725
        %v764 = vpop.f32.mrf.mxu0
        %v765 = vadd.f32 0.0, %v764
        %v766 = vpop.f32.mrf.mxu0
        %v767 = vpop.f32.mrf.mxu0
        %v768 = vpop.f32.mrf.mxu0
        %769 = vdwg.mxu0
        %v771 = vsel %vm458, %v337, 0
        %v774 = vsel %vm483, %v619, 0
        %776 = vmatprep.subr.bf16.mxu0 0
        %777 = vmatpush1.bf16.msra.mxu0 0
        %778 = vmatprep.subr.bf16.mxu0 0
        %779 = vmatpush1.bf16.msra.mxu0 0
        %780 = vmatprep.subr.bf16.mxu0 0
        %781 = vmatpush1.bf16.msra.mxu0 0
        %782 = vmatprep.subr.bf16.mxu0 0
        %783 = vmatpush1.bf16.msra.mxu0 0
        %784 = vmatprep.subr.bf16.mxu0 0
        %785 = vmatpush1.bf16.msra.mxu0 0
        %786 = vmatprep.subr.bf16.mxu0 0
        %787 = vmatpush1.bf16.msra.mxu0 0
        %788 = vmatprep.subr.bf16.mxu0 0
        %789 = vmatpush1.bf16.msra.mxu0 0
        %790 = vmatprep.subr.bf16.mxu0 0
        %791 = vmatpush1.bf16.msra.mxu0 %v774
        %792 = vmatprep.subr.bf16.mxu0 0
        %793 = vmatpush2.bf16.msra.mxu0 0
        %794 = vmatprep.subr.bf16.mxu0 0
        %795 = vmatpush2.bf16.msra.mxu0 0
        %796 = vmatprep.subr.bf16.mxu0 0
        %797 = vmatpush2.bf16.msra.mxu0 0
        %798 = vmatprep.subr.bf16.mxu0 0
        %799 = vmatpush2.bf16.msra.mxu0 0
        %800 = vmatprep.subr.bf16.mxu0 0
        %801 = vmatpush2.bf16.msra.mxu0 0
        %802 = vmatprep.subr.bf16.mxu0 0
        %803 = vmatpush2.bf16.msra.mxu0 0
        %804 = vmatprep.subr.bf16.mxu0 0
        %805 = vmatpush2.bf16.msra.mxu0 0
        %806 = vmatprep.subr.bf16.mxu0 0
        %807 = vmatpush2.bf16.msra.mxu0 0
        %808 = vmatprep.mubr.bf16.mxu0 0
        %809 = vmatmul.mubr.bf16.gmra.mxu0 %v771
        %v810 = vpop.f32.mrf.mxu0
        %v811 = vadd.f32 0.0, %v810
        %v812 = vpop.f32.mrf.mxu0
        %v813 = vpop.f32.mrf.mxu0
        %v814 = vpop.f32.mrf.mxu0
        %815 = vdwg.mxu0
        %v817 = vsel %vm458, %v338, 0
        %v820 = vsel %vm483, %v620, 0
        %822 = vmatprep.subr.bf16.mxu0 0
        %823 = vmatpush1.bf16.msra.mxu0 0
        %824 = vmatprep.subr.bf16.mxu0 0
        %825 = vmatpush1.bf16.msra.mxu0 0
        %826 = vmatprep.subr.bf16.mxu0 0
        %827 = vmatpush1.bf16.msra.mxu0 0
        %828 = vmatprep.subr.bf16.mxu0 0
        %829 = vmatpush1.bf16.msra.mxu0 0
        %830 = vmatprep.subr.bf16.mxu0 0
        %831 = vmatpush1.bf16.msra.mxu0 0
        %832 = vmatprep.subr.bf16.mxu0 0
        %833 = vmatpush1.bf16.msra.mxu0 0
        %834 = vmatprep.subr.bf16.mxu0 0
        %835 = vmatpush1.bf16.msra.mxu0 0
        %836 = vmatprep.subr.bf16.mxu0 0
        %837 = vmatpush1.bf16.msra.mxu0 %v820
        %838 = vmatprep.subr.bf16.mxu0 0
        %839 = vmatpush2.bf16.msra.mxu0 0
        %840 = vmatprep.subr.bf16.mxu0 0
        %841 = vmatpush2.bf16.msra.mxu0 0
        %842 = vmatprep.subr.bf16.mxu0 0
        %843 = vmatpush2.bf16.msra.mxu0 0
        %844 = vmatprep.subr.bf16.mxu0 0
        %845 = vmatpush2.bf16.msra.mxu0 0
        %846 = vmatprep.subr.bf16.mxu0 0
        %847 = vmatpush2.bf16.msra.mxu0 0
        %848 = vmatprep.subr.bf16.mxu0 0
        %849 = vmatpush2.bf16.msra.mxu0 0
        %850 = vmatprep.subr.bf16.mxu0 0
        %851 = vmatpush2.bf16.msra.mxu0 0
        %852 = vmatprep.subr.bf16.mxu0 0
        %853 = vmatpush2.bf16.msra.mxu0 0
        %854 = vmatprep.mubr.bf16.mxu0 0
        %855 = vmatmul.mubr.bf16.gmra.mxu0 %v817
        %v856 = vpop.f32.mrf.mxu0
        %v857 = vadd.f32 0.0, %v856
        %v858 = vpop.f32.mrf.mxu0
        %v859 = vpop.f32.mrf.mxu0
        %v860 = vpop.f32.mrf.mxu0
        %861 = vdwg.mxu0
        %v863 = vsel %vm458, %v339, 0
        %v866 = vsel %vm483, %v621, 0
        %868 = vmatprep.subr.bf16.mxu0 0
        %869 = vmatpush1.bf16.msra.mxu0 0
        %870 = vmatprep.subr.bf16.mxu0 0
        %871 = vmatpush1.bf16.msra.mxu0 0
        %872 = vmatprep.subr.bf16.mxu0 0
        %873 = vmatpush1.bf16.msra.mxu0 0
        %874 = vmatprep.subr.bf16.mxu0 0
        %875 = vmatpush1.bf16.msra.mxu0 0
        %876 = vmatprep.subr.bf16.mxu0 0
        %877 = vmatpush1.bf16.msra.mxu0 0
        %878 = vmatprep.subr.bf16.mxu0 0
        %879 = vmatpush1.bf16.msra.mxu0 0
        %880 = vmatprep.subr.bf16.mxu0 0
        %881 = vmatpush1.bf16.msra.mxu0 0
        %882 = vmatprep.subr.bf16.mxu0 0
        %883 = vmatpush1.bf16.msra.mxu0 %v866
        %884 = vmatprep.subr.bf16.mxu0 0
        %885 = vmatpush2.bf16.msra.mxu0 0
        %886 = vmatprep.subr.bf16.mxu0 0
        %887 = vmatpush2.bf16.msra.mxu0 0
        %888 = vmatprep.subr.bf16.mxu0 0
        %889 = vmatpush2.bf16.msra.mxu0 0
        %890 = vmatprep.subr.bf16.mxu0 0
        %891 = vmatpush2.bf16.msra.mxu0 0
        %892 = vmatprep.subr.bf16.mxu0 0
        %893 = vmatpush2.bf16.msra.mxu0 0
        %894 = vmatprep.subr.bf16.mxu0 0
        %895 = vmatpush2.bf16.msra.mxu0 0
        %896 = vmatprep.subr.bf16.mxu0 0
        %897 = vmatpush2.bf16.msra.mxu0 0
        %898 = vmatprep.subr.bf16.mxu0 0
        %899 = vmatpush2.bf16.msra.mxu0 0
        %900 = vmatprep.mubr.bf16.mxu0 0
        %901 = vmatmul.mubr.bf16.gmra.mxu0 %v863
        %v902 = vpop.f32.mrf.mxu0
        %v903 = vadd.f32 0.0, %v902
        %v904 = vpop.f32.mrf.mxu0
        %v905 = vpop.f32.mrf.mxu0
        %v906 = vpop.f32.mrf.mxu0
        %907 = vdwg.mxu0
        %v909 = vsel %vm458, %v340, 0
        %v912 = vsel %vm483, %v622, 0
        %914 = vmatprep.subr.bf16.mxu0 0
        %915 = vmatpush1.bf16.msra.mxu0 0
        %916 = vmatprep.subr.bf16.mxu0 0
        %917 = vmatpush1.bf16.msra.mxu0 0
        %918 = vmatprep.subr.bf16.mxu0 0
        %919 = vmatpush1.bf16.msra.mxu0 0
        %920 = vmatprep.subr.bf16.mxu0 0
        %921 = vmatpush1.bf16.msra.mxu0 0
        %922 = vmatprep.subr.bf16.mxu0 0
        %923 = vmatpush1.bf16.msra.mxu0 0
        %924 = vmatprep.subr.bf16.mxu0 0
        %925 = vmatpush1.bf16.msra.mxu0 0
        %926 = vmatprep.subr.bf16.mxu0 0
        %927 = vmatpush1.bf16.msra.mxu0 0
        %928 = vmatprep.subr.bf16.mxu0 0
        %929 = vmatpush1.bf16.msra.mxu0 %v912
        %930 = vmatprep.subr.bf16.mxu0 0
        %931 = vmatpush2.bf16.msra.mxu0 0
        %932 = vmatprep.subr.bf16.mxu0 0
        %933 = vmatpush2.bf16.msra.mxu0 0
        %934 = vmatprep.subr.bf16.mxu0 0
        %935 = vmatpush2.bf16.msra.mxu0 0
        %936 = vmatprep.subr.bf16.mxu0 0
        %937 = vmatpush2.bf16.msra.mxu0 0
        %938 = vmatprep.subr.bf16.mxu0 0
        %939 = vmatpush2.bf16.msra.mxu0 0
        %940 = vmatprep.subr.bf16.mxu0 0
        %941 = vmatpush2.bf16.msra.mxu0 0
        %942 = vmatprep.subr.bf16.mxu0 0
        %943 = vmatpush2.bf16.msra.mxu0 0
        %944 = vmatprep.subr.bf16.mxu0 0
        %945 = vmatpush2.bf16.msra.mxu0 0
        %946 = vmatprep.mubr.bf16.mxu0 0
        %947 = vmatmul.mubr.bf16.gmra.mxu0 %v909
        %v948 = vpop.f32.mrf.mxu0
        %v949 = vadd.f32 0.0, %v948
        %v950 = vpop.f32.mrf.mxu0
        %v951 = vpop.f32.mrf.mxu0
        %v952 = vpop.f32.mrf.mxu0
        %953 = vdwg.mxu0
        %v955 = vsel %vm458, %v341, 0
        %v958 = vsel %vm483, %v623, 0
        %960 = vmatprep.subr.bf16.mxu0 0
        %961 = vmatpush1.bf16.msra.mxu0 0
        %962 = vmatprep.subr.bf16.mxu0 0
        %963 = vmatpush1.bf16.msra.mxu0 0
        %964 = vmatprep.subr.bf16.mxu0 0
        %965 = vmatpush1.bf16.msra.mxu0 0
        %966 = vmatprep.subr.bf16.mxu0 0
        %967 = vmatpush1.bf16.msra.mxu0 0
        %968 = vmatprep.subr.bf16.mxu0 0
        %969 = vmatpush1.bf16.msra.mxu0 0
        %970 = vmatprep.subr.bf16.mxu0 0
        %971 = vmatpush1.bf16.msra.mxu0 0
        %972 = vmatprep.subr.bf16.mxu0 0
        %973 = vmatpush1.bf16.msra.mxu0 0
        %974 = vmatprep.subr.bf16.mxu0 0
        %975 = vmatpush1.bf16.msra.mxu0 %v958
        %976 = vmatprep.subr.bf16.mxu0 0
        %977 = vmatpush2.bf16.msra.mxu0 0
        %978 = vmatprep.subr.bf16.mxu0 0
        %979 = vmatpush2.bf16.msra.mxu0 0
        %980 = vmatprep.subr.bf16.mxu0 0
        %981 = vmatpush2.bf16.msra.mxu0 0
        %982 = vmatprep.subr.bf16.mxu0 0
        %983 = vmatpush2.bf16.msra.mxu0 0
        %984 = vmatprep.subr.bf16.mxu0 0
        %985 = vmatpush2.bf16.msra.mxu0 0
        %986 = vmatprep.subr.bf16.mxu0 0
        %987 = vmatpush2.bf16.msra.mxu0 0
        %988 = vmatprep.subr.bf16.mxu0 0
        %989 = vmatpush2.bf16.msra.mxu0 0
        %990 = vmatprep.subr.bf16.mxu0 0
        %991 = vmatpush2.bf16.msra.mxu0 0
        %992 = vmatprep.mubr.bf16.mxu0 0
        %993 = vmatmul.mubr.bf16.gmra.mxu0 %v955
        %v994 = vpop.f32.mrf.mxu0
        %v995 = vadd.f32 0.0, %v994
        %v996 = vpop.f32.mrf.mxu0
        %v997 = vpop.f32.mrf.mxu0
        %v998 = vpop.f32.mrf.mxu0
        %999 = vdwg.mxu0
        %v1001 = vsel %vm458, %v342, 0
        %v1004 = vsel %vm483, %v624, 0
        %1006 = vmatprep.subr.bf16.mxu0 0
        %1007 = vmatpush1.bf16.msra.mxu0 0
        %1008 = vmatprep.subr.bf16.mxu0 0
        %1009 = vmatpush1.bf16.msra.mxu0 0
        %1010 = vmatprep.subr.bf16.mxu0 0
        %1011 = vmatpush1.bf16.msra.mxu0 0
        %1012 = vmatprep.subr.bf16.mxu0 0
        %1013 = vmatpush1.bf16.msra.mxu0 0
        %1014 = vmatprep.subr.bf16.mxu0 0
        %1015 = vmatpush1.bf16.msra.mxu0 0
        %1016 = vmatprep.subr.bf16.mxu0 0
        %1017 = vmatpush1.bf16.msra.mxu0 0
        %1018 = vmatprep.subr.bf16.mxu0 0
        %1019 = vmatpush1.bf16.msra.mxu0 0
        %1020 = vmatprep.subr.bf16.mxu0 0
        %1021 = vmatpush1.bf16.msra.mxu0 %v1004
        %1022 = vmatprep.subr.bf16.mxu0 0
        %1023 = vmatpush2.bf16.msra.mxu0 0
        %1024 = vmatprep.subr.bf16.mxu0 0
        %1025 = vmatpush2.bf16.msra.mxu0 0
        %1026 = vmatprep.subr.bf16.mxu0 0
        %1027 = vmatpush2.bf16.msra.mxu0 0
        %1028 = vmatprep.subr.bf16.mxu0 0
        %1029 = vmatpush2.bf16.msra.mxu0 0
        %1030 = vmatprep.subr.bf16.mxu0 0
        %1031 = vmatpush2.bf16.msra.mxu0 0
        %1032 = vmatprep.subr.bf16.mxu0 0
        %1033 = vmatpush2.bf16.msra.mxu0 0
        %1034 = vmatprep.subr.bf16.mxu0 0
        %1035 = vmatpush2.bf16.msra.mxu0 0
        %1036 = vmatprep.subr.bf16.mxu0 0
        %1037 = vmatpush2.bf16.msra.mxu0 0
        %1038 = vmatprep.mubr.bf16.mxu0 0
        %1039 = vmatmul.mubr.bf16.gmra.mxu0 %v1001
        %v1040 = vpop.f32.mrf.mxu0
        %v1041 = vadd.f32 0.0, %v1040
        %v1042 = vpop.f32.mrf.mxu0
        %v1043 = vpop.f32.mrf.mxu0
        %v1044 = vpop.f32.mrf.mxu0
        %1045 = vdwg.mxu0
        %v1047 = vsel %vm458, %v343, 0
        %v1050 = vsel %vm483, %v625, 0
        %1052 = vmatprep.subr.bf16.mxu0 0
        %1053 = vmatpush1.bf16.msra.mxu0 0
        %1054 = vmatprep.subr.bf16.mxu0 0
        %1055 = vmatpush1.bf16.msra.mxu0 0
        %1056 = vmatprep.subr.bf16.mxu0 0
        %1057 = vmatpush1.bf16.msra.mxu0 0
        %1058 = vmatprep.subr.bf16.mxu0 0
        %1059 = vmatpush1.bf16.msra.mxu0 0
        %1060 = vmatprep.subr.bf16.mxu0 0
        %1061 = vmatpush1.bf16.msra.mxu0 0
        %1062 = vmatprep.subr.bf16.mxu0 0
        %1063 = vmatpush1.bf16.msra.mxu0 0
        %1064 = vmatprep.subr.bf16.mxu0 0
        %1065 = vmatpush1.bf16.msra.mxu0 0
        %1066 = vmatprep.subr.bf16.mxu0 0
        %1067 = vmatpush1.bf16.msra.mxu0 %v1050
        %1068 = vmatprep.subr.bf16.mxu0 0
        %1069 = vmatpush2.bf16.msra.mxu0 0
        %1070 = vmatprep.subr.bf16.mxu0 0
        %1071 = vmatpush2.bf16.msra.mxu0 0
        %1072 = vmatprep.subr.bf16.mxu0 0
        %1073 = vmatpush2.bf16.msra.mxu0 0
        %1074 = vmatprep.subr.bf16.mxu0 0
        %1075 = vmatpush2.bf16.msra.mxu0 0
        %1076 = vmatprep.subr.bf16.mxu0 0
        %1077 = vmatpush2.bf16.msra.mxu0 0
        %1078 = vmatprep.subr.bf16.mxu0 0
        %1079 = vmatpush2.bf16.msra.mxu0 0
        %1080 = vmatprep.subr.bf16.mxu0 0
        %1081 = vmatpush2.bf16.msra.mxu0 0
        %1082 = vmatprep.subr.bf16.mxu0 0
        %1083 = vmatpush2.bf16.msra.mxu0 0
        %1084 = vmatprep.mubr.bf16.mxu0 0
        %1085 = vmatmul.mubr.bf16.gmra.mxu0 %v1047
        %v1086 = vpop.f32.mrf.mxu0
        %v1087 = vadd.f32 0.0, %v1086
        %v1088 = vpop.f32.mrf.mxu0
        %v1089 = vpop.f32.mrf.mxu0
        %v1090 = vpop.f32.mrf.mxu0
        %1091 = vdwg.mxu0
        %v1093 = vsel %vm458, %v344, 0
        %v1096 = vsel %vm483, %v626, 0
        %1098 = vmatprep.subr.bf16.mxu0 0
        %1099 = vmatpush1.bf16.msra.mxu0 0
        %1100 = vmatprep.subr.bf16.mxu0 0
        %1101 = vmatpush1.bf16.msra.mxu0 0
        %1102 = vmatprep.subr.bf16.mxu0 0
        %1103 = vmatpush1.bf16.msra.mxu0 0
        %1104 = vmatprep.subr.bf16.mxu0 0
        %1105 = vmatpush1.bf16.msra.mxu0 0
        %1106 = vmatprep.subr.bf16.mxu0 0
        %1107 = vmatpush1.bf16.msra.mxu0 0
        %1108 = vmatprep.subr.bf16.mxu0 0
        %1109 = vmatpush1.bf16.msra.mxu0 0
        %1110 = vmatprep.subr.bf16.mxu0 0
        %1111 = vmatpush1.bf16.msra.mxu0 0
        %1112 = vmatprep.subr.bf16.mxu0 0
        %1113 = vmatpush1.bf16.msra.mxu0 %v1096
        %1114 = vmatprep.subr.bf16.mxu0 0
        %1115 = vmatpush2.bf16.msra.mxu0 0
        %1116 = vmatprep.subr.bf16.mxu0 0
        %1117 = vmatpush2.bf16.msra.mxu0 0
        %1118 = vmatprep.subr.bf16.mxu0 0
        %1119 = vmatpush2.bf16.msra.mxu0 0
        %1120 = vmatprep.subr.bf16.mxu0 0
        %1121 = vmatpush2.bf16.msra.mxu0 0
        %1122 = vmatprep.subr.bf16.mxu0 0
        %1123 = vmatpush2.bf16.msra.mxu0 0
        %1124 = vmatprep.subr.bf16.mxu0 0
        %1125 = vmatpush2.bf16.msra.mxu0 0
        %1126 = vmatprep.subr.bf16.mxu0 0
        %1127 = vmatpush2.bf16.msra.mxu0 0
        %1128 = vmatprep.subr.bf16.mxu0 0
        %1129 = vmatpush2.bf16.msra.mxu0 0
        %1130 = vmatprep.mubr.bf16.mxu0 0
        %1131 = vmatmul.mubr.bf16.gmra.mxu0 %v1093
        %v1132 = vpop.f32.mrf.mxu0
        %v1133 = vadd.f32 0.0, %v1132
        %v1134 = vpop.f32.mrf.mxu0
        %v1135 = vpop.f32.mrf.mxu0
        %v1136 = vpop.f32.mrf.mxu0
        %1137 = vdwg.mxu0
        %v1139 = vsel %vm458, %v345, 0
        %v1142 = vsel %vm483, %v627, 0
        %1144 = vmatprep.subr.bf16.mxu0 0
        %1145 = vmatpush1.bf16.msra.mxu0 0
        %1146 = vmatprep.subr.bf16.mxu0 0
        %1147 = vmatpush1.bf16.msra.mxu0 0
        %1148 = vmatprep.subr.bf16.mxu0 0
        %1149 = vmatpush1.bf16.msra.mxu0 0
        %1150 = vmatprep.subr.bf16.mxu0 0
        %1151 = vmatpush1.bf16.msra.mxu0 0
        %1152 = vmatprep.subr.bf16.mxu0 0
        %1153 = vmatpush1.bf16.msra.mxu0 0
        %1154 = vmatprep.subr.bf16.mxu0 0
        %1155 = vmatpush1.bf16.msra.mxu0 0
        %1156 = vmatprep.subr.bf16.mxu0 0
        %1157 = vmatpush1.bf16.msra.mxu0 0
        %1158 = vmatprep.subr.bf16.mxu0 0
        %1159 = vmatpush1.bf16.msra.mxu0 %v1142
        %1160 = vmatprep.subr.bf16.mxu0 0
        %1161 = vmatpush2.bf16.msra.mxu0 0
        %1162 = vmatprep.subr.bf16.mxu0 0
        %1163 = vmatpush2.bf16.msra.mxu0 0
        %1164 = vmatprep.subr.bf16.mxu0 0
        %1165 = vmatpush2.bf16.msra.mxu0 0
        %1166 = vmatprep.subr.bf16.mxu0 0
        %1167 = vmatpush2.bf16.msra.mxu0 0
        %1168 = vmatprep.subr.bf16.mxu0 0
        %1169 = vmatpush2.bf16.msra.mxu0 0
        %1170 = vmatprep.subr.bf16.mxu0 0
        %1171 = vmatpush2.bf16.msra.mxu0 0
        %1172 = vmatprep.subr.bf16.mxu0 0
        %1173 = vmatpush2.bf16.msra.mxu0 0
        %1174 = vmatprep.subr.bf16.mxu0 0
        %1175 = vmatpush2.bf16.msra.mxu0 0
        %1176 = vmatprep.mubr.bf16.mxu0 0
        %1177 = vmatmul.mubr.bf16.gmra.mxu0 %v1139
        %v1178 = vpop.f32.mrf.mxu0
        %v1179 = vadd.f32 0.0, %v1178
        %v1180 = vpop.f32.mrf.mxu0
        %v1181 = vpop.f32.mrf.mxu0
        %v1182 = vpop.f32.mrf.mxu0
        %1183 = vdwg.mxu0
        %v1185 = vsel %vm458, %v346, 0
        %v1188 = vsel %vm483, %v628, 0
        %1190 = vmatprep.subr.bf16.mxu0 0
        %1191 = vmatpush1.bf16.msra.mxu0 0
        %1192 = vmatprep.subr.bf16.mxu0 0
        %1193 = vmatpush1.bf16.msra.mxu0 0
        %1194 = vmatprep.subr.bf16.mxu0 0
        %1195 = vmatpush1.bf16.msra.mxu0 0
        %1196 = vmatprep.subr.bf16.mxu0 0
        %1197 = vmatpush1.bf16.msra.mxu0 0
        %1198 = vmatprep.subr.bf16.mxu0 0
        %1199 = vmatpush1.bf16.msra.mxu0 0
        %1200 = vmatprep.subr.bf16.mxu0 0
        %1201 = vmatpush1.bf16.msra.mxu0 0
        %1202 = vmatprep.subr.bf16.mxu0 0
        %1203 = vmatpush1.bf16.msra.mxu0 0
        %1204 = vmatprep.subr.bf16.mxu0 0
        %1205 = vmatpush1.bf16.msra.mxu0 %v1188
        %1206 = vmatprep.subr.bf16.mxu0 0
        %1207 = vmatpush2.bf16.msra.mxu0 0
        %1208 = vmatprep.subr.bf16.mxu0 0
        %1209 = vmatpush2.bf16.msra.mxu0 0
        %1210 = vmatprep.subr.bf16.mxu0 0
        %1211 = vmatpush2.bf16.msra.mxu0 0
        %1212 = vmatprep.subr.bf16.mxu0 0
        %1213 = vmatpush2.bf16.msra.mxu0 0
        %1214 = vmatprep.subr.bf16.mxu0 0
        %1215 = vmatpush2.bf16.msra.mxu0 0
        %1216 = vmatprep.subr.bf16.mxu0 0
        %1217 = vmatpush2.bf16.msra.mxu0 0
        %1218 = vmatprep.subr.bf16.mxu0 0
        %1219 = vmatpush2.bf16.msra.mxu0 0
        %1220 = vmatprep.subr.bf16.mxu0 0
        %1221 = vmatpush2.bf16.msra.mxu0 0
        %1222 = vmatprep.mubr.bf16.mxu0 0
        %1223 = vmatmul.mubr.bf16.gmra.mxu0 %v1185
        %v1224 = vpop.f32.mrf.mxu0
        %v1225 = vadd.f32 0.0, %v1224
        %v1226 = vpop.f32.mrf.mxu0
        %v1227 = vpop.f32.mrf.mxu0
        %v1228 = vpop.f32.mrf.mxu0
        %1229 = vdwg.mxu0
        %v1231 = vsel %vm458, %v347, 0
        %v1234 = vsel %vm483, %v629, 0
        %1236 = vmatprep.subr.bf16.mxu0 0
        %1237 = vmatpush1.bf16.msra.mxu0 0
        %1238 = vmatprep.subr.bf16.mxu0 0
        %1239 = vmatpush1.bf16.msra.mxu0 0
        %1240 = vmatprep.subr.bf16.mxu0 0
        %1241 = vmatpush1.bf16.msra.mxu0 0
        %1242 = vmatprep.subr.bf16.mxu0 0
        %1243 = vmatpush1.bf16.msra.mxu0 0
        %1244 = vmatprep.subr.bf16.mxu0 0
        %1245 = vmatpush1.bf16.msra.mxu0 0
        %1246 = vmatprep.subr.bf16.mxu0 0
        %1247 = vmatpush1.bf16.msra.mxu0 0
        %1248 = vmatprep.subr.bf16.mxu0 0
        %1249 = vmatpush1.bf16.msra.mxu0 0
        %1250 = vmatprep.subr.bf16.mxu0 0
        %1251 = vmatpush1.bf16.msra.mxu0 %v1234
        %1252 = vmatprep.subr.bf16.mxu0 0
        %1253 = vmatpush2.bf16.msra.mxu0 0
        %1254 = vmatprep.subr.bf16.mxu0 0
        %1255 = vmatpush2.bf16.msra.mxu0 0
        %1256 = vmatprep.subr.bf16.mxu0 0
        %1257 = vmatpush2.bf16.msra.mxu0 0
        %1258 = vmatprep.subr.bf16.mxu0 0
        %1259 = vmatpush2.bf16.msra.mxu0 0
        %1260 = vmatprep.subr.bf16.mxu0 0
        %1261 = vmatpush2.bf16.msra.mxu0 0
        %1262 = vmatprep.subr.bf16.mxu0 0
        %1263 = vmatpush2.bf16.msra.mxu0 0
        %1264 = vmatprep.subr.bf16.mxu0 0
        %1265 = vmatpush2.bf16.msra.mxu0 0
        %1266 = vmatprep.subr.bf16.mxu0 0
        %1267 = vmatpush2.bf16.msra.mxu0 0
        %1268 = vmatprep.mubr.bf16.mxu0 0
        %1269 = vmatmul.mubr.bf16.gmra.mxu0 %v1231
        %v1270 = vpop.f32.mrf.mxu0
        %v1271 = vadd.f32 0.0, %v1270
        %v1272 = vpop.f32.mrf.mxu0
        %v1273 = vpop.f32.mrf.mxu0
        %v1274 = vpop.f32.mrf.mxu0
        %1275 = vdwg.mxu0
        %v1277 = vsel %vm458, %v348, 0
        %v1280 = vsel %vm483, %v630, 0
        %1282 = vmatprep.subr.bf16.mxu0 0
        %1283 = vmatpush1.bf16.msra.mxu0 0
        %1284 = vmatprep.subr.bf16.mxu0 0
        %1285 = vmatpush1.bf16.msra.mxu0 0
        %1286 = vmatprep.subr.bf16.mxu0 0
        %1287 = vmatpush1.bf16.msra.mxu0 0
        %1288 = vmatprep.subr.bf16.mxu0 0
        %1289 = vmatpush1.bf16.msra.mxu0 0
        %1290 = vmatprep.subr.bf16.mxu0 0
        %1291 = vmatpush1.bf16.msra.mxu0 0
        %1292 = vmatprep.subr.bf16.mxu0 0
        %1293 = vmatpush1.bf16.msra.mxu0 0
        %1294 = vmatprep.subr.bf16.mxu0 0
        %1295 = vmatpush1.bf16.msra.mxu0 0
        %1296 = vmatprep.subr.bf16.mxu0 0
        %1297 = vmatpush1.bf16.msra.mxu0 %v1280
        %1298 = vmatprep.subr.bf16.mxu0 0
        %1299 = vmatpush2.bf16.msra.mxu0 0
        %1300 = vmatprep.subr.bf16.mxu0 0
        %1301 = vmatpush2.bf16.msra.mxu0 0
        %1302 = vmatprep.subr.bf16.mxu0 0
        %1303 = vmatpush2.bf16.msra.mxu0 0
        %1304 = vmatprep.subr.bf16.mxu0 0
        %1305 = vmatpush2.bf16.msra.mxu0 0
        %1306 = vmatprep.subr.bf16.mxu0 0
        %1307 = vmatpush2.bf16.msra.mxu0 0
        %1308 = vmatprep.subr.bf16.mxu0 0
        %1309 = vmatpush2.bf16.msra.mxu0 0
        %1310 = vmatprep.subr.bf16.mxu0 0
        %1311 = vmatpush2.bf16.msra.mxu0 0
        %1312 = vmatprep.subr.bf16.mxu0 0
        %1313 = vmatpush2.bf16.msra.mxu0 0
        %1314 = vmatprep.mubr.bf16.mxu0 0
        %1315 = vmatmul.mubr.bf16.gmra.mxu0 %v1277
        %v1316 = vpop.f32.mrf.mxu0
        %v1317 = vadd.f32 0.0, %v1316
        %v1318 = vpop.f32.mrf.mxu0
        %v1319 = vpop.f32.mrf.mxu0
        %v1320 = vpop.f32.mrf.mxu0
        %1321 = vdwg.mxu0
        %v1323 = vsel %vm458, %v349, 0
        %v1326 = vsel %vm483, %v631, 0
        %1328 = vmatprep.subr.bf16.mxu0 0
        %1329 = vmatpush1.bf16.msra.mxu0 0
        %1330 = vmatprep.subr.bf16.mxu0 0
        %1331 = vmatpush1.bf16.msra.mxu0 0
        %1332 = vmatprep.subr.bf16.mxu0 0
        %1333 = vmatpush1.bf16.msra.mxu0 0
        %1334 = vmatprep.subr.bf16.mxu0 0
        %1335 = vmatpush1.bf16.msra.mxu0 0
        %1336 = vmatprep.subr.bf16.mxu0 0
        %1337 = vmatpush1.bf16.msra.mxu0 0
        %1338 = vmatprep.subr.bf16.mxu0 0
        %1339 = vmatpush1.bf16.msra.mxu0 0
        %1340 = vmatprep.subr.bf16.mxu0 0
        %1341 = vmatpush1.bf16.msra.mxu0 0
        %1342 = vmatprep.subr.bf16.mxu0 0
        %1343 = vmatpush1.bf16.msra.mxu0 %v1326
        %1344 = vmatprep.subr.bf16.mxu0 0
        %1345 = vmatpush2.bf16.msra.mxu0 0
        %1346 = vmatprep.subr.bf16.mxu0 0
        %1347 = vmatpush2.bf16.msra.mxu0 0
        %1348 = vmatprep.subr.bf16.mxu0 0
        %1349 = vmatpush2.bf16.msra.mxu0 0
        %1350 = vmatprep.subr.bf16.mxu0 0
        %1351 = vmatpush2.bf16.msra.mxu0 0
        %1352 = vmatprep.subr.bf16.mxu0 0
        %1353 = vmatpush2.bf16.msra.mxu0 0
        %1354 = vmatprep.subr.bf16.mxu0 0
        %1355 = vmatpush2.bf16.msra.mxu0 0
        %1356 = vmatprep.subr.bf16.mxu0 0
        %1357 = vmatpush2.bf16.msra.mxu0 0
        %1358 = vmatprep.subr.bf16.mxu0 0
        %1359 = vmatpush2.bf16.msra.mxu0 0
        %1360 = vmatprep.mubr.bf16.mxu0 0
        %1361 = vmatmul.mubr.bf16.gmra.mxu0 %v1323
        %v1362 = vpop.f32.mrf.mxu0
        %v1363 = vadd.f32 0.0, %v1362
        %v1364 = vpop.f32.mrf.mxu0
        %v1365 = vpop.f32.mrf.mxu0
        %v1366 = vpop.f32.mrf.mxu0
        %1367 = vdwg.mxu0
        %v1368 = vlaneseq
        %v1369 = vshrl.u32 %v1368, 7
        %v1370 = vsub.s32 0, %v1369
        %v1371 = vrot.slane %v417, %v1370
        %v1372 = vadd.f32 %v673, %v1371
        %v1373 = vadd.f32 %v719, %v1371
        %v1374 = vadd.f32 %v765, %v1371
        %v1375 = vadd.f32 %v811, %v1371
        %v1376 = vadd.f32 %v857, %v1371
        %v1377 = vadd.f32 %v903, %v1371
        %v1378 = vadd.f32 %v949, %v1371
        %v1379 = vadd.f32 %v995, %v1371
        %v1380 = vadd.f32 %v1041, %v1371
        %v1381 = vadd.f32 %v1087, %v1371
        %v1382 = vadd.f32 %v1133, %v1371
        %v1383 = vadd.f32 %v1179, %v1371
        %v1384 = vadd.f32 %v1225, %v1371
        %v1385 = vadd.f32 %v1271, %v1371
        %v1386 = vadd.f32 %v1317, %v1371
        %v1387 = vadd.f32 %v1363, %v1371
        %v1388 = vmax.f32 %v1372, 0.0
        %v1389 = vmax.f32 %v1373, 0.0
        %v1390 = vmax.f32 %v1374, 0.0
        %v1391 = vmax.f32 %v1375, 0.0
        %v1392 = vmax.f32 %v1376, 0.0
        %v1393 = vmax.f32 %v1377, 0.0
        %v1394 = vmax.f32 %v1378, 0.0
        %v1395 = vmax.f32 %v1379, 0.0
        %v1396 = vmax.f32 %v1380, 0.0
        %v1397 = vmax.f32 %v1381, 0.0
        %v1398 = vmax.f32 %v1382, 0.0
        %v1399 = vmax.f32 %v1383, 0.0
        %v1400 = vmax.f32 %v1384, 0.0
        %v1401 = vmax.f32 %v1385, 0.0
        %v1402 = vmax.f32 %v1386, 0.0
        %v1403 = vmax.f32 %v1387, 0.0
        %v1404 = vpack.c.bf16 %v1389, %v1388
        %v1405 = vpack.c.bf16 %v1391, %v1390
        %v1406 = vpack.c.bf16 %v1393, %v1392
        %v1407 = vpack.c.bf16 %v1395, %v1394
        %v1408 = vpack.c.bf16 %v1397, %v1396
        %v1409 = vpack.c.bf16 %v1399, %v1398
        %v1410 = vpack.c.bf16 %v1401, %v1400
        %v1411 = vpack.c.bf16 %v1403, %v1402
        %v1413 = vsel %vm483, %v367, 0
        %1415 = vmatprep.subr.bf16.mxu0 0
        %1416 = vmatpush1.bf16.msra.mxu0 0
        %1417 = vmatprep.subr.bf16.mxu0 0
        %1418 = vmatpush1.bf16.msra.mxu0 0
        %1419 = vmatprep.subr.bf16.mxu0 0
        %1420 = vmatpush1.bf16.msra.mxu0 0
        %1421 = vmatprep.subr.bf16.mxu0 0
        %1422 = vmatpush1.bf16.msra.mxu0 0
        %1423 = vmatprep.subr.bf16.mxu0 0
        %1424 = vmatpush1.bf16.msra.mxu0 0
        %1425 = vmatprep.subr.bf16.mxu0 0
        %1426 = vmatpush1.bf16.msra.mxu0 0
        %1427 = vmatprep.subr.bf16.mxu0 0
        %1428 = vmatpush1.bf16.msra.mxu0 0
        %1429 = vmatprep.subr.bf16.mxu0 0
        %1430 = vmatpush1.bf16.msra.mxu0 %v1413
        %1431 = vmatprep.subr.bf16.mxu0 0
        %1432 = vmatpush2.bf16.msra.mxu0 0
        %1433 = vmatprep.subr.bf16.mxu0 0
        %1434 = vmatpush2.bf16.msra.mxu0 0
        %1435 = vmatprep.subr.bf16.mxu0 0
        %1436 = vmatpush2.bf16.msra.mxu0 0
        %1437 = vmatprep.subr.bf16.mxu0 0
        %1438 = vmatpush2.bf16.msra.mxu0 0
        %1439 = vmatprep.subr.bf16.mxu0 0
        %1440 = vmatpush2.bf16.msra.mxu0 0
        %1441 = vmatprep.subr.bf16.mxu0 0
        %1442 = vmatpush2.bf16.msra.mxu0 0
        %1443 = vmatprep.subr.bf16.mxu0 0
        %1444 = vmatpush2.bf16.msra.mxu0 0
        %1445 = vmatprep.subr.bf16.mxu0 0
        %1446 = vmatpush2.bf16.msra.mxu0 0
        %1447 = vmatprep.mubr.bf16.mxu0 0
        %1448 = vmatmul.mubr.bf16.gmra.mxu0 %v460
        %v1449 = vpop.f32.mrf.mxu0
        %v1450 = vadd.f32 0.0, %v1449
        %v1451 = vpop.f32.mrf.mxu0
        %v1452 = vpop.f32.mrf.mxu0
        %v1453 = vadd.f32 0.0, %v1452
        %v1454 = vpop.f32.mrf.mxu0
        %1455 = vmatprep.mubr.bf16.mxu0 0
        %1456 = vmatmul.mubr.bf16.gmra.mxu0 %v463
        %v1457 = vpop.f32.mrf.mxu0
        %v1458 = vadd.f32 0.0, %v1457
        %v1459 = vpop.f32.mrf.mxu0
        %v1460 = vpop.f32.mrf.mxu0
        %v1461 = vadd.f32 0.0, %v1460
        %v1462 = vpop.f32.mrf.mxu0
        %1463 = vmatprep.mubr.bf16.mxu0 0
        %1464 = vmatmul.mubr.bf16.gmra.mxu0 %v466
        %v1465 = vpop.f32.mrf.mxu0
        %v1466 = vadd.f32 0.0, %v1465
        %v1467 = vpop.f32.mrf.mxu0
        %v1468 = vpop.f32.mrf.mxu0
        %v1469 = vadd.f32 0.0, %v1468
        %v1470 = vpop.f32.mrf.mxu0
        %1471 = vmatprep.mubr.bf16.mxu0 0
        %1472 = vmatmul.mubr.bf16.gmra.mxu0 %v469
        %v1473 = vpop.f32.mrf.mxu0
        %v1474 = vadd.f32 0.0, %v1473
        %v1475 = vpop.f32.mrf.mxu0
        %v1476 = vpop.f32.mrf.mxu0
        %v1477 = vadd.f32 0.0, %v1476
        %v1478 = vpop.f32.mrf.mxu0
        %1479 = vmatprep.mubr.bf16.mxu0 0
        %1480 = vmatmul.mubr.bf16.gmra.mxu0 %v472
        %v1481 = vpop.f32.mrf.mxu0
        %v1482 = vadd.f32 0.0, %v1481
        %v1483 = vpop.f32.mrf.mxu0
        %v1484 = vpop.f32.mrf.mxu0
        %v1485 = vadd.f32 0.0, %v1484
        %v1486 = vpop.f32.mrf.mxu0
        %1487 = vmatprep.mubr.bf16.mxu0 0
        %1488 = vmatmul.mubr.bf16.gmra.mxu0 %v475
        %v1489 = vpop.f32.mrf.mxu0
        %v1490 = vadd.f32 0.0, %v1489
        %v1491 = vpop.f32.mrf.mxu0
        %v1492 = vpop.f32.mrf.mxu0
        %v1493 = vadd.f32 0.0, %v1492
        %v1494 = vpop.f32.mrf.mxu0
        %1495 = vmatprep.mubr.bf16.mxu0 0
        %1496 = vmatmul.mubr.bf16.gmra.mxu0 %v478
        %v1497 = vpop.f32.mrf.mxu0
        %v1498 = vadd.f32 0.0, %v1497
        %v1499 = vpop.f32.mrf.mxu0
        %v1500 = vpop.f32.mrf.mxu0
        %v1501 = vadd.f32 0.0, %v1500
        %v1502 = vpop.f32.mrf.mxu0
        %1503 = vmatprep.mubr.bf16.mxu0 0
        %1504 = vmatmul.mubr.bf16.gmra.mxu0 %v481
        %v1505 = vpop.f32.mrf.mxu0
        %v1506 = vadd.f32 0.0, %v1505
        %v1507 = vpop.f32.mrf.mxu0
        %v1508 = vpop.f32.mrf.mxu0
        %v1509 = vadd.f32 0.0, %v1508
        %v1510 = vpop.f32.mrf.mxu0
        %1511 = vdwg.mxu0
        %v1512 = vpack.c.bf16 %v1453, %v1450
        %v1513 = vpack.c.bf16 %v1461, %v1458
        %v1514 = vpack.c.bf16 %v1469, %v1466
        %v1515 = vpack.c.bf16 %v1477, %v1474
        %v1516 = vpack.c.bf16 %v1485, %v1482
        %v1517 = vpack.c.bf16 %v1493, %v1490
        %v1518 = vpack.c.bf16 %v1501, %v1498
        %v1519 = vpack.c.bf16 %v1509, %v1506
        %v1528 = vunpack.c.l.b16 %v1512
        %v1529 = vunpack.c.h.b16 %v1512
        %v1530 = vunpack.c.l.b16 %v1513
        %v1531 = vunpack.c.h.b16 %v1513
        %v1532 = vunpack.c.l.b16 %v1514
        %v1533 = vunpack.c.h.b16 %v1514
        %v1534 = vunpack.c.l.b16 %v1515
        %v1535 = vunpack.c.h.b16 %v1515
        %v1536 = vunpack.c.l.b16 %v1516
        %v1537 = vunpack.c.h.b16 %v1516
        %v1538 = vunpack.c.l.b16 %v1517
        %v1539 = vunpack.c.h.b16 %v1517
        %v1540 = vunpack.c.l.b16 %v1518
        %v1541 = vunpack.c.h.b16 %v1518
        %v1542 = vunpack.c.l.b16 %v1519
        %v1543 = vunpack.c.h.b16 %v1519
        %v1544 = vpack.c.b16 %v1528, %v1528
        %v1545 = vpack.c.b16 %v1529, %v1529
        %v1546 = vpack.c.b16 %v1530, %v1530
        %v1547 = vpack.c.b16 %v1531, %v1531
        %v1548 = vpack.c.b16 %v1532, %v1532
        %v1549 = vpack.c.b16 %v1533, %v1533
        %v1550 = vpack.c.b16 %v1534, %v1534
        %v1551 = vpack.c.b16 %v1535, %v1535
        %v1552 = vpack.c.b16 %v1536, %v1536
        %v1553 = vpack.c.b16 %v1537, %v1537
        %v1554 = vpack.c.b16 %v1538, %v1538
        %v1555 = vpack.c.b16 %v1539, %v1539
        %v1556 = vpack.c.b16 %v1540, %v1540
        %v1557 = vpack.c.b16 %v1541, %v1541
        %v1558 = vpack.c.b16 %v1542, %v1542
        %v1559 = vpack.c.b16 %v1543, %v1543
        %v1561 = vsel %vm458, %v350, 0
        %v1564 = vsel %vm483, %v1544, 0
        %1566 = vmatprep.subr.bf16.mxu0 0
        %1567 = vmatpush1.bf16.msra.mxu0 0
        %1568 = vmatprep.subr.bf16.mxu0 0
        %1569 = vmatpush1.bf16.msra.mxu0 0
        %1570 = vmatprep.subr.bf16.mxu0 0
        %1571 = vmatpush1.bf16.msra.mxu0 0
        %1572 = vmatprep.subr.bf16.mxu0 0
        %1573 = vmatpush1.bf16.msra.mxu0 0
        %1574 = vmatprep.subr.bf16.mxu0 0
        %1575 = vmatpush1.bf16.msra.mxu0 0
        %1576 = vmatprep.subr.bf16.mxu0 0
        %1577 = vmatpush1.bf16.msra.mxu0 0
        %1578 = vmatprep.subr.bf16.mxu0 0
        %1579 = vmatpush1.bf16.msra.mxu0 0
        %1580 = vmatprep.subr.bf16.mxu0 0
        %1581 = vmatpush1.bf16.msra.mxu0 %v1564
        %1582 = vmatprep.subr.bf16.mxu0 0
        %1583 = vmatpush2.bf16.msra.mxu0 0
        %1584 = vmatprep.subr.bf16.mxu0 0
        %1585 = vmatpush2.bf16.msra.mxu0 0
        %1586 = vmatprep.subr.bf16.mxu0 0
        %1587 = vmatpush2.bf16.msra.mxu0 0
        %1588 = vmatprep.subr.bf16.mxu0 0
        %1589 = vmatpush2.bf16.msra.mxu0 0
        %1590 = vmatprep.subr.bf16.mxu0 0
        %1591 = vmatpush2.bf16.msra.mxu0 0
        %1592 = vmatprep.subr.bf16.mxu0 0
        %1593 = vmatpush2.bf16.msra.mxu0 0
        %1594 = vmatprep.subr.bf16.mxu0 0
        %1595 = vmatpush2.bf16.msra.mxu0 0
        %1596 = vmatprep.subr.bf16.mxu0 0
        %1597 = vmatpush2.bf16.msra.mxu0 0
        %1598 = vmatprep.mubr.bf16.mxu0 0
        %1599 = vmatmul.mubr.bf16.gmra.mxu0 %v1561
        %v1600 = vpop.f32.mrf.mxu0
        %v1601 = vadd.f32 0.0, %v1600
        %v1602 = vpop.f32.mrf.mxu0
        %v1603 = vpop.f32.mrf.mxu0
        %v1604 = vpop.f32.mrf.mxu0
        %1605 = vdwg.mxu0
        %v1607 = vsel %vm458, %v351, 0
        %v1610 = vsel %vm483, %v1545, 0
        %1612 = vmatprep.subr.bf16.mxu0 0
        %1613 = vmatpush1.bf16.msra.mxu0 0
        %1614 = vmatprep.subr.bf16.mxu0 0
        %1615 = vmatpush1.bf16.msra.mxu0 0
        %1616 = vmatprep.subr.bf16.mxu0 0
        %1617 = vmatpush1.bf16.msra.mxu0 0
        %1618 = vmatprep.subr.bf16.mxu0 0
        %1619 = vmatpush1.bf16.msra.mxu0 0
        %1620 = vmatprep.subr.bf16.mxu0 0
        %1621 = vmatpush1.bf16.msra.mxu0 0
        %1622 = vmatprep.subr.bf16.mxu0 0
        %1623 = vmatpush1.bf16.msra.mxu0 0
        %1624 = vmatprep.subr.bf16.mxu0 0
        %1625 = vmatpush1.bf16.msra.mxu0 0
        %1626 = vmatprep.subr.bf16.mxu0 0
        %1627 = vmatpush1.bf16.msra.mxu0 %v1610
        %1628 = vmatprep.subr.bf16.mxu0 0
        %1629 = vmatpush2.bf16.msra.mxu0 0
        %1630 = vmatprep.subr.bf16.mxu0 0
        %1631 = vmatpush2.bf16.msra.mxu0 0
        %1632 = vmatprep.subr.bf16.mxu0 0
        %1633 = vmatpush2.bf16.msra.mxu0 0
        %1634 = vmatprep.subr.bf16.mxu0 0
        %1635 = vmatpush2.bf16.msra.mxu0 0
        %1636 = vmatprep.subr.bf16.mxu0 0
        %1637 = vmatpush2.bf16.msra.mxu0 0
        %1638 = vmatprep.subr.bf16.mxu0 0
        %1639 = vmatpush2.bf16.msra.mxu0 0
        %1640 = vmatprep.subr.bf16.mxu0 0
        %1641 = vmatpush2.bf16.msra.mxu0 0
        %1642 = vmatprep.subr.bf16.mxu0 0
        %1643 = vmatpush2.bf16.msra.mxu0 0
        %1644 = vmatprep.mubr.bf16.mxu0 0
        %1645 = vmatmul.mubr.bf16.gmra.mxu0 %v1607
        %v1646 = vpop.f32.mrf.mxu0
        %v1647 = vadd.f32 0.0, %v1646
        %v1648 = vpop.f32.mrf.mxu0
        %v1649 = vpop.f32.mrf.mxu0
        %v1650 = vpop.f32.mrf.mxu0
        %1651 = vdwg.mxu0
        %v1653 = vsel %vm458, %v352, 0
        %v1656 = vsel %vm483, %v1546, 0
        %1658 = vmatprep.subr.bf16.mxu0 0
        %1659 = vmatpush1.bf16.msra.mxu0 0
        %1660 = vmatprep.subr.bf16.mxu0 0
        %1661 = vmatpush1.bf16.msra.mxu0 0
        %1662 = vmatprep.subr.bf16.mxu0 0
        %1663 = vmatpush1.bf16.msra.mxu0 0
        %1664 = vmatprep.subr.bf16.mxu0 0
        %1665 = vmatpush1.bf16.msra.mxu0 0
        %1666 = vmatprep.subr.bf16.mxu0 0
        %1667 = vmatpush1.bf16.msra.mxu0 0
        %1668 = vmatprep.subr.bf16.mxu0 0
        %1669 = vmatpush1.bf16.msra.mxu0 0
        %1670 = vmatprep.subr.bf16.mxu0 0
        %1671 = vmatpush1.bf16.msra.mxu0 0
        %1672 = vmatprep.subr.bf16.mxu0 0
        %1673 = vmatpush1.bf16.msra.mxu0 %v1656
        %1674 = vmatprep.subr.bf16.mxu0 0
        %1675 = vmatpush2.bf16.msra.mxu0 0
        %1676 = vmatprep.subr.bf16.mxu0 0
        %1677 = vmatpush2.bf16.msra.mxu0 0
        %1678 = vmatprep.subr.bf16.mxu0 0
        %1679 = vmatpush2.bf16.msra.mxu0 0
        %1680 = vmatprep.subr.bf16.mxu0 0
        %1681 = vmatpush2.bf16.msra.mxu0 0
        %1682 = vmatprep.subr.bf16.mxu0 0
        %1683 = vmatpush2.bf16.msra.mxu0 0
        %1684 = vmatprep.subr.bf16.mxu0 0
        %1685 = vmatpush2.bf16.msra.mxu0 0
        %1686 = vmatprep.subr.bf16.mxu0 0
        %1687 = vmatpush2.bf16.msra.mxu0 0
        %1688 = vmatprep.subr.bf16.mxu0 0
        %1689 = vmatpush2.bf16.msra.mxu0 0
        %1690 = vmatprep.mubr.bf16.mxu0 0
        %1691 = vmatmul.mubr.bf16.gmra.mxu0 %v1653
        %v1692 = vpop.f32.mrf.mxu0
        %v1693 = vadd.f32 0.0, %v1692
        %v1694 = vpop.f32.mrf.mxu0
        %v1695 = vpop.f32.mrf.mxu0
        %v1696 = vpop.f32.mrf.mxu0
        %1697 = vdwg.mxu0
        %v1699 = vsel %vm458, %v353, 0
        %v1702 = vsel %vm483, %v1547, 0
        %1704 = vmatprep.subr.bf16.mxu0 0
        %1705 = vmatpush1.bf16.msra.mxu0 0
        %1706 = vmatprep.subr.bf16.mxu0 0
        %1707 = vmatpush1.bf16.msra.mxu0 0
        %1708 = vmatprep.subr.bf16.mxu0 0
        %1709 = vmatpush1.bf16.msra.mxu0 0
        %1710 = vmatprep.subr.bf16.mxu0 0
        %1711 = vmatpush1.bf16.msra.mxu0 0
        %1712 = vmatprep.subr.bf16.mxu0 0
        %1713 = vmatpush1.bf16.msra.mxu0 0
        %1714 = vmatprep.subr.bf16.mxu0 0
        %1715 = vmatpush1.bf16.msra.mxu0 0
        %1716 = vmatprep.subr.bf16.mxu0 0
        %1717 = vmatpush1.bf16.msra.mxu0 0
        %1718 = vmatprep.subr.bf16.mxu0 0
        %1719 = vmatpush1.bf16.msra.mxu0 %v1702
        %1720 = vmatprep.subr.bf16.mxu0 0
        %1721 = vmatpush2.bf16.msra.mxu0 0
        %1722 = vmatprep.subr.bf16.mxu0 0
        %1723 = vmatpush2.bf16.msra.mxu0 0
        %1724 = vmatprep.subr.bf16.mxu0 0
        %1725 = vmatpush2.bf16.msra.mxu0 0
        %1726 = vmatprep.subr.bf16.mxu0 0
        %1727 = vmatpush2.bf16.msra.mxu0 0
        %1728 = vmatprep.subr.bf16.mxu0 0
        %1729 = vmatpush2.bf16.msra.mxu0 0
        %1730 = vmatprep.subr.bf16.mxu0 0
        %1731 = vmatpush2.bf16.msra.mxu0 0
        %1732 = vmatprep.subr.bf16.mxu0 0
        %1733 = vmatpush2.bf16.msra.mxu0 0
        %1734 = vmatprep.subr.bf16.mxu0 0
        %1735 = vmatpush2.bf16.msra.mxu0 0
        %1736 = vmatprep.mubr.bf16.mxu0 0
        %1737 = vmatmul.mubr.bf16.gmra.mxu0 %v1699
        %v1738 = vpop.f32.mrf.mxu0
        %v1739 = vadd.f32 0.0, %v1738
        %v1740 = vpop.f32.mrf.mxu0
        %v1741 = vpop.f32.mrf.mxu0
        %v1742 = vpop.f32.mrf.mxu0
        %1743 = vdwg.mxu0
        %v1745 = vsel %vm458, %v354, 0
        %v1748 = vsel %vm483, %v1548, 0
        %1750 = vmatprep.subr.bf16.mxu0 0
        %1751 = vmatpush1.bf16.msra.mxu0 0
        %1752 = vmatprep.subr.bf16.mxu0 0
        %1753 = vmatpush1.bf16.msra.mxu0 0
        %1754 = vmatprep.subr.bf16.mxu0 0
        %1755 = vmatpush1.bf16.msra.mxu0 0
        %1756 = vmatprep.subr.bf16.mxu0 0
        %1757 = vmatpush1.bf16.msra.mxu0 0
        %1758 = vmatprep.subr.bf16.mxu0 0
        %1759 = vmatpush1.bf16.msra.mxu0 0
        %1760 = vmatprep.subr.bf16.mxu0 0
        %1761 = vmatpush1.bf16.msra.mxu0 0
        %1762 = vmatprep.subr.bf16.mxu0 0
        %1763 = vmatpush1.bf16.msra.mxu0 0
        %1764 = vmatprep.subr.bf16.mxu0 0
        %1765 = vmatpush1.bf16.msra.mxu0 %v1748
        %1766 = vmatprep.subr.bf16.mxu0 0
        %1767 = vmatpush2.bf16.msra.mxu0 0
        %1768 = vmatprep.subr.bf16.mxu0 0
        %1769 = vmatpush2.bf16.msra.mxu0 0
        %1770 = vmatprep.subr.bf16.mxu0 0
        %1771 = vmatpush2.bf16.msra.mxu0 0
        %1772 = vmatprep.subr.bf16.mxu0 0
        %1773 = vmatpush2.bf16.msra.mxu0 0
        %1774 = vmatprep.subr.bf16.mxu0 0
        %1775 = vmatpush2.bf16.msra.mxu0 0
        %1776 = vmatprep.subr.bf16.mxu0 0
        %1777 = vmatpush2.bf16.msra.mxu0 0
        %1778 = vmatprep.subr.bf16.mxu0 0
        %1779 = vmatpush2.bf16.msra.mxu0 0
        %1780 = vmatprep.subr.bf16.mxu0 0
        %1781 = vmatpush2.bf16.msra.mxu0 0
        %1782 = vmatprep.mubr.bf16.mxu0 0
        %1783 = vmatmul.mubr.bf16.gmra.mxu0 %v1745
        %v1784 = vpop.f32.mrf.mxu0
        %v1785 = vadd.f32 0.0, %v1784
        %v1786 = vpop.f32.mrf.mxu0
        %v1787 = vpop.f32.mrf.mxu0
        %v1788 = vpop.f32.mrf.mxu0
        %1789 = vdwg.mxu0
        %v1791 = vsel %vm458, %v355, 0
        %v1794 = vsel %vm483, %v1549, 0
        %1796 = vmatprep.subr.bf16.mxu0 0
        %1797 = vmatpush1.bf16.msra.mxu0 0
        %1798 = vmatprep.subr.bf16.mxu0 0
        %1799 = vmatpush1.bf16.msra.mxu0 0
        %1800 = vmatprep.subr.bf16.mxu0 0
        %1801 = vmatpush1.bf16.msra.mxu0 0
        %1802 = vmatprep.subr.bf16.mxu0 0
        %1803 = vmatpush1.bf16.msra.mxu0 0
        %1804 = vmatprep.subr.bf16.mxu0 0
        %1805 = vmatpush1.bf16.msra.mxu0 0
        %1806 = vmatprep.subr.bf16.mxu0 0
        %1807 = vmatpush1.bf16.msra.mxu0 0
        %1808 = vmatprep.subr.bf16.mxu0 0
        %1809 = vmatpush1.bf16.msra.mxu0 0
        %1810 = vmatprep.subr.bf16.mxu0 0
        %1811 = vmatpush1.bf16.msra.mxu0 %v1794
        %1812 = vmatprep.subr.bf16.mxu0 0
        %1813 = vmatpush2.bf16.msra.mxu0 0
        %1814 = vmatprep.subr.bf16.mxu0 0
        %1815 = vmatpush2.bf16.msra.mxu0 0
        %1816 = vmatprep.subr.bf16.mxu0 0
        %1817 = vmatpush2.bf16.msra.mxu0 0
        %1818 = vmatprep.subr.bf16.mxu0 0
        %1819 = vmatpush2.bf16.msra.mxu0 0
        %1820 = vmatprep.subr.bf16.mxu0 0
        %1821 = vmatpush2.bf16.msra.mxu0 0
        %1822 = vmatprep.subr.bf16.mxu0 0
        %1823 = vmatpush2.bf16.msra.mxu0 0
        %1824 = vmatprep.subr.bf16.mxu0 0
        %1825 = vmatpush2.bf16.msra.mxu0 0
        %1826 = vmatprep.subr.bf16.mxu0 0
        %1827 = vmatpush2.bf16.msra.mxu0 0
        %1828 = vmatprep.mubr.bf16.mxu0 0
        %1829 = vmatmul.mubr.bf16.gmra.mxu0 %v1791
        %v1830 = vpop.f32.mrf.mxu0
        %v1831 = vadd.f32 0.0, %v1830
        %v1832 = vpop.f32.mrf.mxu0
        %v1833 = vpop.f32.mrf.mxu0
        %v1834 = vpop.f32.mrf.mxu0
        %1835 = vdwg.mxu0
        %v1837 = vsel %vm458, %v356, 0
        %v1840 = vsel %vm483, %v1550, 0
        %1842 = vmatprep.subr.bf16.mxu0 0
        %1843 = vmatpush1.bf16.msra.mxu0 0
        %1844 = vmatprep.subr.bf16.mxu0 0
        %1845 = vmatpush1.bf16.msra.mxu0 0
        %1846 = vmatprep.subr.bf16.mxu0 0
        %1847 = vmatpush1.bf16.msra.mxu0 0
        %1848 = vmatprep.subr.bf16.mxu0 0
        %1849 = vmatpush1.bf16.msra.mxu0 0
        %1850 = vmatprep.subr.bf16.mxu0 0
        %1851 = vmatpush1.bf16.msra.mxu0 0
        %1852 = vmatprep.subr.bf16.mxu0 0
        %1853 = vmatpush1.bf16.msra.mxu0 0
        %1854 = vmatprep.subr.bf16.mxu0 0
        %1855 = vmatpush1.bf16.msra.mxu0 0
        %1856 = vmatprep.subr.bf16.mxu0 0
        %1857 = vmatpush1.bf16.msra.mxu0 %v1840
        %1858 = vmatprep.subr.bf16.mxu0 0
        %1859 = vmatpush2.bf16.msra.mxu0 0
        %1860 = vmatprep.subr.bf16.mxu0 0
        %1861 = vmatpush2.bf16.msra.mxu0 0
        %1862 = vmatprep.subr.bf16.mxu0 0
        %1863 = vmatpush2.bf16.msra.mxu0 0
        %1864 = vmatprep.subr.bf16.mxu0 0
        %1865 = vmatpush2.bf16.msra.mxu0 0
        %1866 = vmatprep.subr.bf16.mxu0 0
        %1867 = vmatpush2.bf16.msra.mxu0 0
        %1868 = vmatprep.subr.bf16.mxu0 0
        %1869 = vmatpush2.bf16.msra.mxu0 0
        %1870 = vmatprep.subr.bf16.mxu0 0
        %1871 = vmatpush2.bf16.msra.mxu0 0
        %1872 = vmatprep.subr.bf16.mxu0 0
        %1873 = vmatpush2.bf16.msra.mxu0 0
        %1874 = vmatprep.mubr.bf16.mxu0 0
        %1875 = vmatmul.mubr.bf16.gmra.mxu0 %v1837
        %v1876 = vpop.f32.mrf.mxu0
        %v1877 = vadd.f32 0.0, %v1876
        %v1878 = vpop.f32.mrf.mxu0
        %v1879 = vpop.f32.mrf.mxu0
        %v1880 = vpop.f32.mrf.mxu0
        %1881 = vdwg.mxu0
        %v1883 = vsel %vm458, %v357, 0
        %v1886 = vsel %vm483, %v1551, 0
        %1888 = vmatprep.subr.bf16.mxu0 0
        %1889 = vmatpush1.bf16.msra.mxu0 0
        %1890 = vmatprep.subr.bf16.mxu0 0
        %1891 = vmatpush1.bf16.msra.mxu0 0
        %1892 = vmatprep.subr.bf16.mxu0 0
        %1893 = vmatpush1.bf16.msra.mxu0 0
        %1894 = vmatprep.subr.bf16.mxu0 0
        %1895 = vmatpush1.bf16.msra.mxu0 0
        %1896 = vmatprep.subr.bf16.mxu0 0
        %1897 = vmatpush1.bf16.msra.mxu0 0
        %1898 = vmatprep.subr.bf16.mxu0 0
        %1899 = vmatpush1.bf16.msra.mxu0 0
        %1900 = vmatprep.subr.bf16.mxu0 0
        %1901 = vmatpush1.bf16.msra.mxu0 0
        %1902 = vmatprep.subr.bf16.mxu0 0
        %1903 = vmatpush1.bf16.msra.mxu0 %v1886
        %1904 = vmatprep.subr.bf16.mxu0 0
        %1905 = vmatpush2.bf16.msra.mxu0 0
        %1906 = vmatprep.subr.bf16.mxu0 0
        %1907 = vmatpush2.bf16.msra.mxu0 0
        %1908 = vmatprep.subr.bf16.mxu0 0
        %1909 = vmatpush2.bf16.msra.mxu0 0
        %1910 = vmatprep.subr.bf16.mxu0 0
        %1911 = vmatpush2.bf16.msra.mxu0 0
        %1912 = vmatprep.subr.bf16.mxu0 0
        %1913 = vmatpush2.bf16.msra.mxu0 0
        %1914 = vmatprep.subr.bf16.mxu0 0
        %1915 = vmatpush2.bf16.msra.mxu0 0
        %1916 = vmatprep.subr.bf16.mxu0 0
        %1917 = vmatpush2.bf16.msra.mxu0 0
        %1918 = vmatprep.subr.bf16.mxu0 0
        %1919 = vmatpush2.bf16.msra.mxu0 0
        %1920 = vmatprep.mubr.bf16.mxu0 0
        %1921 = vmatmul.mubr.bf16.gmra.mxu0 %v1883
        %v1922 = vpop.f32.mrf.mxu0
        %v1923 = vadd.f32 0.0, %v1922
        %v1924 = vpop.f32.mrf.mxu0
        %v1925 = vpop.f32.mrf.mxu0
        %v1926 = vpop.f32.mrf.mxu0
        %1927 = vdwg.mxu0
        %v1929 = vsel %vm458, %v358, 0
        %v1932 = vsel %vm483, %v1552, 0
        %1934 = vmatprep.subr.bf16.mxu0 0
        %1935 = vmatpush1.bf16.msra.mxu0 0
        %1936 = vmatprep.subr.bf16.mxu0 0
        %1937 = vmatpush1.bf16.msra.mxu0 0
        %1938 = vmatprep.subr.bf16.mxu0 0
        %1939 = vmatpush1.bf16.msra.mxu0 0
        %1940 = vmatprep.subr.bf16.mxu0 0
        %1941 = vmatpush1.bf16.msra.mxu0 0
        %1942 = vmatprep.subr.bf16.mxu0 0
        %1943 = vmatpush1.bf16.msra.mxu0 0
        %1944 = vmatprep.subr.bf16.mxu0 0
        %1945 = vmatpush1.bf16.msra.mxu0 0
        %1946 = vmatprep.subr.bf16.mxu0 0
        %1947 = vmatpush1.bf16.msra.mxu0 0
        %1948 = vmatprep.subr.bf16.mxu0 0
        %1949 = vmatpush1.bf16.msra.mxu0 %v1932
        %1950 = vmatprep.subr.bf16.mxu0 0
        %1951 = vmatpush2.bf16.msra.mxu0 0
        %1952 = vmatprep.subr.bf16.mxu0 0
        %1953 = vmatpush2.bf16.msra.mxu0 0
        %1954 = vmatprep.subr.bf16.mxu0 0
        %1955 = vmatpush2.bf16.msra.mxu0 0
        %1956 = vmatprep.subr.bf16.mxu0 0
        %1957 = vmatpush2.bf16.msra.mxu0 0
        %1958 = vmatprep.subr.bf16.mxu0 0
        %1959 = vmatpush2.bf16.msra.mxu0 0
        %1960 = vmatprep.subr.bf16.mxu0 0
        %1961 = vmatpush2.bf16.msra.mxu0 0
        %1962 = vmatprep.subr.bf16.mxu0 0
        %1963 = vmatpush2.bf16.msra.mxu0 0
        %1964 = vmatprep.subr.bf16.mxu0 0
        %1965 = vmatpush2.bf16.msra.mxu0 0
        %1966 = vmatprep.mubr.bf16.mxu0 0
        %1967 = vmatmul.mubr.bf16.gmra.mxu0 %v1929
        %v1968 = vpop.f32.mrf.mxu0
        %v1969 = vadd.f32 0.0, %v1968
        %v1970 = vpop.f32.mrf.mxu0
        %v1971 = vpop.f32.mrf.mxu0
        %v1972 = vpop.f32.mrf.mxu0
        %1973 = vdwg.mxu0
        %v1975 = vsel %vm458, %v359, 0
        %v1978 = vsel %vm483, %v1553, 0
        %1980 = vmatprep.subr.bf16.mxu0 0
        %1981 = vmatpush1.bf16.msra.mxu0 0
        %1982 = vmatprep.subr.bf16.mxu0 0
        %1983 = vmatpush1.bf16.msra.mxu0 0
        %1984 = vmatprep.subr.bf16.mxu0 0
        %1985 = vmatpush1.bf16.msra.mxu0 0
        %1986 = vmatprep.subr.bf16.mxu0 0
        %1987 = vmatpush1.bf16.msra.mxu0 0
        %1988 = vmatprep.subr.bf16.mxu0 0
        %1989 = vmatpush1.bf16.msra.mxu0 0
        %1990 = vmatprep.subr.bf16.mxu0 0
        %1991 = vmatpush1.bf16.msra.mxu0 0
        %1992 = vmatprep.subr.bf16.mxu0 0
        %1993 = vmatpush1.bf16.msra.mxu0 0
        %1994 = vmatprep.subr.bf16.mxu0 0
        %1995 = vmatpush1.bf16.msra.mxu0 %v1978
        %1996 = vmatprep.subr.bf16.mxu0 0
        %1997 = vmatpush2.bf16.msra.mxu0 0
        %1998 = vmatprep.subr.bf16.mxu0 0
        %1999 = vmatpush2.bf16.msra.mxu0 0
        %2000 = vmatprep.subr.bf16.mxu0 0
        %2001 = vmatpush2.bf16.msra.mxu0 0
        %2002 = vmatprep.subr.bf16.mxu0 0
        %2003 = vmatpush2.bf16.msra.mxu0 0
        %2004 = vmatprep.subr.bf16.mxu0 0
        %2005 = vmatpush2.bf16.msra.mxu0 0
        %2006 = vmatprep.subr.bf16.mxu0 0
        %2007 = vmatpush2.bf16.msra.mxu0 0
        %2008 = vmatprep.subr.bf16.mxu0 0
        %2009 = vmatpush2.bf16.msra.mxu0 0
        %2010 = vmatprep.subr.bf16.mxu0 0
        %2011 = vmatpush2.bf16.msra.mxu0 0
        %2012 = vmatprep.mubr.bf16.mxu0 0
        %2013 = vmatmul.mubr.bf16.gmra.mxu0 %v1975
        %v2014 = vpop.f32.mrf.mxu0
        %v2015 = vadd.f32 0.0, %v2014
        %v2016 = vpop.f32.mrf.mxu0
        %v2017 = vpop.f32.mrf.mxu0
        %v2018 = vpop.f32.mrf.mxu0
        %2019 = vdwg.mxu0
        %v2021 = vsel %vm458, %v360, 0
        %v2024 = vsel %vm483, %v1554, 0
        %2026 = vmatprep.subr.bf16.mxu0 0
        %2027 = vmatpush1.bf16.msra.mxu0 0
        %2028 = vmatprep.subr.bf16.mxu0 0
        %2029 = vmatpush1.bf16.msra.mxu0 0
        %2030 = vmatprep.subr.bf16.mxu0 0
        %2031 = vmatpush1.bf16.msra.mxu0 0
        %2032 = vmatprep.subr.bf16.mxu0 0
        %2033 = vmatpush1.bf16.msra.mxu0 0
        %2034 = vmatprep.subr.bf16.mxu0 0
        %2035 = vmatpush1.bf16.msra.mxu0 0
        %2036 = vmatprep.subr.bf16.mxu0 0
        %2037 = vmatpush1.bf16.msra.mxu0 0
        %2038 = vmatprep.subr.bf16.mxu0 0
        %2039 = vmatpush1.bf16.msra.mxu0 0
        %2040 = vmatprep.subr.bf16.mxu0 0
        %2041 = vmatpush1.bf16.msra.mxu0 %v2024
        %2042 = vmatprep.subr.bf16.mxu0 0
        %2043 = vmatpush2.bf16.msra.mxu0 0
        %2044 = vmatprep.subr.bf16.mxu0 0
        %2045 = vmatpush2.bf16.msra.mxu0 0
        %2046 = vmatprep.subr.bf16.mxu0 0
        %2047 = vmatpush2.bf16.msra.mxu0 0
        %2048 = vmatprep.subr.bf16.mxu0 0
        %2049 = vmatpush2.bf16.msra.mxu0 0
        %2050 = vmatprep.subr.bf16.mxu0 0
        %2051 = vmatpush2.bf16.msra.mxu0 0
        %2052 = vmatprep.subr.bf16.mxu0 0
        %2053 = vmatpush2.bf16.msra.mxu0 0
        %2054 = vmatprep.subr.bf16.mxu0 0
        %2055 = vmatpush2.bf16.msra.mxu0 0
        %2056 = vmatprep.subr.bf16.mxu0 0
        %2057 = vmatpush2.bf16.msra.mxu0 0
        %2058 = vmatprep.mubr.bf16.mxu0 0
        %2059 = vmatmul.mubr.bf16.gmra.mxu0 %v2021
        %v2060 = vpop.f32.mrf.mxu0
        %v2061 = vadd.f32 0.0, %v2060
        %v2062 = vpop.f32.mrf.mxu0
        %v2063 = vpop.f32.mrf.mxu0
        %v2064 = vpop.f32.mrf.mxu0
        %2065 = vdwg.mxu0
        %v2067 = vsel %vm458, %v361, 0
        %v2070 = vsel %vm483, %v1555, 0
        %2072 = vmatprep.subr.bf16.mxu0 0
        %2073 = vmatpush1.bf16.msra.mxu0 0
        %2074 = vmatprep.subr.bf16.mxu0 0
        %2075 = vmatpush1.bf16.msra.mxu0 0
        %2076 = vmatprep.subr.bf16.mxu0 0
        %2077 = vmatpush1.bf16.msra.mxu0 0
        %2078 = vmatprep.subr.bf16.mxu0 0
        %2079 = vmatpush1.bf16.msra.mxu0 0
        %2080 = vmatprep.subr.bf16.mxu0 0
        %2081 = vmatpush1.bf16.msra.mxu0 0
        %2082 = vmatprep.subr.bf16.mxu0 0
        %2083 = vmatpush1.bf16.msra.mxu0 0
        %2084 = vmatprep.subr.bf16.mxu0 0
        %2085 = vmatpush1.bf16.msra.mxu0 0
        %2086 = vmatprep.subr.bf16.mxu0 0
        %2087 = vmatpush1.bf16.msra.mxu0 %v2070
        %2088 = vmatprep.subr.bf16.mxu0 0
        %2089 = vmatpush2.bf16.msra.mxu0 0
        %2090 = vmatprep.subr.bf16.mxu0 0
        %2091 = vmatpush2.bf16.msra.mxu0 0
        %2092 = vmatprep.subr.bf16.mxu0 0
        %2093 = vmatpush2.bf16.msra.mxu0 0
        %2094 = vmatprep.subr.bf16.mxu0 0
        %2095 = vmatpush2.bf16.msra.mxu0 0
        %2096 = vmatprep.subr.bf16.mxu0 0
        %2097 = vmatpush2.bf16.msra.mxu0 0
        %2098 = vmatprep.subr.bf16.mxu0 0
        %2099 = vmatpush2.bf16.msra.mxu0 0
        %2100 = vmatprep.subr.bf16.mxu0 0
        %2101 = vmatpush2.bf16.msra.mxu0 0
        %2102 = vmatprep.subr.bf16.mxu0 0
        %2103 = vmatpush2.bf16.msra.mxu0 0
        %2104 = vmatprep.mubr.bf16.mxu0 0
        %2105 = vmatmul.mubr.bf16.gmra.mxu0 %v2067
        %v2106 = vpop.f32.mrf.mxu0
        %v2107 = vadd.f32 0.0, %v2106
        %v2108 = vpop.f32.mrf.mxu0
        %v2109 = vpop.f32.mrf.mxu0
        %v2110 = vpop.f32.mrf.mxu0
        %2111 = vdwg.mxu0
        %v2113 = vsel %vm458, %v362, 0
        %v2116 = vsel %vm483, %v1556, 0
        %2118 = vmatprep.subr.bf16.mxu0 0
        %2119 = vmatpush1.bf16.msra.mxu0 0
        %2120 = vmatprep.subr.bf16.mxu0 0
        %2121 = vmatpush1.bf16.msra.mxu0 0
        %2122 = vmatprep.subr.bf16.mxu0 0
        %2123 = vmatpush1.bf16.msra.mxu0 0
        %2124 = vmatprep.subr.bf16.mxu0 0
        %2125 = vmatpush1.bf16.msra.mxu0 0
        %2126 = vmatprep.subr.bf16.mxu0 0
        %2127 = vmatpush1.bf16.msra.mxu0 0
        %2128 = vmatprep.subr.bf16.mxu0 0
        %2129 = vmatpush1.bf16.msra.mxu0 0
        %2130 = vmatprep.subr.bf16.mxu0 0
        %2131 = vmatpush1.bf16.msra.mxu0 0
        %2132 = vmatprep.subr.bf16.mxu0 0
        %2133 = vmatpush1.bf16.msra.mxu0 %v2116
        %2134 = vmatprep.subr.bf16.mxu0 0
        %2135 = vmatpush2.bf16.msra.mxu0 0
        %2136 = vmatprep.subr.bf16.mxu0 0
        %2137 = vmatpush2.bf16.msra.mxu0 0
        %2138 = vmatprep.subr.bf16.mxu0 0
        %2139 = vmatpush2.bf16.msra.mxu0 0
        %2140 = vmatprep.subr.bf16.mxu0 0
        %2141 = vmatpush2.bf16.msra.mxu0 0
        %2142 = vmatprep.subr.bf16.mxu0 0
        %2143 = vmatpush2.bf16.msra.mxu0 0
        %2144 = vmatprep.subr.bf16.mxu0 0
        %2145 = vmatpush2.bf16.msra.mxu0 0
        %2146 = vmatprep.subr.bf16.mxu0 0
        %2147 = vmatpush2.bf16.msra.mxu0 0
        %2148 = vmatprep.subr.bf16.mxu0 0
        %2149 = vmatpush2.bf16.msra.mxu0 0
        %2150 = vmatprep.mubr.bf16.mxu0 0
        %2151 = vmatmul.mubr.bf16.gmra.mxu0 %v2113
        %v2152 = vpop.f32.mrf.mxu0
        %v2153 = vadd.f32 0.0, %v2152
        %v2154 = vpop.f32.mrf.mxu0
        %v2155 = vpop.f32.mrf.mxu0
        %v2156 = vpop.f32.mrf.mxu0
        %2157 = vdwg.mxu0
        %v2159 = vsel %vm458, %v363, 0
        %v2162 = vsel %vm483, %v1557, 0
        %2164 = vmatprep.subr.bf16.mxu0 0
        %2165 = vmatpush1.bf16.msra.mxu0 0
        %2166 = vmatprep.subr.bf16.mxu0 0
        %2167 = vmatpush1.bf16.msra.mxu0 0
        %2168 = vmatprep.subr.bf16.mxu0 0
        %2169 = vmatpush1.bf16.msra.mxu0 0
        %2170 = vmatprep.subr.bf16.mxu0 0
        %2171 = vmatpush1.bf16.msra.mxu0 0
        %2172 = vmatprep.subr.bf16.mxu0 0
        %2173 = vmatpush1.bf16.msra.mxu0 0
        %2174 = vmatprep.subr.bf16.mxu0 0
        %2175 = vmatpush1.bf16.msra.mxu0 0
        %2176 = vmatprep.subr.bf16.mxu0 0
        %2177 = vmatpush1.bf16.msra.mxu0 0
        %2178 = vmatprep.subr.bf16.mxu0 0
        %2179 = vmatpush1.bf16.msra.mxu0 %v2162
        %2180 = vmatprep.subr.bf16.mxu0 0
        %2181 = vmatpush2.bf16.msra.mxu0 0
        %2182 = vmatprep.subr.bf16.mxu0 0
        %2183 = vmatpush2.bf16.msra.mxu0 0
        %2184 = vmatprep.subr.bf16.mxu0 0
        %2185 = vmatpush2.bf16.msra.mxu0 0
        %2186 = vmatprep.subr.bf16.mxu0 0
        %2187 = vmatpush2.bf16.msra.mxu0 0
        %2188 = vmatprep.subr.bf16.mxu0 0
        %2189 = vmatpush2.bf16.msra.mxu0 0
        %2190 = vmatprep.subr.bf16.mxu0 0
        %2191 = vmatpush2.bf16.msra.mxu0 0
        %2192 = vmatprep.subr.bf16.mxu0 0
        %2193 = vmatpush2.bf16.msra.mxu0 0
        %2194 = vmatprep.subr.bf16.mxu0 0
        %2195 = vmatpush2.bf16.msra.mxu0 0
        %2196 = vmatprep.mubr.bf16.mxu0 0
        %2197 = vmatmul.mubr.bf16.gmra.mxu0 %v2159
        %v2198 = vpop.f32.mrf.mxu0
        %v2199 = vadd.f32 0.0, %v2198
        %v2200 = vpop.f32.mrf.mxu0
        %v2201 = vpop.f32.mrf.mxu0
        %v2202 = vpop.f32.mrf.mxu0
        %2203 = vdwg.mxu0
        %v2205 = vsel %vm458, %v364, 0
        %v2208 = vsel %vm483, %v1558, 0
        %2210 = vmatprep.subr.bf16.mxu0 0
        %2211 = vmatpush1.bf16.msra.mxu0 0
        %2212 = vmatprep.subr.bf16.mxu0 0
        %2213 = vmatpush1.bf16.msra.mxu0 0
        %2214 = vmatprep.subr.bf16.mxu0 0
        %2215 = vmatpush1.bf16.msra.mxu0 0
        %2216 = vmatprep.subr.bf16.mxu0 0
        %2217 = vmatpush1.bf16.msra.mxu0 0
        %2218 = vmatprep.subr.bf16.mxu0 0
        %2219 = vmatpush1.bf16.msra.mxu0 0
        %2220 = vmatprep.subr.bf16.mxu0 0
        %2221 = vmatpush1.bf16.msra.mxu0 0
        %2222 = vmatprep.subr.bf16.mxu0 0
        %2223 = vmatpush1.bf16.msra.mxu0 0
        %2224 = vmatprep.subr.bf16.mxu0 0
        %2225 = vmatpush1.bf16.msra.mxu0 %v2208
        %2226 = vmatprep.subr.bf16.mxu0 0
        %2227 = vmatpush2.bf16.msra.mxu0 0
        %2228 = vmatprep.subr.bf16.mxu0 0
        %2229 = vmatpush2.bf16.msra.mxu0 0
        %2230 = vmatprep.subr.bf16.mxu0 0
        %2231 = vmatpush2.bf16.msra.mxu0 0
        %2232 = vmatprep.subr.bf16.mxu0 0
        %2233 = vmatpush2.bf16.msra.mxu0 0
        %2234 = vmatprep.subr.bf16.mxu0 0
        %2235 = vmatpush2.bf16.msra.mxu0 0
        %2236 = vmatprep.subr.bf16.mxu0 0
        %2237 = vmatpush2.bf16.msra.mxu0 0
        %2238 = vmatprep.subr.bf16.mxu0 0
        %2239 = vmatpush2.bf16.msra.mxu0 0
        %2240 = vmatprep.subr.bf16.mxu0 0
        %2241 = vmatpush2.bf16.msra.mxu0 0
        %2242 = vmatprep.mubr.bf16.mxu0 0
        %2243 = vmatmul.mubr.bf16.gmra.mxu0 %v2205
        %v2244 = vpop.f32.mrf.mxu0
        %v2245 = vadd.f32 0.0, %v2244
        %v2246 = vpop.f32.mrf.mxu0
        %v2247 = vpop.f32.mrf.mxu0
        %v2248 = vpop.f32.mrf.mxu0
        %2249 = vdwg.mxu0
        %v2251 = vsel %vm458, %v365, 0
        %v2254 = vsel %vm483, %v1559, 0
        %2256 = vmatprep.subr.bf16.mxu0 0
        %2257 = vmatpush1.bf16.msra.mxu0 0
        %2258 = vmatprep.subr.bf16.mxu0 0
        %2259 = vmatpush1.bf16.msra.mxu0 0
        %2260 = vmatprep.subr.bf16.mxu0 0
        %2261 = vmatpush1.bf16.msra.mxu0 0
        %2262 = vmatprep.subr.bf16.mxu0 0
        %2263 = vmatpush1.bf16.msra.mxu0 0
        %2264 = vmatprep.subr.bf16.mxu0 0
        %2265 = vmatpush1.bf16.msra.mxu0 0
        %2266 = vmatprep.subr.bf16.mxu0 0
        %2267 = vmatpush1.bf16.msra.mxu0 0
        %2268 = vmatprep.subr.bf16.mxu0 0
        %2269 = vmatpush1.bf16.msra.mxu0 0
        %2270 = vmatprep.subr.bf16.mxu0 0
        %2271 = vmatpush1.bf16.msra.mxu0 %v2254
        %2272 = vmatprep.subr.bf16.mxu0 0
        %2273 = vmatpush2.bf16.msra.mxu0 0
        %2274 = vmatprep.subr.bf16.mxu0 0
        %2275 = vmatpush2.bf16.msra.mxu0 0
        %2276 = vmatprep.subr.bf16.mxu0 0
        %2277 = vmatpush2.bf16.msra.mxu0 0
        %2278 = vmatprep.subr.bf16.mxu0 0
        %2279 = vmatpush2.bf16.msra.mxu0 0
        %2280 = vmatprep.subr.bf16.mxu0 0
        %2281 = vmatpush2.bf16.msra.mxu0 0
        %2282 = vmatprep.subr.bf16.mxu0 0
        %2283 = vmatpush2.bf16.msra.mxu0 0
        %2284 = vmatprep.subr.bf16.mxu0 0
        %2285 = vmatpush2.bf16.msra.mxu0 0
        %2286 = vmatprep.subr.bf16.mxu0 0
        %2287 = vmatpush2.bf16.msra.mxu0 0
        %2288 = vmatprep.mubr.bf16.mxu0 0
        %2289 = vmatmul.mubr.bf16.gmra.mxu0 %v2251
        %v2290 = vpop.f32.mrf.mxu0
        %v2291 = vadd.f32 0.0, %v2290
        %v2292 = vpop.f32.mrf.mxu0
        %v2293 = vpop.f32.mrf.mxu0
        %v2294 = vpop.f32.mrf.mxu0
        %2295 = vdwg.mxu0
        %v2296 = vlaneseq
        %v2297 = vshrl.u32 %v2296, 7
        %v2298 = vsub.s32 1, %v2297
        %v2299 = vrot.slane %v417, %v2298
        %v2300 = vadd.f32 %v1601, %v2299
        %v2301 = vadd.f32 %v1647, %v2299
        %v2302 = vadd.f32 %v1693, %v2299
        %v2303 = vadd.f32 %v1739, %v2299
        %v2304 = vadd.f32 %v1785, %v2299
        %v2305 = vadd.f32 %v1831, %v2299
        %v2306 = vadd.f32 %v1877, %v2299
        %v2307 = vadd.f32 %v1923, %v2299
        %v2308 = vadd.f32 %v1969, %v2299
        %v2309 = vadd.f32 %v2015, %v2299
        %v2310 = vadd.f32 %v2061, %v2299
        %v2311 = vadd.f32 %v2107, %v2299
        %v2312 = vadd.f32 %v2153, %v2299
        %v2313 = vadd.f32 %v2199, %v2299
        %v2314 = vadd.f32 %v2245, %v2299
        %v2315 = vadd.f32 %v2291, %v2299
        %v2316 = vmax.f32 %v2300, 0.0
        %v2317 = vmax.f32 %v2301, 0.0
        %v2318 = vmax.f32 %v2302, 0.0
        %v2319 = vmax.f32 %v2303, 0.0
        %v2320 = vmax.f32 %v2304, 0.0
        %v2321 = vmax.f32 %v2305, 0.0
        %v2322 = vmax.f32 %v2306, 0.0
        %v2323 = vmax.f32 %v2307, 0.0
        %v2324 = vmax.f32 %v2308, 0.0
        %v2325 = vmax.f32 %v2309, 0.0
        %v2326 = vmax.f32 %v2310, 0.0
        %v2327 = vmax.f32 %v2311, 0.0
        %v2328 = vmax.f32 %v2312, 0.0
        %v2329 = vmax.f32 %v2313, 0.0
        %v2330 = vmax.f32 %v2314, 0.0
        %v2331 = vmax.f32 %v2315, 0.0
        %v2332 = vpack.c.bf16 %v2317, %v2316
        %v2333 = vpack.c.bf16 %v2319, %v2318
        %v2334 = vpack.c.bf16 %v2321, %v2320
        %v2335 = vpack.c.bf16 %v2323, %v2322
        %v2336 = vpack.c.bf16 %v2325, %v2324
        %v2337 = vpack.c.bf16 %v2327, %v2326
        %v2338 = vpack.c.bf16 %v2329, %v2328
        %v2339 = vpack.c.bf16 %v2331, %v2330
        %v2356 = vunpack.c.l.b16 %v368
        %v2357 = vunpack.c.l.b16 %v369
        %v2358 = vunpack.c.l.b16 %v370
        %v2359 = vunpack.c.l.b16 %v371
        %v2360 = vunpack.c.l.b16 %v372
        %v2361 = vunpack.c.l.b16 %v373
        %v2362 = vunpack.c.l.b16 %v374
        %v2363 = vunpack.c.l.b16 %v375
        %v2364 = vunpack.c.l.b16 %v376
        %v2365 = vunpack.c.l.b16 %v377
        %v2366 = vunpack.c.l.b16 %v378
        %v2367 = vunpack.c.l.b16 %v379
        %v2368 = vunpack.c.l.b16 %v380
        %v2369 = vunpack.c.l.b16 %v381
        %v2370 = vunpack.c.l.b16 %v382
        %v2371 = vunpack.c.l.b16 %v383
        %v2372 = vpack.c.b16 %v2357, %v2356
        %v2373 = vpack.c.b16 %v2359, %v2358
        %v2374 = vpack.c.b16 %v2361, %v2360
        %v2375 = vpack.c.b16 %v2363, %v2362
        %v2376 = vpack.c.b16 %v2365, %v2364
        %v2377 = vpack.c.b16 %v2367, %v2366
        %v2378 = vpack.c.b16 %v2369, %v2368
        %v2379 = vpack.c.b16 %v2371, %v2370
        %2388 = vmatprep.subr.bf16.mxu0 0
        %2389 = vmatpush1.bf16.msra.mxu0 %v2379
        %2390 = vmatprep.subr.bf16.mxu0 0
        %2391 = vmatpush1.bf16.msra.mxu0 %v2378
        %2392 = vmatprep.subr.bf16.mxu0 0
        %2393 = vmatpush1.bf16.msra.mxu0 %v2377
        %2394 = vmatprep.subr.bf16.mxu0 0
        %2395 = vmatpush1.bf16.msra.mxu0 %v2376
        %2396 = vmatprep.subr.bf16.mxu0 0
        %2397 = vmatpush1.bf16.msra.mxu0 %v2375
        %2398 = vmatprep.subr.bf16.mxu0 0
        %2399 = vmatpush1.bf16.msra.mxu0 %v2374
        %2400 = vmatprep.subr.bf16.mxu0 0
        %2401 = vmatpush1.bf16.msra.mxu0 %v2373
        %2402 = vmatprep.subr.bf16.mxu0 0
        %2403 = vmatpush1.bf16.msra.mxu0 %v2372
        %2404 = vmatprep.subr.bf16.mxu0 0
        %2405 = vmatpush2.bf16.msra.mxu0 0
        %2406 = vmatprep.subr.bf16.mxu0 0
        %2407 = vmatpush2.bf16.msra.mxu0 0
        %2408 = vmatprep.subr.bf16.mxu0 0
        %2409 = vmatpush2.bf16.msra.mxu0 0
        %2410 = vmatprep.subr.bf16.mxu0 0
        %2411 = vmatpush2.bf16.msra.mxu0 0
        %2412 = vmatprep.subr.bf16.mxu0 0
        %2413 = vmatpush2.bf16.msra.mxu0 0
        %2414 = vmatprep.subr.bf16.mxu0 0
        %2415 = vmatpush2.bf16.msra.mxu0 0
        %2416 = vmatprep.subr.bf16.mxu0 0
        %2417 = vmatpush2.bf16.msra.mxu0 0
        %2418 = vmatprep.subr.bf16.mxu0 0
        %2419 = vmatpush2.bf16.msra.mxu0 0
        %2420 = vmatprep.mubr.bf16.mxu0 0
        %2421 = vmatmul.mubr.bf16.gmra.mxu0 %v1404
        %v2422 = vpop.f32.mrf.mxu0
        %v2423 = vadd.f32 0.0, %v2422
        %v2424 = vpop.f32.mrf.mxu0
        %v2425 = vpop.f32.mrf.mxu0
        %v2426 = vadd.f32 0.0, %v2425
        %v2427 = vpop.f32.mrf.mxu0
        %2428 = vmatprep.mubr.bf16.mxu0 0
        %2429 = vmatmul.mubr.bf16.gmra.mxu0 %v1405
        %v2430 = vpop.f32.mrf.mxu0
        %v2431 = vadd.f32 0.0, %v2430
        %v2432 = vpop.f32.mrf.mxu0
        %v2433 = vpop.f32.mrf.mxu0
        %v2434 = vadd.f32 0.0, %v2433
        %v2435 = vpop.f32.mrf.mxu0
        %2436 = vmatprep.mubr.bf16.mxu0 0
        %2437 = vmatmul.mubr.bf16.gmra.mxu0 %v1406
        %v2438 = vpop.f32.mrf.mxu0
        %v2439 = vadd.f32 0.0, %v2438
        %v2440 = vpop.f32.mrf.mxu0
        %v2441 = vpop.f32.mrf.mxu0
        %v2442 = vadd.f32 0.0, %v2441
        %v2443 = vpop.f32.mrf.mxu0
        %2444 = vmatprep.mubr.bf16.mxu0 0
        %2445 = vmatmul.mubr.bf16.gmra.mxu0 %v1407
        %v2446 = vpop.f32.mrf.mxu0
        %v2447 = vadd.f32 0.0, %v2446
        %v2448 = vpop.f32.mrf.mxu0
        %v2449 = vpop.f32.mrf.mxu0
        %v2450 = vadd.f32 0.0, %v2449
        %v2451 = vpop.f32.mrf.mxu0
        %2452 = vmatprep.mubr.bf16.mxu0 0
        %2453 = vmatmul.mubr.bf16.gmra.mxu0 %v1408
        %v2454 = vpop.f32.mrf.mxu0
        %v2455 = vadd.f32 0.0, %v2454
        %v2456 = vpop.f32.mrf.mxu0
        %v2457 = vpop.f32.mrf.mxu0
        %v2458 = vadd.f32 0.0, %v2457
        %v2459 = vpop.f32.mrf.mxu0
        %2460 = vmatprep.mubr.bf16.mxu0 0
        %2461 = vmatmul.mubr.bf16.gmra.mxu0 %v1409
        %v2462 = vpop.f32.mrf.mxu0
        %v2463 = vadd.f32 0.0, %v2462
        %v2464 = vpop.f32.mrf.mxu0
        %v2465 = vpop.f32.mrf.mxu0
        %v2466 = vadd.f32 0.0, %v2465
        %v2467 = vpop.f32.mrf.mxu0
        %2468 = vmatprep.mubr.bf16.mxu0 0
        %2469 = vmatmul.mubr.bf16.gmra.mxu0 %v1410
        %v2470 = vpop.f32.mrf.mxu0
        %v2471 = vadd.f32 0.0, %v2470
        %v2472 = vpop.f32.mrf.mxu0
        %v2473 = vpop.f32.mrf.mxu0
        %v2474 = vadd.f32 0.0, %v2473
        %v2475 = vpop.f32.mrf.mxu0
        %2476 = vmatprep.mubr.bf16.mxu0 0
        %2477 = vmatmul.mubr.bf16.gmra.mxu0 %v1411
        %v2478 = vpop.f32.mrf.mxu0
        %v2479 = vadd.f32 0.0, %v2478
        %v2480 = vpop.f32.mrf.mxu0
        %v2481 = vpop.f32.mrf.mxu0
        %v2482 = vadd.f32 0.0, %v2481
        %v2483 = vpop.f32.mrf.mxu0
        %2484 = vdwg.mxu0
        %v2485 = vpack.c.bf16 %v2426, %v2423
        %v2486 = vpack.c.bf16 %v2434, %v2431
        %v2487 = vpack.c.bf16 %v2442, %v2439
        %v2488 = vpack.c.bf16 %v2450, %v2447
        %v2489 = vpack.c.bf16 %v2458, %v2455
        %v2490 = vpack.c.bf16 %v2466, %v2463
        %v2491 = vpack.c.bf16 %v2474, %v2471
        %v2492 = vpack.c.bf16 %v2482, %v2479
        %v2501 = vunpack.c.l.b16 %v2485
        %v2502 = vunpack.c.h.b16 %v2485
        %v2503 = vunpack.c.l.b16 %v2486
        %v2504 = vunpack.c.h.b16 %v2486
        %v2505 = vunpack.c.l.b16 %v2487
        %v2506 = vunpack.c.h.b16 %v2487
        %v2507 = vunpack.c.l.b16 %v2488
        %v2508 = vunpack.c.h.b16 %v2488
        %v2509 = vunpack.c.l.b16 %v2489
        %v2510 = vunpack.c.h.b16 %v2489
        %v2511 = vunpack.c.l.b16 %v2490
        %v2512 = vunpack.c.h.b16 %v2490
        %v2513 = vunpack.c.l.b16 %v2491
        %v2514 = vunpack.c.h.b16 %v2491
        %v2515 = vunpack.c.l.b16 %v2492
        %v2516 = vunpack.c.h.b16 %v2492
        %v2517 = vpack.c.b16 %v2501, %v2501
        %v2518 = vpack.c.b16 %v2502, %v2502
        %v2519 = vpack.c.b16 %v2503, %v2503
        %v2520 = vpack.c.b16 %v2504, %v2504
        %v2521 = vpack.c.b16 %v2505, %v2505
        %v2522 = vpack.c.b16 %v2506, %v2506
        %v2523 = vpack.c.b16 %v2507, %v2507
        %v2524 = vpack.c.b16 %v2508, %v2508
        %v2525 = vpack.c.b16 %v2509, %v2509
        %v2526 = vpack.c.b16 %v2510, %v2510
        %v2527 = vpack.c.b16 %v2511, %v2511
        %v2528 = vpack.c.b16 %v2512, %v2512
        %v2529 = vpack.c.b16 %v2513, %v2513
        %v2530 = vpack.c.b16 %v2514, %v2514
        %v2531 = vpack.c.b16 %v2515, %v2515
        %v2532 = vpack.c.b16 %v2516, %v2516
        %v2534 = vsel %vm483, %v2517, 0
        %2536 = vmatprep.subr.bf16.mxu0 0
        %2537 = vmatpush1.bf16.msra.mxu0 0
        %2538 = vmatprep.subr.bf16.mxu0 0
        %2539 = vmatpush1.bf16.msra.mxu0 0
        %2540 = vmatprep.subr.bf16.mxu0 0
        %2541 = vmatpush1.bf16.msra.mxu0 0
        %2542 = vmatprep.subr.bf16.mxu0 0
        %2543 = vmatpush1.bf16.msra.mxu0 0
        %2544 = vmatprep.subr.bf16.mxu0 0
        %2545 = vmatpush1.bf16.msra.mxu0 0
        %2546 = vmatprep.subr.bf16.mxu0 0
        %2547 = vmatpush1.bf16.msra.mxu0 0
        %2548 = vmatprep.subr.bf16.mxu0 0
        %2549 = vmatpush1.bf16.msra.mxu0 0
        %2550 = vmatprep.subr.bf16.mxu0 0
        %2551 = vmatpush1.bf16.msra.mxu0 %v2534
        %2552 = vmatprep.subr.bf16.mxu0 0
        %2553 = vmatpush2.bf16.msra.mxu0 0
        %2554 = vmatprep.subr.bf16.mxu0 0
        %2555 = vmatpush2.bf16.msra.mxu0 0
        %2556 = vmatprep.subr.bf16.mxu0 0
        %2557 = vmatpush2.bf16.msra.mxu0 0
        %2558 = vmatprep.subr.bf16.mxu0 0
        %2559 = vmatpush2.bf16.msra.mxu0 0
        %2560 = vmatprep.subr.bf16.mxu0 0
        %2561 = vmatpush2.bf16.msra.mxu0 0
        %2562 = vmatprep.subr.bf16.mxu0 0
        %2563 = vmatpush2.bf16.msra.mxu0 0
        %2564 = vmatprep.subr.bf16.mxu0 0
        %2565 = vmatpush2.bf16.msra.mxu0 0
        %2566 = vmatprep.subr.bf16.mxu0 0
        %2567 = vmatpush2.bf16.msra.mxu0 0
        %2568 = vmatprep.mubr.bf16.mxu0 0
        %2569 = vmatmul.mubr.bf16.gmra.mxu0 %v633
        %v2570 = vpop.f32.mrf.mxu0
        %v2571 = vadd.f32 0.0, %v2570
        %v2572 = vpop.f32.mrf.mxu0
        %v2573 = vpop.f32.mrf.mxu0
        %v2574 = vpop.f32.mrf.mxu0
        %2575 = vdwg.mxu0
        %v2577 = vsel %vm483, %v2518, 0
        %2579 = vmatprep.subr.bf16.mxu0 0
        %2580 = vmatpush1.bf16.msra.mxu0 0
        %2581 = vmatprep.subr.bf16.mxu0 0
        %2582 = vmatpush1.bf16.msra.mxu0 0
        %2583 = vmatprep.subr.bf16.mxu0 0
        %2584 = vmatpush1.bf16.msra.mxu0 0
        %2585 = vmatprep.subr.bf16.mxu0 0
        %2586 = vmatpush1.bf16.msra.mxu0 0
        %2587 = vmatprep.subr.bf16.mxu0 0
        %2588 = vmatpush1.bf16.msra.mxu0 0
        %2589 = vmatprep.subr.bf16.mxu0 0
        %2590 = vmatpush1.bf16.msra.mxu0 0
        %2591 = vmatprep.subr.bf16.mxu0 0
        %2592 = vmatpush1.bf16.msra.mxu0 0
        %2593 = vmatprep.subr.bf16.mxu0 0
        %2594 = vmatpush1.bf16.msra.mxu0 %v2577
        %2595 = vmatprep.subr.bf16.mxu0 0
        %2596 = vmatpush2.bf16.msra.mxu0 0
        %2597 = vmatprep.subr.bf16.mxu0 0
        %2598 = vmatpush2.bf16.msra.mxu0 0
        %2599 = vmatprep.subr.bf16.mxu0 0
        %2600 = vmatpush2.bf16.msra.mxu0 0
        %2601 = vmatprep.subr.bf16.mxu0 0
        %2602 = vmatpush2.bf16.msra.mxu0 0
        %2603 = vmatprep.subr.bf16.mxu0 0
        %2604 = vmatpush2.bf16.msra.mxu0 0
        %2605 = vmatprep.subr.bf16.mxu0 0
        %2606 = vmatpush2.bf16.msra.mxu0 0
        %2607 = vmatprep.subr.bf16.mxu0 0
        %2608 = vmatpush2.bf16.msra.mxu0 0
        %2609 = vmatprep.subr.bf16.mxu0 0
        %2610 = vmatpush2.bf16.msra.mxu0 0
        %2611 = vmatprep.mubr.bf16.mxu0 0
        %2612 = vmatmul.mubr.bf16.gmra.mxu0 %v679
        %v2613 = vpop.f32.mrf.mxu0
        %v2614 = vadd.f32 0.0, %v2613
        %v2615 = vpop.f32.mrf.mxu0
        %v2616 = vpop.f32.mrf.mxu0
        %v2617 = vpop.f32.mrf.mxu0
        %2618 = vdwg.mxu0
        %v2620 = vsel %vm483, %v2519, 0
        %2622 = vmatprep.subr.bf16.mxu0 0
        %2623 = vmatpush1.bf16.msra.mxu0 0
        %2624 = vmatprep.subr.bf16.mxu0 0
        %2625 = vmatpush1.bf16.msra.mxu0 0
        %2626 = vmatprep.subr.bf16.mxu0 0
        %2627 = vmatpush1.bf16.msra.mxu0 0
        %2628 = vmatprep.subr.bf16.mxu0 0
        %2629 = vmatpush1.bf16.msra.mxu0 0
        %2630 = vmatprep.subr.bf16.mxu0 0
        %2631 = vmatpush1.bf16.msra.mxu0 0
        %2632 = vmatprep.subr.bf16.mxu0 0
        %2633 = vmatpush1.bf16.msra.mxu0 0
        %2634 = vmatprep.subr.bf16.mxu0 0
        %2635 = vmatpush1.bf16.msra.mxu0 0
        %2636 = vmatprep.subr.bf16.mxu0 0
        %2637 = vmatpush1.bf16.msra.mxu0 %v2620
        %2638 = vmatprep.subr.bf16.mxu0 0
        %2639 = vmatpush2.bf16.msra.mxu0 0
        %2640 = vmatprep.subr.bf16.mxu0 0
        %2641 = vmatpush2.bf16.msra.mxu0 0
        %2642 = vmatprep.subr.bf16.mxu0 0
        %2643 = vmatpush2.bf16.msra.mxu0 0
        %2644 = vmatprep.subr.bf16.mxu0 0
        %2645 = vmatpush2.bf16.msra.mxu0 0
        %2646 = vmatprep.subr.bf16.mxu0 0
        %2647 = vmatpush2.bf16.msra.mxu0 0
        %2648 = vmatprep.subr.bf16.mxu0 0
        %2649 = vmatpush2.bf16.msra.mxu0 0
        %2650 = vmatprep.subr.bf16.mxu0 0
        %2651 = vmatpush2.bf16.msra.mxu0 0
        %2652 = vmatprep.subr.bf16.mxu0 0
        %2653 = vmatpush2.bf16.msra.mxu0 0
        %2654 = vmatprep.mubr.bf16.mxu0 0
        %2655 = vmatmul.mubr.bf16.gmra.mxu0 %v725
        %v2656 = vpop.f32.mrf.mxu0
        %v2657 = vadd.f32 0.0, %v2656
        %v2658 = vpop.f32.mrf.mxu0
        %v2659 = vpop.f32.mrf.mxu0
        %v2660 = vpop.f32.mrf.mxu0
        %2661 = vdwg.mxu0
        %v2663 = vsel %vm483, %v2520, 0
        %2665 = vmatprep.subr.bf16.mxu0 0
        %2666 = vmatpush1.bf16.msra.mxu0 0
        %2667 = vmatprep.subr.bf16.mxu0 0
        %2668 = vmatpush1.bf16.msra.mxu0 0
        %2669 = vmatprep.subr.bf16.mxu0 0
        %2670 = vmatpush1.bf16.msra.mxu0 0
        %2671 = vmatprep.subr.bf16.mxu0 0
        %2672 = vmatpush1.bf16.msra.mxu0 0
        %2673 = vmatprep.subr.bf16.mxu0 0
        %2674 = vmatpush1.bf16.msra.mxu0 0
        %2675 = vmatprep.subr.bf16.mxu0 0
        %2676 = vmatpush1.bf16.msra.mxu0 0
        %2677 = vmatprep.subr.bf16.mxu0 0
        %2678 = vmatpush1.bf16.msra.mxu0 0
        %2679 = vmatprep.subr.bf16.mxu0 0
        %2680 = vmatpush1.bf16.msra.mxu0 %v2663
        %2681 = vmatprep.subr.bf16.mxu0 0
        %2682 = vmatpush2.bf16.msra.mxu0 0
        %2683 = vmatprep.subr.bf16.mxu0 0
        %2684 = vmatpush2.bf16.msra.mxu0 0
        %2685 = vmatprep.subr.bf16.mxu0 0
        %2686 = vmatpush2.bf16.msra.mxu0 0
        %2687 = vmatprep.subr.bf16.mxu0 0
        %2688 = vmatpush2.bf16.msra.mxu0 0
        %2689 = vmatprep.subr.bf16.mxu0 0
        %2690 = vmatpush2.bf16.msra.mxu0 0
        %2691 = vmatprep.subr.bf16.mxu0 0
        %2692 = vmatpush2.bf16.msra.mxu0 0
        %2693 = vmatprep.subr.bf16.mxu0 0
        %2694 = vmatpush2.bf16.msra.mxu0 0
        %2695 = vmatprep.subr.bf16.mxu0 0
        %2696 = vmatpush2.bf16.msra.mxu0 0
        %2697 = vmatprep.mubr.bf16.mxu0 0
        %2698 = vmatmul.mubr.bf16.gmra.mxu0 %v771
        %v2699 = vpop.f32.mrf.mxu0
        %v2700 = vadd.f32 0.0, %v2699
        %v2701 = vpop.f32.mrf.mxu0
        %v2702 = vpop.f32.mrf.mxu0
        %v2703 = vpop.f32.mrf.mxu0
        %2704 = vdwg.mxu0
        %v2706 = vsel %vm483, %v2521, 0
        %2708 = vmatprep.subr.bf16.mxu0 0
        %2709 = vmatpush1.bf16.msra.mxu0 0
        %2710 = vmatprep.subr.bf16.mxu0 0
        %2711 = vmatpush1.bf16.msra.mxu0 0
        %2712 = vmatprep.subr.bf16.mxu0 0
        %2713 = vmatpush1.bf16.msra.mxu0 0
        %2714 = vmatprep.subr.bf16.mxu0 0
        %2715 = vmatpush1.bf16.msra.mxu0 0
        %2716 = vmatprep.subr.bf16.mxu0 0
        %2717 = vmatpush1.bf16.msra.mxu0 0
        %2718 = vmatprep.subr.bf16.mxu0 0
        %2719 = vmatpush1.bf16.msra.mxu0 0
        %2720 = vmatprep.subr.bf16.mxu0 0
        %2721 = vmatpush1.bf16.msra.mxu0 0
        %2722 = vmatprep.subr.bf16.mxu0 0
        %2723 = vmatpush1.bf16.msra.mxu0 %v2706
        %2724 = vmatprep.subr.bf16.mxu0 0
        %2725 = vmatpush2.bf16.msra.mxu0 0
        %2726 = vmatprep.subr.bf16.mxu0 0
        %2727 = vmatpush2.bf16.msra.mxu0 0
        %2728 = vmatprep.subr.bf16.mxu0 0
        %2729 = vmatpush2.bf16.msra.mxu0 0
        %2730 = vmatprep.subr.bf16.mxu0 0
        %2731 = vmatpush2.bf16.msra.mxu0 0
        %2732 = vmatprep.subr.bf16.mxu0 0
        %2733 = vmatpush2.bf16.msra.mxu0 0
        %2734 = vmatprep.subr.bf16.mxu0 0
        %2735 = vmatpush2.bf16.msra.mxu0 0
        %2736 = vmatprep.subr.bf16.mxu0 0
        %2737 = vmatpush2.bf16.msra.mxu0 0
        %2738 = vmatprep.subr.bf16.mxu0 0
        %2739 = vmatpush2.bf16.msra.mxu0 0
        %2740 = vmatprep.mubr.bf16.mxu0 0
        %2741 = vmatmul.mubr.bf16.gmra.mxu0 %v817
        %v2742 = vpop.f32.mrf.mxu0
        %v2743 = vadd.f32 0.0, %v2742
        %v2744 = vpop.f32.mrf.mxu0
        %v2745 = vpop.f32.mrf.mxu0
        %v2746 = vpop.f32.mrf.mxu0
        %2747 = vdwg.mxu0
        %v2749 = vsel %vm483, %v2522, 0
        %2751 = vmatprep.subr.bf16.mxu0 0
        %2752 = vmatpush1.bf16.msra.mxu0 0
        %2753 = vmatprep.subr.bf16.mxu0 0
        %2754 = vmatpush1.bf16.msra.mxu0 0
        %2755 = vmatprep.subr.bf16.mxu0 0
        %2756 = vmatpush1.bf16.msra.mxu0 0
        %2757 = vmatprep.subr.bf16.mxu0 0
        %2758 = vmatpush1.bf16.msra.mxu0 0
        %2759 = vmatprep.subr.bf16.mxu0 0
        %2760 = vmatpush1.bf16.msra.mxu0 0
        %2761 = vmatprep.subr.bf16.mxu0 0
        %2762 = vmatpush1.bf16.msra.mxu0 0
        %2763 = vmatprep.subr.bf16.mxu0 0
        %2764 = vmatpush1.bf16.msra.mxu0 0
        %2765 = vmatprep.subr.bf16.mxu0 0
        %2766 = vmatpush1.bf16.msra.mxu0 %v2749
        %2767 = vmatprep.subr.bf16.mxu0 0
        %2768 = vmatpush2.bf16.msra.mxu0 0
        %2769 = vmatprep.subr.bf16.mxu0 0
        %2770 = vmatpush2.bf16.msra.mxu0 0
        %2771 = vmatprep.subr.bf16.mxu0 0
        %2772 = vmatpush2.bf16.msra.mxu0 0
        %2773 = vmatprep.subr.bf16.mxu0 0
        %2774 = vmatpush2.bf16.msra.mxu0 0
        %2775 = vmatprep.subr.bf16.mxu0 0
        %2776 = vmatpush2.bf16.msra.mxu0 0
        %2777 = vmatprep.subr.bf16.mxu0 0
        %2778 = vmatpush2.bf16.msra.mxu0 0
        %2779 = vmatprep.subr.bf16.mxu0 0
        %2780 = vmatpush2.bf16.msra.mxu0 0
        %2781 = vmatprep.subr.bf16.mxu0 0
        %2782 = vmatpush2.bf16.msra.mxu0 0
        %2783 = vmatprep.mubr.bf16.mxu0 0
        %2784 = vmatmul.mubr.bf16.gmra.mxu0 %v863
        %v2785 = vpop.f32.mrf.mxu0
        %v2786 = vadd.f32 0.0, %v2785
        %v2787 = vpop.f32.mrf.mxu0
        %v2788 = vpop.f32.mrf.mxu0
        %v2789 = vpop.f32.mrf.mxu0
        %2790 = vdwg.mxu0
        %v2792 = vsel %vm483, %v2523, 0
        %2794 = vmatprep.subr.bf16.mxu0 0
        %2795 = vmatpush1.bf16.msra.mxu0 0
        %2796 = vmatprep.subr.bf16.mxu0 0
        %2797 = vmatpush1.bf16.msra.mxu0 0
        %2798 = vmatprep.subr.bf16.mxu0 0
        %2799 = vmatpush1.bf16.msra.mxu0 0
        %2800 = vmatprep.subr.bf16.mxu0 0
        %2801 = vmatpush1.bf16.msra.mxu0 0
        %2802 = vmatprep.subr.bf16.mxu0 0
        %2803 = vmatpush1.bf16.msra.mxu0 0
        %2804 = vmatprep.subr.bf16.mxu0 0
        %2805 = vmatpush1.bf16.msra.mxu0 0
        %2806 = vmatprep.subr.bf16.mxu0 0
        %2807 = vmatpush1.bf16.msra.mxu0 0
        %2808 = vmatprep.subr.bf16.mxu0 0
        %2809 = vmatpush1.bf16.msra.mxu0 %v2792
        %2810 = vmatprep.subr.bf16.mxu0 0
        %2811 = vmatpush2.bf16.msra.mxu0 0
        %2812 = vmatprep.subr.bf16.mxu0 0
        %2813 = vmatpush2.bf16.msra.mxu0 0
        %2814 = vmatprep.subr.bf16.mxu0 0
        %2815 = vmatpush2.bf16.msra.mxu0 0
        %2816 = vmatprep.subr.bf16.mxu0 0
        %2817 = vmatpush2.bf16.msra.mxu0 0
        %2818 = vmatprep.subr.bf16.mxu0 0
        %2819 = vmatpush2.bf16.msra.mxu0 0
        %2820 = vmatprep.subr.bf16.mxu0 0
        %2821 = vmatpush2.bf16.msra.mxu0 0
        %2822 = vmatprep.subr.bf16.mxu0 0
        %2823 = vmatpush2.bf16.msra.mxu0 0
        %2824 = vmatprep.subr.bf16.mxu0 0
        %2825 = vmatpush2.bf16.msra.mxu0 0
        %2826 = vmatprep.mubr.bf16.mxu0 0
        %2827 = vmatmul.mubr.bf16.gmra.mxu0 %v909
        %v2828 = vpop.f32.mrf.mxu0
        %v2829 = vadd.f32 0.0, %v2828
        %v2830 = vpop.f32.mrf.mxu0
        %v2831 = vpop.f32.mrf.mxu0
        %v2832 = vpop.f32.mrf.mxu0
        %2833 = vdwg.mxu0
        %v2835 = vsel %vm483, %v2524, 0
        %2837 = vmatprep.subr.bf16.mxu0 0
        %2838 = vmatpush1.bf16.msra.mxu0 0
        %2839 = vmatprep.subr.bf16.mxu0 0
        %2840 = vmatpush1.bf16.msra.mxu0 0
        %2841 = vmatprep.subr.bf16.mxu0 0
        %2842 = vmatpush1.bf16.msra.mxu0 0
        %2843 = vmatprep.subr.bf16.mxu0 0
        %2844 = vmatpush1.bf16.msra.mxu0 0
        %2845 = vmatprep.subr.bf16.mxu0 0
        %2846 = vmatpush1.bf16.msra.mxu0 0
        %2847 = vmatprep.subr.bf16.mxu0 0
        %2848 = vmatpush1.bf16.msra.mxu0 0
        %2849 = vmatprep.subr.bf16.mxu0 0
        %2850 = vmatpush1.bf16.msra.mxu0 0
        %2851 = vmatprep.subr.bf16.mxu0 0
        %2852 = vmatpush1.bf16.msra.mxu0 %v2835
        %2853 = vmatprep.subr.bf16.mxu0 0
        %2854 = vmatpush2.bf16.msra.mxu0 0
        %2855 = vmatprep.subr.bf16.mxu0 0
        %2856 = vmatpush2.bf16.msra.mxu0 0
        %2857 = vmatprep.subr.bf16.mxu0 0
        %2858 = vmatpush2.bf16.msra.mxu0 0
        %2859 = vmatprep.subr.bf16.mxu0 0
        %2860 = vmatpush2.bf16.msra.mxu0 0
        %2861 = vmatprep.subr.bf16.mxu0 0
        %2862 = vmatpush2.bf16.msra.mxu0 0
        %2863 = vmatprep.subr.bf16.mxu0 0
        %2864 = vmatpush2.bf16.msra.mxu0 0
        %2865 = vmatprep.subr.bf16.mxu0 0
        %2866 = vmatpush2.bf16.msra.mxu0 0
        %2867 = vmatprep.subr.bf16.mxu0 0
        %2868 = vmatpush2.bf16.msra.mxu0 0
        %2869 = vmatprep.mubr.bf16.mxu0 0
        %2870 = vmatmul.mubr.bf16.gmra.mxu0 %v955
        %v2871 = vpop.f32.mrf.mxu0
        %v2872 = vadd.f32 0.0, %v2871
        %v2873 = vpop.f32.mrf.mxu0
        %v2874 = vpop.f32.mrf.mxu0
        %v2875 = vpop.f32.mrf.mxu0
        %2876 = vdwg.mxu0
        %v2878 = vsel %vm483, %v2525, 0
        %2880 = vmatprep.subr.bf16.mxu0 0
        %2881 = vmatpush1.bf16.msra.mxu0 0
        %2882 = vmatprep.subr.bf16.mxu0 0
        %2883 = vmatpush1.bf16.msra.mxu0 0
        %2884 = vmatprep.subr.bf16.mxu0 0
        %2885 = vmatpush1.bf16.msra.mxu0 0
        %2886 = vmatprep.subr.bf16.mxu0 0
        %2887 = vmatpush1.bf16.msra.mxu0 0
        %2888 = vmatprep.subr.bf16.mxu0 0
        %2889 = vmatpush1.bf16.msra.mxu0 0
        %2890 = vmatprep.subr.bf16.mxu0 0
        %2891 = vmatpush1.bf16.msra.mxu0 0
        %2892 = vmatprep.subr.bf16.mxu0 0
        %2893 = vmatpush1.bf16.msra.mxu0 0
        %2894 = vmatprep.subr.bf16.mxu0 0
        %2895 = vmatpush1.bf16.msra.mxu0 %v2878
        %2896 = vmatprep.subr.bf16.mxu0 0
        %2897 = vmatpush2.bf16.msra.mxu0 0
        %2898 = vmatprep.subr.bf16.mxu0 0
        %2899 = vmatpush2.bf16.msra.mxu0 0
        %2900 = vmatprep.subr.bf16.mxu0 0
        %2901 = vmatpush2.bf16.msra.mxu0 0
        %2902 = vmatprep.subr.bf16.mxu0 0
        %2903 = vmatpush2.bf16.msra.mxu0 0
        %2904 = vmatprep.subr.bf16.mxu0 0
        %2905 = vmatpush2.bf16.msra.mxu0 0
        %2906 = vmatprep.subr.bf16.mxu0 0
        %2907 = vmatpush2.bf16.msra.mxu0 0
        %2908 = vmatprep.subr.bf16.mxu0 0
        %2909 = vmatpush2.bf16.msra.mxu0 0
        %2910 = vmatprep.subr.bf16.mxu0 0
        %2911 = vmatpush2.bf16.msra.mxu0 0
        %2912 = vmatprep.mubr.bf16.mxu0 0
        %2913 = vmatmul.mubr.bf16.gmra.mxu0 %v1001
        %v2914 = vpop.f32.mrf.mxu0
        %v2915 = vadd.f32 0.0, %v2914
        %v2916 = vpop.f32.mrf.mxu0
        %v2917 = vpop.f32.mrf.mxu0
        %v2918 = vpop.f32.mrf.mxu0
        %2919 = vdwg.mxu0
        %v2921 = vsel %vm483, %v2526, 0
        %2923 = vmatprep.subr.bf16.mxu0 0
        %2924 = vmatpush1.bf16.msra.mxu0 0
        %2925 = vmatprep.subr.bf16.mxu0 0
        %2926 = vmatpush1.bf16.msra.mxu0 0
        %2927 = vmatprep.subr.bf16.mxu0 0
        %2928 = vmatpush1.bf16.msra.mxu0 0
        %2929 = vmatprep.subr.bf16.mxu0 0
        %2930 = vmatpush1.bf16.msra.mxu0 0
        %2931 = vmatprep.subr.bf16.mxu0 0
        %2932 = vmatpush1.bf16.msra.mxu0 0
        %2933 = vmatprep.subr.bf16.mxu0 0
        %2934 = vmatpush1.bf16.msra.mxu0 0
        %2935 = vmatprep.subr.bf16.mxu0 0
        %2936 = vmatpush1.bf16.msra.mxu0 0
        %2937 = vmatprep.subr.bf16.mxu0 0
        %2938 = vmatpush1.bf16.msra.mxu0 %v2921
        %2939 = vmatprep.subr.bf16.mxu0 0
        %2940 = vmatpush2.bf16.msra.mxu0 0
        %2941 = vmatprep.subr.bf16.mxu0 0
        %2942 = vmatpush2.bf16.msra.mxu0 0
        %2943 = vmatprep.subr.bf16.mxu0 0
        %2944 = vmatpush2.bf16.msra.mxu0 0
        %2945 = vmatprep.subr.bf16.mxu0 0
        %2946 = vmatpush2.bf16.msra.mxu0 0
        %2947 = vmatprep.subr.bf16.mxu0 0
        %2948 = vmatpush2.bf16.msra.mxu0 0
        %2949 = vmatprep.subr.bf16.mxu0 0
        %2950 = vmatpush2.bf16.msra.mxu0 0
        %2951 = vmatprep.subr.bf16.mxu0 0
        %2952 = vmatpush2.bf16.msra.mxu0 0
        %2953 = vmatprep.subr.bf16.mxu0 0
        %2954 = vmatpush2.bf16.msra.mxu0 0
        %2955 = vmatprep.mubr.bf16.mxu0 0
        %2956 = vmatmul.mubr.bf16.gmra.mxu0 %v1047
        %v2957 = vpop.f32.mrf.mxu0
        %v2958 = vadd.f32 0.0, %v2957
        %v2959 = vpop.f32.mrf.mxu0
        %v2960 = vpop.f32.mrf.mxu0
        %v2961 = vpop.f32.mrf.mxu0
        %2962 = vdwg.mxu0
        %v2964 = vsel %vm483, %v2527, 0
        %2966 = vmatprep.subr.bf16.mxu0 0
        %2967 = vmatpush1.bf16.msra.mxu0 0
        %2968 = vmatprep.subr.bf16.mxu0 0
        %2969 = vmatpush1.bf16.msra.mxu0 0
        %2970 = vmatprep.subr.bf16.mxu0 0
        %2971 = vmatpush1.bf16.msra.mxu0 0
        %2972 = vmatprep.subr.bf16.mxu0 0
        %2973 = vmatpush1.bf16.msra.mxu0 0
        %2974 = vmatprep.subr.bf16.mxu0 0
        %2975 = vmatpush1.bf16.msra.mxu0 0
        %2976 = vmatprep.subr.bf16.mxu0 0
        %2977 = vmatpush1.bf16.msra.mxu0 0
        %2978 = vmatprep.subr.bf16.mxu0 0
        %2979 = vmatpush1.bf16.msra.mxu0 0
        %2980 = vmatprep.subr.bf16.mxu0 0
        %2981 = vmatpush1.bf16.msra.mxu0 %v2964
        %2982 = vmatprep.subr.bf16.mxu0 0
        %2983 = vmatpush2.bf16.msra.mxu0 0
        %2984 = vmatprep.subr.bf16.mxu0 0
        %2985 = vmatpush2.bf16.msra.mxu0 0
        %2986 = vmatprep.subr.bf16.mxu0 0
        %2987 = vmatpush2.bf16.msra.mxu0 0
        %2988 = vmatprep.subr.bf16.mxu0 0
        %2989 = vmatpush2.bf16.msra.mxu0 0
        %2990 = vmatprep.subr.bf16.mxu0 0
        %2991 = vmatpush2.bf16.msra.mxu0 0
        %2992 = vmatprep.subr.bf16.mxu0 0
        %2993 = vmatpush2.bf16.msra.mxu0 0
        %2994 = vmatprep.subr.bf16.mxu0 0
        %2995 = vmatpush2.bf16.msra.mxu0 0
        %2996 = vmatprep.subr.bf16.mxu0 0
        %2997 = vmatpush2.bf16.msra.mxu0 0
        %2998 = vmatprep.mubr.bf16.mxu0 0
        %2999 = vmatmul.mubr.bf16.gmra.mxu0 %v1093
        %v3000 = vpop.f32.mrf.mxu0
        %v3001 = vadd.f32 0.0, %v3000
        %v3002 = vpop.f32.mrf.mxu0
        %v3003 = vpop.f32.mrf.mxu0
        %v3004 = vpop.f32.mrf.mxu0
        %3005 = vdwg.mxu0
        %v3007 = vsel %vm483, %v2528, 0
        %3009 = vmatprep.subr.bf16.mxu0 0
        %3010 = vmatpush1.bf16.msra.mxu0 0
        %3011 = vmatprep.subr.bf16.mxu0 0
        %3012 = vmatpush1.bf16.msra.mxu0 0
        %3013 = vmatprep.subr.bf16.mxu0 0
        %3014 = vmatpush1.bf16.msra.mxu0 0
        %3015 = vmatprep.subr.bf16.mxu0 0
        %3016 = vmatpush1.bf16.msra.mxu0 0
        %3017 = vmatprep.subr.bf16.mxu0 0
        %3018 = vmatpush1.bf16.msra.mxu0 0
        %3019 = vmatprep.subr.bf16.mxu0 0
        %3020 = vmatpush1.bf16.msra.mxu0 0
        %3021 = vmatprep.subr.bf16.mxu0 0
        %3022 = vmatpush1.bf16.msra.mxu0 0
        %3023 = vmatprep.subr.bf16.mxu0 0
        %3024 = vmatpush1.bf16.msra.mxu0 %v3007
        %3025 = vmatprep.subr.bf16.mxu0 0
        %3026 = vmatpush2.bf16.msra.mxu0 0
        %3027 = vmatprep.subr.bf16.mxu0 0
        %3028 = vmatpush2.bf16.msra.mxu0 0
        %3029 = vmatprep.subr.bf16.mxu0 0
        %3030 = vmatpush2.bf16.msra.mxu0 0
        %3031 = vmatprep.subr.bf16.mxu0 0
        %3032 = vmatpush2.bf16.msra.mxu0 0
        %3033 = vmatprep.subr.bf16.mxu0 0
        %3034 = vmatpush2.bf16.msra.mxu0 0
        %3035 = vmatprep.subr.bf16.mxu0 0
        %3036 = vmatpush2.bf16.msra.mxu0 0
        %3037 = vmatprep.subr.bf16.mxu0 0
        %3038 = vmatpush2.bf16.msra.mxu0 0
        %3039 = vmatprep.subr.bf16.mxu0 0
        %3040 = vmatpush2.bf16.msra.mxu0 0
        %3041 = vmatprep.mubr.bf16.mxu0 0
        %3042 = vmatmul.mubr.bf16.gmra.mxu0 %v1139
        %v3043 = vpop.f32.mrf.mxu0
        %v3044 = vadd.f32 0.0, %v3043
        %v3045 = vpop.f32.mrf.mxu0
        %v3046 = vpop.f32.mrf.mxu0
        %v3047 = vpop.f32.mrf.mxu0
        %3048 = vdwg.mxu0
        %v3050 = vsel %vm483, %v2529, 0
        %3052 = vmatprep.subr.bf16.mxu0 0
        %3053 = vmatpush1.bf16.msra.mxu0 0
        %3054 = vmatprep.subr.bf16.mxu0 0
        %3055 = vmatpush1.bf16.msra.mxu0 0
        %3056 = vmatprep.subr.bf16.mxu0 0
        %3057 = vmatpush1.bf16.msra.mxu0 0
        %3058 = vmatprep.subr.bf16.mxu0 0
        %3059 = vmatpush1.bf16.msra.mxu0 0
        %3060 = vmatprep.subr.bf16.mxu0 0
        %3061 = vmatpush1.bf16.msra.mxu0 0
        %3062 = vmatprep.subr.bf16.mxu0 0
        %3063 = vmatpush1.bf16.msra.mxu0 0
        %3064 = vmatprep.subr.bf16.mxu0 0
        %3065 = vmatpush1.bf16.msra.mxu0 0
        %3066 = vmatprep.subr.bf16.mxu0 0
        %3067 = vmatpush1.bf16.msra.mxu0 %v3050
        %3068 = vmatprep.subr.bf16.mxu0 0
        %3069 = vmatpush2.bf16.msra.mxu0 0
        %3070 = vmatprep.subr.bf16.mxu0 0
        %3071 = vmatpush2.bf16.msra.mxu0 0
        %3072 = vmatprep.subr.bf16.mxu0 0
        %3073 = vmatpush2.bf16.msra.mxu0 0
        %3074 = vmatprep.subr.bf16.mxu0 0
        %3075 = vmatpush2.bf16.msra.mxu0 0
        %3076 = vmatprep.subr.bf16.mxu0 0
        %3077 = vmatpush2.bf16.msra.mxu0 0
        %3078 = vmatprep.subr.bf16.mxu0 0
        %3079 = vmatpush2.bf16.msra.mxu0 0
        %3080 = vmatprep.subr.bf16.mxu0 0
        %3081 = vmatpush2.bf16.msra.mxu0 0
        %3082 = vmatprep.subr.bf16.mxu0 0
        %3083 = vmatpush2.bf16.msra.mxu0 0
        %3084 = vmatprep.mubr.bf16.mxu0 0
        %3085 = vmatmul.mubr.bf16.gmra.mxu0 %v1185
        %v3086 = vpop.f32.mrf.mxu0
        %v3087 = vadd.f32 0.0, %v3086
        %v3088 = vpop.f32.mrf.mxu0
        %v3089 = vpop.f32.mrf.mxu0
        %v3090 = vpop.f32.mrf.mxu0
        %3091 = vdwg.mxu0
        %v3093 = vsel %vm483, %v2530, 0
        %3095 = vmatprep.subr.bf16.mxu0 0
        %3096 = vmatpush1.bf16.msra.mxu0 0
        %3097 = vmatprep.subr.bf16.mxu0 0
        %3098 = vmatpush1.bf16.msra.mxu0 0
        %3099 = vmatprep.subr.bf16.mxu0 0
        %3100 = vmatpush1.bf16.msra.mxu0 0
        %3101 = vmatprep.subr.bf16.mxu0 0
        %3102 = vmatpush1.bf16.msra.mxu0 0
        %3103 = vmatprep.subr.bf16.mxu0 0
        %3104 = vmatpush1.bf16.msra.mxu0 0
        %3105 = vmatprep.subr.bf16.mxu0 0
        %3106 = vmatpush1.bf16.msra.mxu0 0
        %3107 = vmatprep.subr.bf16.mxu0 0
        %3108 = vmatpush1.bf16.msra.mxu0 0
        %3109 = vmatprep.subr.bf16.mxu0 0
        %3110 = vmatpush1.bf16.msra.mxu0 %v3093
        %3111 = vmatprep.subr.bf16.mxu0 0
        %3112 = vmatpush2.bf16.msra.mxu0 0
        %3113 = vmatprep.subr.bf16.mxu0 0
        %3114 = vmatpush2.bf16.msra.mxu0 0
        %3115 = vmatprep.subr.bf16.mxu0 0
        %3116 = vmatpush2.bf16.msra.mxu0 0
        %3117 = vmatprep.subr.bf16.mxu0 0
        %3118 = vmatpush2.bf16.msra.mxu0 0
        %3119 = vmatprep.subr.bf16.mxu0 0
        %3120 = vmatpush2.bf16.msra.mxu0 0
        %3121 = vmatprep.subr.bf16.mxu0 0
        %3122 = vmatpush2.bf16.msra.mxu0 0
        %3123 = vmatprep.subr.bf16.mxu0 0
        %3124 = vmatpush2.bf16.msra.mxu0 0
        %3125 = vmatprep.subr.bf16.mxu0 0
        %3126 = vmatpush2.bf16.msra.mxu0 0
        %3127 = vmatprep.mubr.bf16.mxu0 0
        %3128 = vmatmul.mubr.bf16.gmra.mxu0 %v1231
        %v3129 = vpop.f32.mrf.mxu0
        %v3130 = vadd.f32 0.0, %v3129
        %v3131 = vpop.f32.mrf.mxu0
        %v3132 = vpop.f32.mrf.mxu0
        %v3133 = vpop.f32.mrf.mxu0
        %3134 = vdwg.mxu0
        %v3136 = vsel %vm483, %v2531, 0
        %3138 = vmatprep.subr.bf16.mxu0 0
        %3139 = vmatpush1.bf16.msra.mxu0 0
        %3140 = vmatprep.subr.bf16.mxu0 0
        %3141 = vmatpush1.bf16.msra.mxu0 0
        %3142 = vmatprep.subr.bf16.mxu0 0
        %3143 = vmatpush1.bf16.msra.mxu0 0
        %3144 = vmatprep.subr.bf16.mxu0 0
        %3145 = vmatpush1.bf16.msra.mxu0 0
        %3146 = vmatprep.subr.bf16.mxu0 0
        %3147 = vmatpush1.bf16.msra.mxu0 0
        %3148 = vmatprep.subr.bf16.mxu0 0
        %3149 = vmatpush1.bf16.msra.mxu0 0
        %3150 = vmatprep.subr.bf16.mxu0 0
        %3151 = vmatpush1.bf16.msra.mxu0 0
        %3152 = vmatprep.subr.bf16.mxu0 0
        %3153 = vmatpush1.bf16.msra.mxu0 %v3136
        %3154 = vmatprep.subr.bf16.mxu0 0
        %3155 = vmatpush2.bf16.msra.mxu0 0
        %3156 = vmatprep.subr.bf16.mxu0 0
        %3157 = vmatpush2.bf16.msra.mxu0 0
        %3158 = vmatprep.subr.bf16.mxu0 0
        %3159 = vmatpush2.bf16.msra.mxu0 0
        %3160 = vmatprep.subr.bf16.mxu0 0
        %3161 = vmatpush2.bf16.msra.mxu0 0
        %3162 = vmatprep.subr.bf16.mxu0 0
        %3163 = vmatpush2.bf16.msra.mxu0 0
        %3164 = vmatprep.subr.bf16.mxu0 0
        %3165 = vmatpush2.bf16.msra.mxu0 0
        %3166 = vmatprep.subr.bf16.mxu0 0
        %3167 = vmatpush2.bf16.msra.mxu0 0
        %3168 = vmatprep.subr.bf16.mxu0 0
        %3169 = vmatpush2.bf16.msra.mxu0 0
        %3170 = vmatprep.mubr.bf16.mxu0 0
        %3171 = vmatmul.mubr.bf16.gmra.mxu0 %v1277
        %v3172 = vpop.f32.mrf.mxu0
        %v3173 = vadd.f32 0.0, %v3172
        %v3174 = vpop.f32.mrf.mxu0
        %v3175 = vpop.f32.mrf.mxu0
        %v3176 = vpop.f32.mrf.mxu0
        %3177 = vdwg.mxu0
        %v3179 = vsel %vm483, %v2532, 0
        %3181 = vmatprep.subr.bf16.mxu0 0
        %3182 = vmatpush1.bf16.msra.mxu0 0
        %3183 = vmatprep.subr.bf16.mxu0 0
        %3184 = vmatpush1.bf16.msra.mxu0 0
        %3185 = vmatprep.subr.bf16.mxu0 0
        %3186 = vmatpush1.bf16.msra.mxu0 0
        %3187 = vmatprep.subr.bf16.mxu0 0
        %3188 = vmatpush1.bf16.msra.mxu0 0
        %3189 = vmatprep.subr.bf16.mxu0 0
        %3190 = vmatpush1.bf16.msra.mxu0 0
        %3191 = vmatprep.subr.bf16.mxu0 0
        %3192 = vmatpush1.bf16.msra.mxu0 0
        %3193 = vmatprep.subr.bf16.mxu0 0
        %3194 = vmatpush1.bf16.msra.mxu0 0
        %3195 = vmatprep.subr.bf16.mxu0 0
        %3196 = vmatpush1.bf16.msra.mxu0 %v3179
        %3197 = vmatprep.subr.bf16.mxu0 0
        %3198 = vmatpush2.bf16.msra.mxu0 0
        %3199 = vmatprep.subr.bf16.mxu0 0
        %3200 = vmatpush2.bf16.msra.mxu0 0
        %3201 = vmatprep.subr.bf16.mxu0 0
        %3202 = vmatpush2.bf16.msra.mxu0 0
        %3203 = vmatprep.subr.bf16.mxu0 0
        %3204 = vmatpush2.bf16.msra.mxu0 0
        %3205 = vmatprep.subr.bf16.mxu0 0
        %3206 = vmatpush2.bf16.msra.mxu0 0
        %3207 = vmatprep.subr.bf16.mxu0 0
        %3208 = vmatpush2.bf16.msra.mxu0 0
        %3209 = vmatprep.subr.bf16.mxu0 0
        %3210 = vmatpush2.bf16.msra.mxu0 0
        %3211 = vmatprep.subr.bf16.mxu0 0
        %3212 = vmatpush2.bf16.msra.mxu0 0
        %3213 = vmatprep.mubr.bf16.mxu0 0
        %3214 = vmatmul.mubr.bf16.gmra.mxu0 %v1323
        %v3215 = vpop.f32.mrf.mxu0
        %v3216 = vadd.f32 0.0, %v3215
        %v3217 = vpop.f32.mrf.mxu0
        %v3218 = vpop.f32.mrf.mxu0
        %v3219 = vpop.f32.mrf.mxu0
        %3220 = vdwg.mxu0
        %v3221 = vlaneseq
        %v3222 = vshrl.u32 %v3221, 7
        %v3223 = vsub.s32 2, %v3222
        %v3224 = vrot.slane %v417, %v3223
        %v3225 = vadd.f32 %v2571, %v3224
        %v3226 = vadd.f32 %v2614, %v3224
        %v3227 = vadd.f32 %v2657, %v3224
        %v3228 = vadd.f32 %v2700, %v3224
        %v3229 = vadd.f32 %v2743, %v3224
        %v3230 = vadd.f32 %v2786, %v3224
        %v3231 = vadd.f32 %v2829, %v3224
        %v3232 = vadd.f32 %v2872, %v3224
        %v3233 = vadd.f32 %v2915, %v3224
        %v3234 = vadd.f32 %v2958, %v3224
        %v3235 = vadd.f32 %v3001, %v3224
        %v3236 = vadd.f32 %v3044, %v3224
        %v3237 = vadd.f32 %v3087, %v3224
        %v3238 = vadd.f32 %v3130, %v3224
        %v3239 = vadd.f32 %v3173, %v3224
        %v3240 = vadd.f32 %v3216, %v3224
        %v3257 = vunpack.c.l.b16 %v384
        %v3258 = vunpack.c.l.b16 %v385
        %v3259 = vunpack.c.l.b16 %v386
        %v3260 = vunpack.c.l.b16 %v387
        %v3261 = vunpack.c.l.b16 %v388
        %v3262 = vunpack.c.l.b16 %v389
        %v3263 = vunpack.c.l.b16 %v390
        %v3264 = vunpack.c.l.b16 %v391
        %v3265 = vunpack.c.l.b16 %v392
        %v3266 = vunpack.c.l.b16 %v393
        %v3267 = vunpack.c.l.b16 %v394
        %v3268 = vunpack.c.l.b16 %v395
        %v3269 = vunpack.c.l.b16 %v396
        %v3270 = vunpack.c.l.b16 %v397
        %v3271 = vunpack.c.l.b16 %v398
        %v3272 = vunpack.c.l.b16 %v399
        %v3273 = vpack.c.b16 %v3258, %v3257
        %v3274 = vpack.c.b16 %v3260, %v3259
        %v3275 = vpack.c.b16 %v3262, %v3261
        %v3276 = vpack.c.b16 %v3264, %v3263
        %v3277 = vpack.c.b16 %v3266, %v3265
        %v3278 = vpack.c.b16 %v3268, %v3267
        %v3279 = vpack.c.b16 %v3270, %v3269
        %v3280 = vpack.c.b16 %v3272, %v3271
        %3289 = vmatprep.subr.bf16.mxu0 0
        %3290 = vmatpush1.bf16.msra.mxu0 %v3280
        %3291 = vmatprep.subr.bf16.mxu0 0
        %3292 = vmatpush1.bf16.msra.mxu0 %v3279
        %3293 = vmatprep.subr.bf16.mxu0 0
        %3294 = vmatpush1.bf16.msra.mxu0 %v3278
        %3295 = vmatprep.subr.bf16.mxu0 0
        %3296 = vmatpush1.bf16.msra.mxu0 %v3277
        %3297 = vmatprep.subr.bf16.mxu0 0
        %3298 = vmatpush1.bf16.msra.mxu0 %v3276
        %3299 = vmatprep.subr.bf16.mxu0 0
        %3300 = vmatpush1.bf16.msra.mxu0 %v3275
        %3301 = vmatprep.subr.bf16.mxu0 0
        %3302 = vmatpush1.bf16.msra.mxu0 %v3274
        %3303 = vmatprep.subr.bf16.mxu0 0
        %3304 = vmatpush1.bf16.msra.mxu0 %v3273
        %3305 = vmatprep.subr.bf16.mxu0 0
        %3306 = vmatpush2.bf16.msra.mxu0 0
        %3307 = vmatprep.subr.bf16.mxu0 0
        %3308 = vmatpush2.bf16.msra.mxu0 0
        %3309 = vmatprep.subr.bf16.mxu0 0
        %3310 = vmatpush2.bf16.msra.mxu0 0
        %3311 = vmatprep.subr.bf16.mxu0 0
        %3312 = vmatpush2.bf16.msra.mxu0 0
        %3313 = vmatprep.subr.bf16.mxu0 0
        %3314 = vmatpush2.bf16.msra.mxu0 0
        %3315 = vmatprep.subr.bf16.mxu0 0
        %3316 = vmatpush2.bf16.msra.mxu0 0
        %3317 = vmatprep.subr.bf16.mxu0 0
        %3318 = vmatpush2.bf16.msra.mxu0 0
        %3319 = vmatprep.subr.bf16.mxu0 0
        %3320 = vmatpush2.bf16.msra.mxu0 0
        %3321 = vmatprep.mubr.bf16.mxu0 0
        %3322 = vmatmul.mubr.bf16.gmra.mxu0 %v2332
        %v3323 = vpop.f32.mrf.mxu0
        %v3324 = vadd.f32 0.0, %v3323
        %v3325 = vpop.f32.mrf.mxu0
        %v3326 = vpop.f32.mrf.mxu0
        %v3327 = vadd.f32 0.0, %v3326
        %v3328 = vpop.f32.mrf.mxu0
        %3329 = vmatprep.mubr.bf16.mxu0 0
        %3330 = vmatmul.mubr.bf16.gmra.mxu0 %v2333
        %v3331 = vpop.f32.mrf.mxu0
        %v3332 = vadd.f32 0.0, %v3331
        %v3333 = vpop.f32.mrf.mxu0
        %v3334 = vpop.f32.mrf.mxu0
        %v3335 = vadd.f32 0.0, %v3334
        %v3336 = vpop.f32.mrf.mxu0
        %3337 = vmatprep.mubr.bf16.mxu0 0
        %3338 = vmatmul.mubr.bf16.gmra.mxu0 %v2334
        %v3339 = vpop.f32.mrf.mxu0
        %v3340 = vadd.f32 0.0, %v3339
        %v3341 = vpop.f32.mrf.mxu0
        %v3342 = vpop.f32.mrf.mxu0
        %v3343 = vadd.f32 0.0, %v3342
        %v3344 = vpop.f32.mrf.mxu0
        %3345 = vmatprep.mubr.bf16.mxu0 0
        %3346 = vmatmul.mubr.bf16.gmra.mxu0 %v2335
        %v3347 = vpop.f32.mrf.mxu0
        %v3348 = vadd.f32 0.0, %v3347
        %v3349 = vpop.f32.mrf.mxu0
        %v3350 = vpop.f32.mrf.mxu0
        %v3351 = vadd.f32 0.0, %v3350
        %v3352 = vpop.f32.mrf.mxu0
        %3353 = vmatprep.mubr.bf16.mxu0 0
        %3354 = vmatmul.mubr.bf16.gmra.mxu0 %v2336
        %v3355 = vpop.f32.mrf.mxu0
        %v3356 = vadd.f32 0.0, %v3355
        %v3357 = vpop.f32.mrf.mxu0
        %v3358 = vpop.f32.mrf.mxu0
        %v3359 = vadd.f32 0.0, %v3358
        %v3360 = vpop.f32.mrf.mxu0
        %3361 = vmatprep.mubr.bf16.mxu0 0
        %3362 = vmatmul.mubr.bf16.gmra.mxu0 %v2337
        %v3363 = vpop.f32.mrf.mxu0
        %v3364 = vadd.f32 0.0, %v3363
        %v3365 = vpop.f32.mrf.mxu0
        %v3366 = vpop.f32.mrf.mxu0
        %v3367 = vadd.f32 0.0, %v3366
        %v3368 = vpop.f32.mrf.mxu0
        %3369 = vmatprep.mubr.bf16.mxu0 0
        %3370 = vmatmul.mubr.bf16.gmra.mxu0 %v2338
        %v3371 = vpop.f32.mrf.mxu0
        %v3372 = vadd.f32 0.0, %v3371
        %v3373 = vpop.f32.mrf.mxu0
        %v3374 = vpop.f32.mrf.mxu0
        %v3375 = vadd.f32 0.0, %v3374
        %v3376 = vpop.f32.mrf.mxu0
        %3377 = vmatprep.mubr.bf16.mxu0 0
        %3378 = vmatmul.mubr.bf16.gmra.mxu0 %v2339
        %v3379 = vpop.f32.mrf.mxu0
        %v3380 = vadd.f32 0.0, %v3379
        %v3381 = vpop.f32.mrf.mxu0
        %v3382 = vpop.f32.mrf.mxu0
        %v3383 = vadd.f32 0.0, %v3382
        %v3384 = vpop.f32.mrf.mxu0
        %3385 = vdwg.mxu0
        %v3386 = vpack.c.bf16 %v3327, %v3324
        %v3387 = vpack.c.bf16 %v3335, %v3332
        %v3388 = vpack.c.bf16 %v3343, %v3340
        %v3389 = vpack.c.bf16 %v3351, %v3348
        %v3390 = vpack.c.bf16 %v3359, %v3356
        %v3391 = vpack.c.bf16 %v3367, %v3364
        %v3392 = vpack.c.bf16 %v3375, %v3372
        %v3393 = vpack.c.bf16 %v3383, %v3380
        %v3402 = vunpack.c.l.b16 %v3386
        %v3403 = vunpack.c.h.b16 %v3386
        %v3404 = vunpack.c.l.b16 %v3387
        %v3405 = vunpack.c.h.b16 %v3387
        %v3406 = vunpack.c.l.b16 %v3388
        %v3407 = vunpack.c.h.b16 %v3388
        %v3408 = vunpack.c.l.b16 %v3389
        %v3409 = vunpack.c.h.b16 %v3389
        %v3410 = vunpack.c.l.b16 %v3390
        %v3411 = vunpack.c.h.b16 %v3390
        %v3412 = vunpack.c.l.b16 %v3391
        %v3413 = vunpack.c.h.b16 %v3391
        %v3414 = vunpack.c.l.b16 %v3392
        %v3415 = vunpack.c.h.b16 %v3392
        %v3416 = vunpack.c.l.b16 %v3393
        %v3417 = vunpack.c.h.b16 %v3393
        %v3418 = vpack.c.b16 %v3402, %v3402
        %v3419 = vpack.c.b16 %v3403, %v3403
        %v3420 = vpack.c.b16 %v3404, %v3404
        %v3421 = vpack.c.b16 %v3405, %v3405
        %v3422 = vpack.c.b16 %v3406, %v3406
        %v3423 = vpack.c.b16 %v3407, %v3407
        %v3424 = vpack.c.b16 %v3408, %v3408
        %v3425 = vpack.c.b16 %v3409, %v3409
        %v3426 = vpack.c.b16 %v3410, %v3410
        %v3427 = vpack.c.b16 %v3411, %v3411
        %v3428 = vpack.c.b16 %v3412, %v3412
        %v3429 = vpack.c.b16 %v3413, %v3413
        %v3430 = vpack.c.b16 %v3414, %v3414
        %v3431 = vpack.c.b16 %v3415, %v3415
        %v3432 = vpack.c.b16 %v3416, %v3416
        %v3433 = vpack.c.b16 %v3417, %v3417
        %v3435 = vsel %vm483, %v3418, 0
        %3437 = vmatprep.subr.bf16.mxu0 0
        %3438 = vmatpush1.bf16.msra.mxu0 0
        %3439 = vmatprep.subr.bf16.mxu0 0
        %3440 = vmatpush1.bf16.msra.mxu0 0
        %3441 = vmatprep.subr.bf16.mxu0 0
        %3442 = vmatpush1.bf16.msra.mxu0 0
        %3443 = vmatprep.subr.bf16.mxu0 0
        %3444 = vmatpush1.bf16.msra.mxu0 0
        %3445 = vmatprep.subr.bf16.mxu0 0
        %3446 = vmatpush1.bf16.msra.mxu0 0
        %3447 = vmatprep.subr.bf16.mxu0 0
        %3448 = vmatpush1.bf16.msra.mxu0 0
        %3449 = vmatprep.subr.bf16.mxu0 0
        %3450 = vmatpush1.bf16.msra.mxu0 0
        %3451 = vmatprep.subr.bf16.mxu0 0
        %3452 = vmatpush1.bf16.msra.mxu0 %v3435
        %3453 = vmatprep.subr.bf16.mxu0 0
        %3454 = vmatpush2.bf16.msra.mxu0 0
        %3455 = vmatprep.subr.bf16.mxu0 0
        %3456 = vmatpush2.bf16.msra.mxu0 0
        %3457 = vmatprep.subr.bf16.mxu0 0
        %3458 = vmatpush2.bf16.msra.mxu0 0
        %3459 = vmatprep.subr.bf16.mxu0 0
        %3460 = vmatpush2.bf16.msra.mxu0 0
        %3461 = vmatprep.subr.bf16.mxu0 0
        %3462 = vmatpush2.bf16.msra.mxu0 0
        %3463 = vmatprep.subr.bf16.mxu0 0
        %3464 = vmatpush2.bf16.msra.mxu0 0
        %3465 = vmatprep.subr.bf16.mxu0 0
        %3466 = vmatpush2.bf16.msra.mxu0 0
        %3467 = vmatprep.subr.bf16.mxu0 0
        %3468 = vmatpush2.bf16.msra.mxu0 0
        %3469 = vmatprep.mubr.bf16.mxu0 0
        %3470 = vmatmul.mubr.bf16.gmra.mxu0 %v1561
        %v3471 = vpop.f32.mrf.mxu0
        %v3472 = vadd.f32 0.0, %v3471
        %v3473 = vpop.f32.mrf.mxu0
        %v3474 = vpop.f32.mrf.mxu0
        %v3475 = vpop.f32.mrf.mxu0
        %3476 = vdwg.mxu0
        %v3478 = vsel %vm483, %v3419, 0
        %3480 = vmatprep.subr.bf16.mxu0 0
        %3481 = vmatpush1.bf16.msra.mxu0 0
        %3482 = vmatprep.subr.bf16.mxu0 0
        %3483 = vmatpush1.bf16.msra.mxu0 0
        %3484 = vmatprep.subr.bf16.mxu0 0
        %3485 = vmatpush1.bf16.msra.mxu0 0
        %3486 = vmatprep.subr.bf16.mxu0 0
        %3487 = vmatpush1.bf16.msra.mxu0 0
        %3488 = vmatprep.subr.bf16.mxu0 0
        %3489 = vmatpush1.bf16.msra.mxu0 0
        %3490 = vmatprep.subr.bf16.mxu0 0
        %3491 = vmatpush1.bf16.msra.mxu0 0
        %3492 = vmatprep.subr.bf16.mxu0 0
        %3493 = vmatpush1.bf16.msra.mxu0 0
        %3494 = vmatprep.subr.bf16.mxu0 0
        %3495 = vmatpush1.bf16.msra.mxu0 %v3478
        %3496 = vmatprep.subr.bf16.mxu0 0
        %3497 = vmatpush2.bf16.msra.mxu0 0
        %3498 = vmatprep.subr.bf16.mxu0 0
        %3499 = vmatpush2.bf16.msra.mxu0 0
        %3500 = vmatprep.subr.bf16.mxu0 0
        %3501 = vmatpush2.bf16.msra.mxu0 0
        %3502 = vmatprep.subr.bf16.mxu0 0
        %3503 = vmatpush2.bf16.msra.mxu0 0
        %3504 = vmatprep.subr.bf16.mxu0 0
        %3505 = vmatpush2.bf16.msra.mxu0 0
        %3506 = vmatprep.subr.bf16.mxu0 0
        %3507 = vmatpush2.bf16.msra.mxu0 0
        %3508 = vmatprep.subr.bf16.mxu0 0
        %3509 = vmatpush2.bf16.msra.mxu0 0
        %3510 = vmatprep.subr.bf16.mxu0 0
        %3511 = vmatpush2.bf16.msra.mxu0 0
        %3512 = vmatprep.mubr.bf16.mxu0 0
        %3513 = vmatmul.mubr.bf16.gmra.mxu0 %v1607
        %v3514 = vpop.f32.mrf.mxu0
        %v3515 = vadd.f32 0.0, %v3514
        %v3516 = vpop.f32.mrf.mxu0
        %v3517 = vpop.f32.mrf.mxu0
        %v3518 = vpop.f32.mrf.mxu0
        %3519 = vdwg.mxu0
        %v3521 = vsel %vm483, %v3420, 0
        %3523 = vmatprep.subr.bf16.mxu0 0
        %3524 = vmatpush1.bf16.msra.mxu0 0
        %3525 = vmatprep.subr.bf16.mxu0 0
        %3526 = vmatpush1.bf16.msra.mxu0 0
        %3527 = vmatprep.subr.bf16.mxu0 0
        %3528 = vmatpush1.bf16.msra.mxu0 0
        %3529 = vmatprep.subr.bf16.mxu0 0
        %3530 = vmatpush1.bf16.msra.mxu0 0
        %3531 = vmatprep.subr.bf16.mxu0 0
        %3532 = vmatpush1.bf16.msra.mxu0 0
        %3533 = vmatprep.subr.bf16.mxu0 0
        %3534 = vmatpush1.bf16.msra.mxu0 0
        %3535 = vmatprep.subr.bf16.mxu0 0
        %3536 = vmatpush1.bf16.msra.mxu0 0
        %3537 = vmatprep.subr.bf16.mxu0 0
        %3538 = vmatpush1.bf16.msra.mxu0 %v3521
        %3539 = vmatprep.subr.bf16.mxu0 0
        %3540 = vmatpush2.bf16.msra.mxu0 0
        %3541 = vmatprep.subr.bf16.mxu0 0
        %3542 = vmatpush2.bf16.msra.mxu0 0
        %3543 = vmatprep.subr.bf16.mxu0 0
        %3544 = vmatpush2.bf16.msra.mxu0 0
        %3545 = vmatprep.subr.bf16.mxu0 0
        %3546 = vmatpush2.bf16.msra.mxu0 0
        %3547 = vmatprep.subr.bf16.mxu0 0
        %3548 = vmatpush2.bf16.msra.mxu0 0
        %3549 = vmatprep.subr.bf16.mxu0 0
        %3550 = vmatpush2.bf16.msra.mxu0 0
        %3551 = vmatprep.subr.bf16.mxu0 0
        %3552 = vmatpush2.bf16.msra.mxu0 0
        %3553 = vmatprep.subr.bf16.mxu0 0
        %3554 = vmatpush2.bf16.msra.mxu0 0
        %3555 = vmatprep.mubr.bf16.mxu0 0
        %3556 = vmatmul.mubr.bf16.gmra.mxu0 %v1653
        %v3557 = vpop.f32.mrf.mxu0
        %v3558 = vadd.f32 0.0, %v3557
        %v3559 = vpop.f32.mrf.mxu0
        %v3560 = vpop.f32.mrf.mxu0
        %v3561 = vpop.f32.mrf.mxu0
        %3562 = vdwg.mxu0
        %v3564 = vsel %vm483, %v3421, 0
        %3566 = vmatprep.subr.bf16.mxu0 0
        %3567 = vmatpush1.bf16.msra.mxu0 0
        %3568 = vmatprep.subr.bf16.mxu0 0
        %3569 = vmatpush1.bf16.msra.mxu0 0
        %3570 = vmatprep.subr.bf16.mxu0 0
        %3571 = vmatpush1.bf16.msra.mxu0 0
        %3572 = vmatprep.subr.bf16.mxu0 0
        %3573 = vmatpush1.bf16.msra.mxu0 0
        %3574 = vmatprep.subr.bf16.mxu0 0
        %3575 = vmatpush1.bf16.msra.mxu0 0
        %3576 = vmatprep.subr.bf16.mxu0 0
        %3577 = vmatpush1.bf16.msra.mxu0 0
        %3578 = vmatprep.subr.bf16.mxu0 0
        %3579 = vmatpush1.bf16.msra.mxu0 0
        %3580 = vmatprep.subr.bf16.mxu0 0
        %3581 = vmatpush1.bf16.msra.mxu0 %v3564
        %3582 = vmatprep.subr.bf16.mxu0 0
        %3583 = vmatpush2.bf16.msra.mxu0 0
        %3584 = vmatprep.subr.bf16.mxu0 0
        %3585 = vmatpush2.bf16.msra.mxu0 0
        %3586 = vmatprep.subr.bf16.mxu0 0
        %3587 = vmatpush2.bf16.msra.mxu0 0
        %3588 = vmatprep.subr.bf16.mxu0 0
        %3589 = vmatpush2.bf16.msra.mxu0 0
        %3590 = vmatprep.subr.bf16.mxu0 0
        %3591 = vmatpush2.bf16.msra.mxu0 0
        %3592 = vmatprep.subr.bf16.mxu0 0
        %3593 = vmatpush2.bf16.msra.mxu0 0
        %3594 = vmatprep.subr.bf16.mxu0 0
        %3595 = vmatpush2.bf16.msra.mxu0 0
        %3596 = vmatprep.subr.bf16.mxu0 0
        %3597 = vmatpush2.bf16.msra.mxu0 0
        %3598 = vmatprep.mubr.bf16.mxu0 0
        %3599 = vmatmul.mubr.bf16.gmra.mxu0 %v1699
        %v3600 = vpop.f32.mrf.mxu0
        %v3601 = vadd.f32 0.0, %v3600
        %v3602 = vpop.f32.mrf.mxu0
        %v3603 = vpop.f32.mrf.mxu0
        %v3604 = vpop.f32.mrf.mxu0
        %3605 = vdwg.mxu0
        %v3607 = vsel %vm483, %v3422, 0
        %3609 = vmatprep.subr.bf16.mxu0 0
        %3610 = vmatpush1.bf16.msra.mxu0 0
        %3611 = vmatprep.subr.bf16.mxu0 0
        %3612 = vmatpush1.bf16.msra.mxu0 0
        %3613 = vmatprep.subr.bf16.mxu0 0
        %3614 = vmatpush1.bf16.msra.mxu0 0
        %3615 = vmatprep.subr.bf16.mxu0 0
        %3616 = vmatpush1.bf16.msra.mxu0 0
        %3617 = vmatprep.subr.bf16.mxu0 0
        %3618 = vmatpush1.bf16.msra.mxu0 0
        %3619 = vmatprep.subr.bf16.mxu0 0
        %3620 = vmatpush1.bf16.msra.mxu0 0
        %3621 = vmatprep.subr.bf16.mxu0 0
        %3622 = vmatpush1.bf16.msra.mxu0 0
        %3623 = vmatprep.subr.bf16.mxu0 0
        %3624 = vmatpush1.bf16.msra.mxu0 %v3607
        %3625 = vmatprep.subr.bf16.mxu0 0
        %3626 = vmatpush2.bf16.msra.mxu0 0
        %3627 = vmatprep.subr.bf16.mxu0 0
        %3628 = vmatpush2.bf16.msra.mxu0 0
        %3629 = vmatprep.subr.bf16.mxu0 0
        %3630 = vmatpush2.bf16.msra.mxu0 0
        %3631 = vmatprep.subr.bf16.mxu0 0
        %3632 = vmatpush2.bf16.msra.mxu0 0
        %3633 = vmatprep.subr.bf16.mxu0 0
        %3634 = vmatpush2.bf16.msra.mxu0 0
        %3635 = vmatprep.subr.bf16.mxu0 0
        %3636 = vmatpush2.bf16.msra.mxu0 0
        %3637 = vmatprep.subr.bf16.mxu0 0
        %3638 = vmatpush2.bf16.msra.mxu0 0
        %3639 = vmatprep.subr.bf16.mxu0 0
        %3640 = vmatpush2.bf16.msra.mxu0 0
        %3641 = vmatprep.mubr.bf16.mxu0 0
        %3642 = vmatmul.mubr.bf16.gmra.mxu0 %v1745
        %v3643 = vpop.f32.mrf.mxu0
        %v3644 = vadd.f32 0.0, %v3643
        %v3645 = vpop.f32.mrf.mxu0
        %v3646 = vpop.f32.mrf.mxu0
        %v3647 = vpop.f32.mrf.mxu0
        %3648 = vdwg.mxu0
        %v3650 = vsel %vm483, %v3423, 0
        %3652 = vmatprep.subr.bf16.mxu0 0
        %3653 = vmatpush1.bf16.msra.mxu0 0
        %3654 = vmatprep.subr.bf16.mxu0 0
        %3655 = vmatpush1.bf16.msra.mxu0 0
        %3656 = vmatprep.subr.bf16.mxu0 0
        %3657 = vmatpush1.bf16.msra.mxu0 0
        %3658 = vmatprep.subr.bf16.mxu0 0
        %3659 = vmatpush1.bf16.msra.mxu0 0
        %3660 = vmatprep.subr.bf16.mxu0 0
        %3661 = vmatpush1.bf16.msra.mxu0 0
        %3662 = vmatprep.subr.bf16.mxu0 0
        %3663 = vmatpush1.bf16.msra.mxu0 0
        %3664 = vmatprep.subr.bf16.mxu0 0
        %3665 = vmatpush1.bf16.msra.mxu0 0
        %3666 = vmatprep.subr.bf16.mxu0 0
        %3667 = vmatpush1.bf16.msra.mxu0 %v3650
        %3668 = vmatprep.subr.bf16.mxu0 0
        %3669 = vmatpush2.bf16.msra.mxu0 0
        %3670 = vmatprep.subr.bf16.mxu0 0
        %3671 = vmatpush2.bf16.msra.mxu0 0
        %3672 = vmatprep.subr.bf16.mxu0 0
        %3673 = vmatpush2.bf16.msra.mxu0 0
        %3674 = vmatprep.subr.bf16.mxu0 0
        %3675 = vmatpush2.bf16.msra.mxu0 0
        %3676 = vmatprep.subr.bf16.mxu0 0
        %3677 = vmatpush2.bf16.msra.mxu0 0
        %3678 = vmatprep.subr.bf16.mxu0 0
        %3679 = vmatpush2.bf16.msra.mxu0 0
        %3680 = vmatprep.subr.bf16.mxu0 0
        %3681 = vmatpush2.bf16.msra.mxu0 0
        %3682 = vmatprep.subr.bf16.mxu0 0
        %3683 = vmatpush2.bf16.msra.mxu0 0
        %3684 = vmatprep.mubr.bf16.mxu0 0
        %3685 = vmatmul.mubr.bf16.gmra.mxu0 %v1791
        %v3686 = vpop.f32.mrf.mxu0
        %v3687 = vadd.f32 0.0, %v3686
        %v3688 = vpop.f32.mrf.mxu0
        %v3689 = vpop.f32.mrf.mxu0
        %v3690 = vpop.f32.mrf.mxu0
        %3691 = vdwg.mxu0
        %v3693 = vsel %vm483, %v3424, 0
        %3695 = vmatprep.subr.bf16.mxu0 0
        %3696 = vmatpush1.bf16.msra.mxu0 0
        %3697 = vmatprep.subr.bf16.mxu0 0
        %3698 = vmatpush1.bf16.msra.mxu0 0
        %3699 = vmatprep.subr.bf16.mxu0 0
        %3700 = vmatpush1.bf16.msra.mxu0 0
        %3701 = vmatprep.subr.bf16.mxu0 0
        %3702 = vmatpush1.bf16.msra.mxu0 0
        %3703 = vmatprep.subr.bf16.mxu0 0
        %3704 = vmatpush1.bf16.msra.mxu0 0
        %3705 = vmatprep.subr.bf16.mxu0 0
        %3706 = vmatpush1.bf16.msra.mxu0 0
        %3707 = vmatprep.subr.bf16.mxu0 0
        %3708 = vmatpush1.bf16.msra.mxu0 0
        %3709 = vmatprep.subr.bf16.mxu0 0
        %3710 = vmatpush1.bf16.msra.mxu0 %v3693
        %3711 = vmatprep.subr.bf16.mxu0 0
        %3712 = vmatpush2.bf16.msra.mxu0 0
        %3713 = vmatprep.subr.bf16.mxu0 0
        %3714 = vmatpush2.bf16.msra.mxu0 0
        %3715 = vmatprep.subr.bf16.mxu0 0
        %3716 = vmatpush2.bf16.msra.mxu0 0
        %3717 = vmatprep.subr.bf16.mxu0 0
        %3718 = vmatpush2.bf16.msra.mxu0 0
        %3719 = vmatprep.subr.bf16.mxu0 0
        %3720 = vmatpush2.bf16.msra.mxu0 0
        %3721 = vmatprep.subr.bf16.mxu0 0
        %3722 = vmatpush2.bf16.msra.mxu0 0
        %3723 = vmatprep.subr.bf16.mxu0 0
        %3724 = vmatpush2.bf16.msra.mxu0 0
        %3725 = vmatprep.subr.bf16.mxu0 0
        %3726 = vmatpush2.bf16.msra.mxu0 0
        %3727 = vmatprep.mubr.bf16.mxu0 0
        %3728 = vmatmul.mubr.bf16.gmra.mxu0 %v1837
        %v3729 = vpop.f32.mrf.mxu0
        %v3730 = vadd.f32 0.0, %v3729
        %v3731 = vpop.f32.mrf.mxu0
        %v3732 = vpop.f32.mrf.mxu0
        %v3733 = vpop.f32.mrf.mxu0
        %3734 = vdwg.mxu0
        %v3736 = vsel %vm483, %v3425, 0
        %3738 = vmatprep.subr.bf16.mxu0 0
        %3739 = vmatpush1.bf16.msra.mxu0 0
        %3740 = vmatprep.subr.bf16.mxu0 0
        %3741 = vmatpush1.bf16.msra.mxu0 0
        %3742 = vmatprep.subr.bf16.mxu0 0
        %3743 = vmatpush1.bf16.msra.mxu0 0
        %3744 = vmatprep.subr.bf16.mxu0 0
        %3745 = vmatpush1.bf16.msra.mxu0 0
        %3746 = vmatprep.subr.bf16.mxu0 0
        %3747 = vmatpush1.bf16.msra.mxu0 0
        %3748 = vmatprep.subr.bf16.mxu0 0
        %3749 = vmatpush1.bf16.msra.mxu0 0
        %3750 = vmatprep.subr.bf16.mxu0 0
        %3751 = vmatpush1.bf16.msra.mxu0 0
        %3752 = vmatprep.subr.bf16.mxu0 0
        %3753 = vmatpush1.bf16.msra.mxu0 %v3736
        %3754 = vmatprep.subr.bf16.mxu0 0
        %3755 = vmatpush2.bf16.msra.mxu0 0
        %3756 = vmatprep.subr.bf16.mxu0 0
        %3757 = vmatpush2.bf16.msra.mxu0 0
        %3758 = vmatprep.subr.bf16.mxu0 0
        %3759 = vmatpush2.bf16.msra.mxu0 0
        %3760 = vmatprep.subr.bf16.mxu0 0
        %3761 = vmatpush2.bf16.msra.mxu0 0
        %3762 = vmatprep.subr.bf16.mxu0 0
        %3763 = vmatpush2.bf16.msra.mxu0 0
        %3764 = vmatprep.subr.bf16.mxu0 0
        %3765 = vmatpush2.bf16.msra.mxu0 0
        %3766 = vmatprep.subr.bf16.mxu0 0
        %3767 = vmatpush2.bf16.msra.mxu0 0
        %3768 = vmatprep.subr.bf16.mxu0 0
        %3769 = vmatpush2.bf16.msra.mxu0 0
        %3770 = vmatprep.mubr.bf16.mxu0 0
        %3771 = vmatmul.mubr.bf16.gmra.mxu0 %v1883
        %v3772 = vpop.f32.mrf.mxu0
        %v3773 = vadd.f32 0.0, %v3772
        %v3774 = vpop.f32.mrf.mxu0
        %v3775 = vpop.f32.mrf.mxu0
        %v3776 = vpop.f32.mrf.mxu0
        %3777 = vdwg.mxu0
        %v3779 = vsel %vm483, %v3426, 0
        %3781 = vmatprep.subr.bf16.mxu0 0
        %3782 = vmatpush1.bf16.msra.mxu0 0
        %3783 = vmatprep.subr.bf16.mxu0 0
        %3784 = vmatpush1.bf16.msra.mxu0 0
        %3785 = vmatprep.subr.bf16.mxu0 0
        %3786 = vmatpush1.bf16.msra.mxu0 0
        %3787 = vmatprep.subr.bf16.mxu0 0
        %3788 = vmatpush1.bf16.msra.mxu0 0
        %3789 = vmatprep.subr.bf16.mxu0 0
        %3790 = vmatpush1.bf16.msra.mxu0 0
        %3791 = vmatprep.subr.bf16.mxu0 0
        %3792 = vmatpush1.bf16.msra.mxu0 0
        %3793 = vmatprep.subr.bf16.mxu0 0
        %3794 = vmatpush1.bf16.msra.mxu0 0
        %3795 = vmatprep.subr.bf16.mxu0 0
        %3796 = vmatpush1.bf16.msra.mxu0 %v3779
        %3797 = vmatprep.subr.bf16.mxu0 0
        %3798 = vmatpush2.bf16.msra.mxu0 0
        %3799 = vmatprep.subr.bf16.mxu0 0
        %3800 = vmatpush2.bf16.msra.mxu0 0
        %3801 = vmatprep.subr.bf16.mxu0 0
        %3802 = vmatpush2.bf16.msra.mxu0 0
        %3803 = vmatprep.subr.bf16.mxu0 0
        %3804 = vmatpush2.bf16.msra.mxu0 0
        %3805 = vmatprep.subr.bf16.mxu0 0
        %3806 = vmatpush2.bf16.msra.mxu0 0
        %3807 = vmatprep.subr.bf16.mxu0 0
        %3808 = vmatpush2.bf16.msra.mxu0 0
        %3809 = vmatprep.subr.bf16.mxu0 0
        %3810 = vmatpush2.bf16.msra.mxu0 0
        %3811 = vmatprep.subr.bf16.mxu0 0
        %3812 = vmatpush2.bf16.msra.mxu0 0
        %3813 = vmatprep.mubr.bf16.mxu0 0
        %3814 = vmatmul.mubr.bf16.gmra.mxu0 %v1929
        %v3815 = vpop.f32.mrf.mxu0
        %v3816 = vadd.f32 0.0, %v3815
        %v3817 = vpop.f32.mrf.mxu0
        %v3818 = vpop.f32.mrf.mxu0
        %v3819 = vpop.f32.mrf.mxu0
        %3820 = vdwg.mxu0
        %v3822 = vsel %vm483, %v3427, 0
        %3824 = vmatprep.subr.bf16.mxu0 0
        %3825 = vmatpush1.bf16.msra.mxu0 0
        %3826 = vmatprep.subr.bf16.mxu0 0
        %3827 = vmatpush1.bf16.msra.mxu0 0
        %3828 = vmatprep.subr.bf16.mxu0 0
        %3829 = vmatpush1.bf16.msra.mxu0 0
        %3830 = vmatprep.subr.bf16.mxu0 0
        %3831 = vmatpush1.bf16.msra.mxu0 0
        %3832 = vmatprep.subr.bf16.mxu0 0
        %3833 = vmatpush1.bf16.msra.mxu0 0
        %3834 = vmatprep.subr.bf16.mxu0 0
        %3835 = vmatpush1.bf16.msra.mxu0 0
        %3836 = vmatprep.subr.bf16.mxu0 0
        %3837 = vmatpush1.bf16.msra.mxu0 0
        %3838 = vmatprep.subr.bf16.mxu0 0
        %3839 = vmatpush1.bf16.msra.mxu0 %v3822
        %3840 = vmatprep.subr.bf16.mxu0 0
        %3841 = vmatpush2.bf16.msra.mxu0 0
        %3842 = vmatprep.subr.bf16.mxu0 0
        %3843 = vmatpush2.bf16.msra.mxu0 0
        %3844 = vmatprep.subr.bf16.mxu0 0
        %3845 = vmatpush2.bf16.msra.mxu0 0
        %3846 = vmatprep.subr.bf16.mxu0 0
        %3847 = vmatpush2.bf16.msra.mxu0 0
        %3848 = vmatprep.subr.bf16.mxu0 0
        %3849 = vmatpush2.bf16.msra.mxu0 0
        %3850 = vmatprep.subr.bf16.mxu0 0
        %3851 = vmatpush2.bf16.msra.mxu0 0
        %3852 = vmatprep.subr.bf16.mxu0 0
        %3853 = vmatpush2.bf16.msra.mxu0 0
        %3854 = vmatprep.subr.bf16.mxu0 0
        %3855 = vmatpush2.bf16.msra.mxu0 0
        %3856 = vmatprep.mubr.bf16.mxu0 0
        %3857 = vmatmul.mubr.bf16.gmra.mxu0 %v1975
        %v3858 = vpop.f32.mrf.mxu0
        %v3859 = vadd.f32 0.0, %v3858
        %v3860 = vpop.f32.mrf.mxu0
        %v3861 = vpop.f32.mrf.mxu0
        %v3862 = vpop.f32.mrf.mxu0
        %3863 = vdwg.mxu0
        %v3865 = vsel %vm483, %v3428, 0
        %3867 = vmatprep.subr.bf16.mxu0 0
        %3868 = vmatpush1.bf16.msra.mxu0 0
        %3869 = vmatprep.subr.bf16.mxu0 0
        %3870 = vmatpush1.bf16.msra.mxu0 0
        %3871 = vmatprep.subr.bf16.mxu0 0
        %3872 = vmatpush1.bf16.msra.mxu0 0
        %3873 = vmatprep.subr.bf16.mxu0 0
        %3874 = vmatpush1.bf16.msra.mxu0 0
        %3875 = vmatprep.subr.bf16.mxu0 0
        %3876 = vmatpush1.bf16.msra.mxu0 0
        %3877 = vmatprep.subr.bf16.mxu0 0
        %3878 = vmatpush1.bf16.msra.mxu0 0
        %3879 = vmatprep.subr.bf16.mxu0 0
        %3880 = vmatpush1.bf16.msra.mxu0 0
        %3881 = vmatprep.subr.bf16.mxu0 0
        %3882 = vmatpush1.bf16.msra.mxu0 %v3865
        %3883 = vmatprep.subr.bf16.mxu0 0
        %3884 = vmatpush2.bf16.msra.mxu0 0
        %3885 = vmatprep.subr.bf16.mxu0 0
        %3886 = vmatpush2.bf16.msra.mxu0 0
        %3887 = vmatprep.subr.bf16.mxu0 0
        %3888 = vmatpush2.bf16.msra.mxu0 0
        %3889 = vmatprep.subr.bf16.mxu0 0
        %3890 = vmatpush2.bf16.msra.mxu0 0
        %3891 = vmatprep.subr.bf16.mxu0 0
        %3892 = vmatpush2.bf16.msra.mxu0 0
        %3893 = vmatprep.subr.bf16.mxu0 0
        %3894 = vmatpush2.bf16.msra.mxu0 0
        %3895 = vmatprep.subr.bf16.mxu0 0
        %3896 = vmatpush2.bf16.msra.mxu0 0
        %3897 = vmatprep.subr.bf16.mxu0 0
        %3898 = vmatpush2.bf16.msra.mxu0 0
        %3899 = vmatprep.mubr.bf16.mxu0 0
        %3900 = vmatmul.mubr.bf16.gmra.mxu0 %v2021
        %v3901 = vpop.f32.mrf.mxu0
        %v3902 = vadd.f32 0.0, %v3901
        %v3903 = vpop.f32.mrf.mxu0
        %v3904 = vpop.f32.mrf.mxu0
        %v3905 = vpop.f32.mrf.mxu0
        %3906 = vdwg.mxu0
        %v3908 = vsel %vm483, %v3429, 0
        %3910 = vmatprep.subr.bf16.mxu0 0
        %3911 = vmatpush1.bf16.msra.mxu0 0
        %3912 = vmatprep.subr.bf16.mxu0 0
        %3913 = vmatpush1.bf16.msra.mxu0 0
        %3914 = vmatprep.subr.bf16.mxu0 0
        %3915 = vmatpush1.bf16.msra.mxu0 0
        %3916 = vmatprep.subr.bf16.mxu0 0
        %3917 = vmatpush1.bf16.msra.mxu0 0
        %3918 = vmatprep.subr.bf16.mxu0 0
        %3919 = vmatpush1.bf16.msra.mxu0 0
        %3920 = vmatprep.subr.bf16.mxu0 0
        %3921 = vmatpush1.bf16.msra.mxu0 0
        %3922 = vmatprep.subr.bf16.mxu0 0
        %3923 = vmatpush1.bf16.msra.mxu0 0
        %3924 = vmatprep.subr.bf16.mxu0 0
        %3925 = vmatpush1.bf16.msra.mxu0 %v3908
        %3926 = vmatprep.subr.bf16.mxu0 0
        %3927 = vmatpush2.bf16.msra.mxu0 0
        %3928 = vmatprep.subr.bf16.mxu0 0
        %3929 = vmatpush2.bf16.msra.mxu0 0
        %3930 = vmatprep.subr.bf16.mxu0 0
        %3931 = vmatpush2.bf16.msra.mxu0 0
        %3932 = vmatprep.subr.bf16.mxu0 0
        %3933 = vmatpush2.bf16.msra.mxu0 0
        %3934 = vmatprep.subr.bf16.mxu0 0
        %3935 = vmatpush2.bf16.msra.mxu0 0
        %3936 = vmatprep.subr.bf16.mxu0 0
        %3937 = vmatpush2.bf16.msra.mxu0 0
        %3938 = vmatprep.subr.bf16.mxu0 0
        %3939 = vmatpush2.bf16.msra.mxu0 0
        %3940 = vmatprep.subr.bf16.mxu0 0
        %3941 = vmatpush2.bf16.msra.mxu0 0
        %3942 = vmatprep.mubr.bf16.mxu0 0
        %3943 = vmatmul.mubr.bf16.gmra.mxu0 %v2067
        %v3944 = vpop.f32.mrf.mxu0
        %v3945 = vadd.f32 0.0, %v3944
        %v3946 = vpop.f32.mrf.mxu0
        %v3947 = vpop.f32.mrf.mxu0
        %v3948 = vpop.f32.mrf.mxu0
        %3949 = vdwg.mxu0
        %v3951 = vsel %vm483, %v3430, 0
        %3953 = vmatprep.subr.bf16.mxu0 0
        %3954 = vmatpush1.bf16.msra.mxu0 0
        %3955 = vmatprep.subr.bf16.mxu0 0
        %3956 = vmatpush1.bf16.msra.mxu0 0
        %3957 = vmatprep.subr.bf16.mxu0 0
        %3958 = vmatpush1.bf16.msra.mxu0 0
        %3959 = vmatprep.subr.bf16.mxu0 0
        %3960 = vmatpush1.bf16.msra.mxu0 0
        %3961 = vmatprep.subr.bf16.mxu0 0
        %3962 = vmatpush1.bf16.msra.mxu0 0
        %3963 = vmatprep.subr.bf16.mxu0 0
        %3964 = vmatpush1.bf16.msra.mxu0 0
        %3965 = vmatprep.subr.bf16.mxu0 0
        %3966 = vmatpush1.bf16.msra.mxu0 0
        %3967 = vmatprep.subr.bf16.mxu0 0
        %3968 = vmatpush1.bf16.msra.mxu0 %v3951
        %3969 = vmatprep.subr.bf16.mxu0 0
        %3970 = vmatpush2.bf16.msra.mxu0 0
        %3971 = vmatprep.subr.bf16.mxu0 0
        %3972 = vmatpush2.bf16.msra.mxu0 0
        %3973 = vmatprep.subr.bf16.mxu0 0
        %3974 = vmatpush2.bf16.msra.mxu0 0
        %3975 = vmatprep.subr.bf16.mxu0 0
        %3976 = vmatpush2.bf16.msra.mxu0 0
        %3977 = vmatprep.subr.bf16.mxu0 0
        %3978 = vmatpush2.bf16.msra.mxu0 0
        %3979 = vmatprep.subr.bf16.mxu0 0
        %3980 = vmatpush2.bf16.msra.mxu0 0
        %3981 = vmatprep.subr.bf16.mxu0 0
        %3982 = vmatpush2.bf16.msra.mxu0 0
        %3983 = vmatprep.subr.bf16.mxu0 0
        %3984 = vmatpush2.bf16.msra.mxu0 0
        %3985 = vmatprep.mubr.bf16.mxu0 0
        %3986 = vmatmul.mubr.bf16.gmra.mxu0 %v2113
        %v3987 = vpop.f32.mrf.mxu0
        %v3988 = vadd.f32 0.0, %v3987
        %v3989 = vpop.f32.mrf.mxu0
        %v3990 = vpop.f32.mrf.mxu0
        %v3991 = vpop.f32.mrf.mxu0
        %3992 = vdwg.mxu0
        %v3994 = vsel %vm483, %v3431, 0
        %3996 = vmatprep.subr.bf16.mxu0 0
        %3997 = vmatpush1.bf16.msra.mxu0 0
        %3998 = vmatprep.subr.bf16.mxu0 0
        %3999 = vmatpush1.bf16.msra.mxu0 0
        %4000 = vmatprep.subr.bf16.mxu0 0
        %4001 = vmatpush1.bf16.msra.mxu0 0
        %4002 = vmatprep.subr.bf16.mxu0 0
        %4003 = vmatpush1.bf16.msra.mxu0 0
        %4004 = vmatprep.subr.bf16.mxu0 0
        %4005 = vmatpush1.bf16.msra.mxu0 0
        %4006 = vmatprep.subr.bf16.mxu0 0
        %4007 = vmatpush1.bf16.msra.mxu0 0
        %4008 = vmatprep.subr.bf16.mxu0 0
        %4009 = vmatpush1.bf16.msra.mxu0 0
        %4010 = vmatprep.subr.bf16.mxu0 0
        %4011 = vmatpush1.bf16.msra.mxu0 %v3994
        %4012 = vmatprep.subr.bf16.mxu0 0
        %4013 = vmatpush2.bf16.msra.mxu0 0
        %4014 = vmatprep.subr.bf16.mxu0 0
        %4015 = vmatpush2.bf16.msra.mxu0 0
        %4016 = vmatprep.subr.bf16.mxu0 0
        %4017 = vmatpush2.bf16.msra.mxu0 0
        %4018 = vmatprep.subr.bf16.mxu0 0
        %4019 = vmatpush2.bf16.msra.mxu0 0
        %4020 = vmatprep.subr.bf16.mxu0 0
        %4021 = vmatpush2.bf16.msra.mxu0 0
        %4022 = vmatprep.subr.bf16.mxu0 0
        %4023 = vmatpush2.bf16.msra.mxu0 0
        %4024 = vmatprep.subr.bf16.mxu0 0
        %4025 = vmatpush2.bf16.msra.mxu0 0
        %4026 = vmatprep.subr.bf16.mxu0 0
        %4027 = vmatpush2.bf16.msra.mxu0 0
        %4028 = vmatprep.mubr.bf16.mxu0 0
        %4029 = vmatmul.mubr.bf16.gmra.mxu0 %v2159
        %v4030 = vpop.f32.mrf.mxu0
        %v4031 = vadd.f32 0.0, %v4030
        %v4032 = vpop.f32.mrf.mxu0
        %v4033 = vpop.f32.mrf.mxu0
        %v4034 = vpop.f32.mrf.mxu0
        %4035 = vdwg.mxu0
        %v4037 = vsel %vm483, %v3432, 0
        %4039 = vmatprep.subr.bf16.mxu0 0
        %4040 = vmatpush1.bf16.msra.mxu0 0
        %4041 = vmatprep.subr.bf16.mxu0 0
        %4042 = vmatpush1.bf16.msra.mxu0 0
        %4043 = vmatprep.subr.bf16.mxu0 0
        %4044 = vmatpush1.bf16.msra.mxu0 0
        %4045 = vmatprep.subr.bf16.mxu0 0
        %4046 = vmatpush1.bf16.msra.mxu0 0
        %4047 = vmatprep.subr.bf16.mxu0 0
        %4048 = vmatpush1.bf16.msra.mxu0 0
        %4049 = vmatprep.subr.bf16.mxu0 0
        %4050 = vmatpush1.bf16.msra.mxu0 0
        %4051 = vmatprep.subr.bf16.mxu0 0
        %4052 = vmatpush1.bf16.msra.mxu0 0
        %4053 = vmatprep.subr.bf16.mxu0 0
        %4054 = vmatpush1.bf16.msra.mxu0 %v4037
        %4055 = vmatprep.subr.bf16.mxu0 0
        %4056 = vmatpush2.bf16.msra.mxu0 0
        %4057 = vmatprep.subr.bf16.mxu0 0
        %4058 = vmatpush2.bf16.msra.mxu0 0
        %4059 = vmatprep.subr.bf16.mxu0 0
        %4060 = vmatpush2.bf16.msra.mxu0 0
        %4061 = vmatprep.subr.bf16.mxu0 0
        %4062 = vmatpush2.bf16.msra.mxu0 0
        %4063 = vmatprep.subr.bf16.mxu0 0
        %4064 = vmatpush2.bf16.msra.mxu0 0
        %4065 = vmatprep.subr.bf16.mxu0 0
        %4066 = vmatpush2.bf16.msra.mxu0 0
        %4067 = vmatprep.subr.bf16.mxu0 0
        %4068 = vmatpush2.bf16.msra.mxu0 0
        %4069 = vmatprep.subr.bf16.mxu0 0
        %4070 = vmatpush2.bf16.msra.mxu0 0
        %4071 = vmatprep.mubr.bf16.mxu0 0
        %4072 = vmatmul.mubr.bf16.gmra.mxu0 %v2205
        %v4073 = vpop.f32.mrf.mxu0
        %v4074 = vadd.f32 0.0, %v4073
        %v4075 = vpop.f32.mrf.mxu0
        %v4076 = vpop.f32.mrf.mxu0
        %v4077 = vpop.f32.mrf.mxu0
        %4078 = vdwg.mxu0
        %v4080 = vsel %vm483, %v3433, 0
        %4082 = vmatprep.subr.bf16.mxu0 0
        %4083 = vmatpush1.bf16.msra.mxu0 0
        %4084 = vmatprep.subr.bf16.mxu0 0
        %4085 = vmatpush1.bf16.msra.mxu0 0
        %4086 = vmatprep.subr.bf16.mxu0 0
        %4087 = vmatpush1.bf16.msra.mxu0 0
        %4088 = vmatprep.subr.bf16.mxu0 0
        %4089 = vmatpush1.bf16.msra.mxu0 0
        %4090 = vmatprep.subr.bf16.mxu0 0
        %4091 = vmatpush1.bf16.msra.mxu0 0
        %4092 = vmatprep.subr.bf16.mxu0 0
        %4093 = vmatpush1.bf16.msra.mxu0 0
        %4094 = vmatprep.subr.bf16.mxu0 0
        %4095 = vmatpush1.bf16.msra.mxu0 0
        %4096 = vmatprep.subr.bf16.mxu0 0
        %4097 = vmatpush1.bf16.msra.mxu0 %v4080
        %4098 = vmatprep.subr.bf16.mxu0 0
        %4099 = vmatpush2.bf16.msra.mxu0 0
        %4100 = vmatprep.subr.bf16.mxu0 0
        %4101 = vmatpush2.bf16.msra.mxu0 0
        %4102 = vmatprep.subr.bf16.mxu0 0
        %4103 = vmatpush2.bf16.msra.mxu0 0
        %4104 = vmatprep.subr.bf16.mxu0 0
        %4105 = vmatpush2.bf16.msra.mxu0 0
        %4106 = vmatprep.subr.bf16.mxu0 0
        %4107 = vmatpush2.bf16.msra.mxu0 0
        %4108 = vmatprep.subr.bf16.mxu0 0
        %4109 = vmatpush2.bf16.msra.mxu0 0
        %4110 = vmatprep.subr.bf16.mxu0 0
        %4111 = vmatpush2.bf16.msra.mxu0 0
        %4112 = vmatprep.subr.bf16.mxu0 0
        %4113 = vmatpush2.bf16.msra.mxu0 0
        %4114 = vmatprep.mubr.bf16.mxu0 0
        %4115 = vmatmul.mubr.bf16.gmra.mxu0 %v2251
        %v4116 = vpop.f32.mrf.mxu0
        %v4117 = vadd.f32 0.0, %v4116
        %v4118 = vpop.f32.mrf.mxu0
        %v4119 = vpop.f32.mrf.mxu0
        %v4120 = vpop.f32.mrf.mxu0
        %4121 = vdwg.mxu0
        %v4122 = vlaneseq
        %v4123 = vshrl.u32 %v4122, 7
        %v4124 = vsub.s32 3, %v4123
        %v4125 = vrot.slane %v417, %v4124
        %v4126 = vadd.f32 %v3472, %v4125
        %v4127 = vadd.f32 %v3515, %v4125
        %v4128 = vadd.f32 %v3558, %v4125
        %v4129 = vadd.f32 %v3601, %v4125
        %v4130 = vadd.f32 %v3644, %v4125
        %v4131 = vadd.f32 %v3687, %v4125
        %v4132 = vadd.f32 %v3730, %v4125
        %v4133 = vadd.f32 %v3773, %v4125
        %v4134 = vadd.f32 %v3816, %v4125
        %v4135 = vadd.f32 %v3859, %v4125
        %v4136 = vadd.f32 %v3902, %v4125
        %v4137 = vadd.f32 %v3945, %v4125
        %v4138 = vadd.f32 %v3988, %v4125
        %v4139 = vadd.f32 %v4031, %v4125
        %v4140 = vadd.f32 %v4074, %v4125
        %v4141 = vadd.f32 %v4117, %v4125
        %v4158 = vunpack.c.l.b16 %v400
        %v4159 = vunpack.c.l.b16 %v401
        %v4160 = vunpack.c.l.b16 %v402
        %v4161 = vunpack.c.l.b16 %v403
        %v4162 = vunpack.c.l.b16 %v404
        %v4163 = vunpack.c.l.b16 %v405
        %v4164 = vunpack.c.l.b16 %v406
        %v4165 = vunpack.c.l.b16 %v407
        %v4166 = vunpack.c.l.b16 %v408
        %v4167 = vunpack.c.l.b16 %v409
        %v4168 = vunpack.c.l.b16 %v410
        %v4169 = vunpack.c.l.b16 %v411
        %v4170 = vunpack.c.l.b16 %v412
        %v4171 = vunpack.c.l.b16 %v413
        %v4172 = vunpack.c.l.b16 %v414
        %v4173 = vunpack.c.l.b16 %v415
        %v4174 = vpack.c.b16 %v4159, %v4158
        %v4175 = vpack.c.b16 %v4161, %v4160
        %v4176 = vpack.c.b16 %v4163, %v4162
        %v4177 = vpack.c.b16 %v4165, %v4164
        %v4178 = vpack.c.b16 %v4167, %v4166
        %v4179 = vpack.c.b16 %v4169, %v4168
        %v4180 = vpack.c.b16 %v4171, %v4170
        %v4181 = vpack.c.b16 %v4173, %v4172
        %4190 = vmatprep.subr.bf16.mxu0 0
        %4191 = vmatpush1.bf16.msra.mxu0 %v4181
        %4192 = vmatprep.subr.bf16.mxu0 0
        %4193 = vmatpush1.bf16.msra.mxu0 %v4180
        %4194 = vmatprep.subr.bf16.mxu0 0
        %4195 = vmatpush1.bf16.msra.mxu0 %v4179
        %4196 = vmatprep.subr.bf16.mxu0 0
        %4197 = vmatpush1.bf16.msra.mxu0 %v4178
        %4198 = vmatprep.subr.bf16.mxu0 0
        %4199 = vmatpush1.bf16.msra.mxu0 %v4177
        %4200 = vmatprep.subr.bf16.mxu0 0
        %4201 = vmatpush1.bf16.msra.mxu0 %v4176
        %4202 = vmatprep.subr.bf16.mxu0 0
        %4203 = vmatpush1.bf16.msra.mxu0 %v4175
        %4204 = vmatprep.subr.bf16.mxu0 0
        %4205 = vmatpush1.bf16.msra.mxu0 %v4174
        %4206 = vmatprep.subr.bf16.mxu0 0
        %4207 = vmatpush2.bf16.msra.mxu0 0
        %4208 = vmatprep.subr.bf16.mxu0 0
        %4209 = vmatpush2.bf16.msra.mxu0 0
        %4210 = vmatprep.subr.bf16.mxu0 0
        %4211 = vmatpush2.bf16.msra.mxu0 0
        %4212 = vmatprep.subr.bf16.mxu0 0
        %4213 = vmatpush2.bf16.msra.mxu0 0
        %4214 = vmatprep.subr.bf16.mxu0 0
        %4215 = vmatpush2.bf16.msra.mxu0 0
        %4216 = vmatprep.subr.bf16.mxu0 0
        %4217 = vmatpush2.bf16.msra.mxu0 0
        %4218 = vmatprep.subr.bf16.mxu0 0
        %4219 = vmatpush2.bf16.msra.mxu0 0
        %4220 = vmatprep.subr.bf16.mxu0 0
        %4221 = vmatpush2.bf16.msra.mxu0 0
        %4222 = vmatprep.mubr.bf16.mxu0 0
        %4223 = vmatmul.mubr.bf16.gmra.mxu0 %v2332
        %v4224 = vpop.f32.mrf.mxu0
        %v4225 = vadd.f32 0.0, %v4224
        %v4226 = vpop.f32.mrf.mxu0
        %v4227 = vpop.f32.mrf.mxu0
        %v4228 = vadd.f32 0.0, %v4227
        %v4229 = vpop.f32.mrf.mxu0
        %4230 = vmatprep.mubr.bf16.mxu0 0
        %4231 = vmatmul.mubr.bf16.gmra.mxu0 %v2333
        %v4232 = vpop.f32.mrf.mxu0
        %v4233 = vadd.f32 0.0, %v4232
        %v4234 = vpop.f32.mrf.mxu0
        %v4235 = vpop.f32.mrf.mxu0
        %v4236 = vadd.f32 0.0, %v4235
        %v4237 = vpop.f32.mrf.mxu0
        %4238 = vmatprep.mubr.bf16.mxu0 0
        %4239 = vmatmul.mubr.bf16.gmra.mxu0 %v2334
        %v4240 = vpop.f32.mrf.mxu0
        %v4241 = vadd.f32 0.0, %v4240
        %v4242 = vpop.f32.mrf.mxu0
        %v4243 = vpop.f32.mrf.mxu0
        %v4244 = vadd.f32 0.0, %v4243
        %v4245 = vpop.f32.mrf.mxu0
        %4246 = vmatprep.mubr.bf16.mxu0 0
        %4247 = vmatmul.mubr.bf16.gmra.mxu0 %v2335
        %v4248 = vpop.f32.mrf.mxu0
        %v4249 = vadd.f32 0.0, %v4248
        %v4250 = vpop.f32.mrf.mxu0
        %v4251 = vpop.f32.mrf.mxu0
        %v4252 = vadd.f32 0.0, %v4251
        %v4253 = vpop.f32.mrf.mxu0
        %4254 = vmatprep.mubr.bf16.mxu0 0
        %4255 = vmatmul.mubr.bf16.gmra.mxu0 %v2336
        %v4256 = vpop.f32.mrf.mxu0
        %v4257 = vadd.f32 0.0, %v4256
        %v4258 = vpop.f32.mrf.mxu0
        %v4259 = vpop.f32.mrf.mxu0
        %v4260 = vadd.f32 0.0, %v4259
        %v4261 = vpop.f32.mrf.mxu0
        %4262 = vmatprep.mubr.bf16.mxu0 0
        %4263 = vmatmul.mubr.bf16.gmra.mxu0 %v2337
        %v4264 = vpop.f32.mrf.mxu0
        %v4265 = vadd.f32 0.0, %v4264
        %v4266 = vpop.f32.mrf.mxu0
        %v4267 = vpop.f32.mrf.mxu0
        %v4268 = vadd.f32 0.0, %v4267
        %v4269 = vpop.f32.mrf.mxu0
        %4270 = vmatprep.mubr.bf16.mxu0 0
        %4271 = vmatmul.mubr.bf16.gmra.mxu0 %v2338
        %v4272 = vpop.f32.mrf.mxu0
        %v4273 = vadd.f32 0.0, %v4272
        %v4274 = vpop.f32.mrf.mxu0
        %v4275 = vpop.f32.mrf.mxu0
        %v4276 = vadd.f32 0.0, %v4275
        %v4277 = vpop.f32.mrf.mxu0
        %4278 = vmatprep.mubr.bf16.mxu0 0
        %4279 = vmatmul.mubr.bf16.gmra.mxu0 %v2339
        %v4280 = vpop.f32.mrf.mxu0
        %v4281 = vadd.f32 0.0, %v4280
        %v4282 = vpop.f32.mrf.mxu0
        %v4283 = vpop.f32.mrf.mxu0
        %v4284 = vadd.f32 0.0, %v4283
        %v4285 = vpop.f32.mrf.mxu0
        %4286 = vdwg.mxu0
        %v4287 = vpack.c.bf16 %v4228, %v4225
        %v4288 = vpack.c.bf16 %v4236, %v4233
        %v4289 = vpack.c.bf16 %v4244, %v4241
        %v4290 = vpack.c.bf16 %v4252, %v4249
        %v4291 = vpack.c.bf16 %v4260, %v4257
        %v4292 = vpack.c.bf16 %v4268, %v4265
        %v4293 = vpack.c.bf16 %v4276, %v4273
        %v4294 = vpack.c.bf16 %v4284, %v4281
        %v4303 = vunpack.c.l.b16 %v4287
        %v4304 = vunpack.c.h.b16 %v4287
        %v4305 = vunpack.c.l.b16 %v4288
        %v4306 = vunpack.c.h.b16 %v4288
        %v4307 = vunpack.c.l.b16 %v4289
        %v4308 = vunpack.c.h.b16 %v4289
        %v4309 = vunpack.c.l.b16 %v4290
        %v4310 = vunpack.c.h.b16 %v4290
        %v4311 = vunpack.c.l.b16 %v4291
        %v4312 = vunpack.c.h.b16 %v4291
        %v4313 = vunpack.c.l.b16 %v4292
        %v4314 = vunpack.c.h.b16 %v4292
        %v4315 = vunpack.c.l.b16 %v4293
        %v4316 = vunpack.c.h.b16 %v4293
        %v4317 = vunpack.c.l.b16 %v4294
        %v4318 = vunpack.c.h.b16 %v4294
        %v4319 = vpack.c.b16 %v4303, %v4303
        %v4320 = vpack.c.b16 %v4304, %v4304
        %v4321 = vpack.c.b16 %v4305, %v4305
        %v4322 = vpack.c.b16 %v4306, %v4306
        %v4323 = vpack.c.b16 %v4307, %v4307
        %v4324 = vpack.c.b16 %v4308, %v4308
        %v4325 = vpack.c.b16 %v4309, %v4309
        %v4326 = vpack.c.b16 %v4310, %v4310
        %v4327 = vpack.c.b16 %v4311, %v4311
        %v4328 = vpack.c.b16 %v4312, %v4312
        %v4329 = vpack.c.b16 %v4313, %v4313
        %v4330 = vpack.c.b16 %v4314, %v4314
        %v4331 = vpack.c.b16 %v4315, %v4315
        %v4332 = vpack.c.b16 %v4316, %v4316
        %v4333 = vpack.c.b16 %v4317, %v4317
        %v4334 = vpack.c.b16 %v4318, %v4318
        %v4336 = vsel %vm483, %v4319, 0
        %4338 = vmatprep.subr.bf16.mxu0 0
        %4339 = vmatpush1.bf16.msra.mxu0 0
        %4340 = vmatprep.subr.bf16.mxu0 0
        %4341 = vmatpush1.bf16.msra.mxu0 0
        %4342 = vmatprep.subr.bf16.mxu0 0
        %4343 = vmatpush1.bf16.msra.mxu0 0
        %4344 = vmatprep.subr.bf16.mxu0 0
        %4345 = vmatpush1.bf16.msra.mxu0 0
        %4346 = vmatprep.subr.bf16.mxu0 0
        %4347 = vmatpush1.bf16.msra.mxu0 0
        %4348 = vmatprep.subr.bf16.mxu0 0
        %4349 = vmatpush1.bf16.msra.mxu0 0
        %4350 = vmatprep.subr.bf16.mxu0 0
        %4351 = vmatpush1.bf16.msra.mxu0 0
        %4352 = vmatprep.subr.bf16.mxu0 0
        %4353 = vmatpush1.bf16.msra.mxu0 %v4336
        %4354 = vmatprep.subr.bf16.mxu0 0
        %4355 = vmatpush2.bf16.msra.mxu0 0
        %4356 = vmatprep.subr.bf16.mxu0 0
        %4357 = vmatpush2.bf16.msra.mxu0 0
        %4358 = vmatprep.subr.bf16.mxu0 0
        %4359 = vmatpush2.bf16.msra.mxu0 0
        %4360 = vmatprep.subr.bf16.mxu0 0
        %4361 = vmatpush2.bf16.msra.mxu0 0
        %4362 = vmatprep.subr.bf16.mxu0 0
        %4363 = vmatpush2.bf16.msra.mxu0 0
        %4364 = vmatprep.subr.bf16.mxu0 0
        %4365 = vmatpush2.bf16.msra.mxu0 0
        %4366 = vmatprep.subr.bf16.mxu0 0
        %4367 = vmatpush2.bf16.msra.mxu0 0
        %4368 = vmatprep.subr.bf16.mxu0 0
        %4369 = vmatpush2.bf16.msra.mxu0 0
        %4370 = vmatprep.mubr.bf16.mxu0 0
        %4371 = vmatmul.mubr.bf16.gmra.mxu0 %v1561
        %v4372 = vpop.f32.mrf.mxu0
        %v4373 = vadd.f32 0.0, %v4372
        %v4374 = vpop.f32.mrf.mxu0
        %v4375 = vpop.f32.mrf.mxu0
        %v4376 = vpop.f32.mrf.mxu0
        %4377 = vdwg.mxu0
        %v4379 = vsel %vm483, %v4320, 0
        %4381 = vmatprep.subr.bf16.mxu0 0
        %4382 = vmatpush1.bf16.msra.mxu0 0
        %4383 = vmatprep.subr.bf16.mxu0 0
        %4384 = vmatpush1.bf16.msra.mxu0 0
        %4385 = vmatprep.subr.bf16.mxu0 0
        %4386 = vmatpush1.bf16.msra.mxu0 0
        %4387 = vmatprep.subr.bf16.mxu0 0
        %4388 = vmatpush1.bf16.msra.mxu0 0
        %4389 = vmatprep.subr.bf16.mxu0 0
        %4390 = vmatpush1.bf16.msra.mxu0 0
        %4391 = vmatprep.subr.bf16.mxu0 0
        %4392 = vmatpush1.bf16.msra.mxu0 0
        %4393 = vmatprep.subr.bf16.mxu0 0
        %4394 = vmatpush1.bf16.msra.mxu0 0
        %4395 = vmatprep.subr.bf16.mxu0 0
        %4396 = vmatpush1.bf16.msra.mxu0 %v4379
        %4397 = vmatprep.subr.bf16.mxu0 0
        %4398 = vmatpush2.bf16.msra.mxu0 0
        %4399 = vmatprep.subr.bf16.mxu0 0
        %4400 = vmatpush2.bf16.msra.mxu0 0
        %4401 = vmatprep.subr.bf16.mxu0 0
        %4402 = vmatpush2.bf16.msra.mxu0 0
        %4403 = vmatprep.subr.bf16.mxu0 0
        %4404 = vmatpush2.bf16.msra.mxu0 0
        %4405 = vmatprep.subr.bf16.mxu0 0
        %4406 = vmatpush2.bf16.msra.mxu0 0
        %4407 = vmatprep.subr.bf16.mxu0 0
        %4408 = vmatpush2.bf16.msra.mxu0 0
        %4409 = vmatprep.subr.bf16.mxu0 0
        %4410 = vmatpush2.bf16.msra.mxu0 0
        %4411 = vmatprep.subr.bf16.mxu0 0
        %4412 = vmatpush2.bf16.msra.mxu0 0
        %4413 = vmatprep.mubr.bf16.mxu0 0
        %4414 = vmatmul.mubr.bf16.gmra.mxu0 %v1607
        %v4415 = vpop.f32.mrf.mxu0
        %v4416 = vadd.f32 0.0, %v4415
        %v4417 = vpop.f32.mrf.mxu0
        %v4418 = vpop.f32.mrf.mxu0
        %v4419 = vpop.f32.mrf.mxu0
        %4420 = vdwg.mxu0
        %v4422 = vsel %vm483, %v4321, 0
        %4424 = vmatprep.subr.bf16.mxu0 0
        %4425 = vmatpush1.bf16.msra.mxu0 0
        %4426 = vmatprep.subr.bf16.mxu0 0
        %4427 = vmatpush1.bf16.msra.mxu0 0
        %4428 = vmatprep.subr.bf16.mxu0 0
        %4429 = vmatpush1.bf16.msra.mxu0 0
        %4430 = vmatprep.subr.bf16.mxu0 0
        %4431 = vmatpush1.bf16.msra.mxu0 0
        %4432 = vmatprep.subr.bf16.mxu0 0
        %4433 = vmatpush1.bf16.msra.mxu0 0
        %4434 = vmatprep.subr.bf16.mxu0 0
        %4435 = vmatpush1.bf16.msra.mxu0 0
        %4436 = vmatprep.subr.bf16.mxu0 0
        %4437 = vmatpush1.bf16.msra.mxu0 0
        %4438 = vmatprep.subr.bf16.mxu0 0
        %4439 = vmatpush1.bf16.msra.mxu0 %v4422
        %4440 = vmatprep.subr.bf16.mxu0 0
        %4441 = vmatpush2.bf16.msra.mxu0 0
        %4442 = vmatprep.subr.bf16.mxu0 0
        %4443 = vmatpush2.bf16.msra.mxu0 0
        %4444 = vmatprep.subr.bf16.mxu0 0
        %4445 = vmatpush2.bf16.msra.mxu0 0
        %4446 = vmatprep.subr.bf16.mxu0 0
        %4447 = vmatpush2.bf16.msra.mxu0 0
        %4448 = vmatprep.subr.bf16.mxu0 0
        %4449 = vmatpush2.bf16.msra.mxu0 0
        %4450 = vmatprep.subr.bf16.mxu0 0
        %4451 = vmatpush2.bf16.msra.mxu0 0
        %4452 = vmatprep.subr.bf16.mxu0 0
        %4453 = vmatpush2.bf16.msra.mxu0 0
        %4454 = vmatprep.subr.bf16.mxu0 0
        %4455 = vmatpush2.bf16.msra.mxu0 0
        %4456 = vmatprep.mubr.bf16.mxu0 0
        %4457 = vmatmul.mubr.bf16.gmra.mxu0 %v1653
        %v4458 = vpop.f32.mrf.mxu0
        %v4459 = vadd.f32 0.0, %v4458
        %v4460 = vpop.f32.mrf.mxu0
        %v4461 = vpop.f32.mrf.mxu0
        %v4462 = vpop.f32.mrf.mxu0
        %4463 = vdwg.mxu0
        %v4465 = vsel %vm483, %v4322, 0
        %4467 = vmatprep.subr.bf16.mxu0 0
        %4468 = vmatpush1.bf16.msra.mxu0 0
        %4469 = vmatprep.subr.bf16.mxu0 0
        %4470 = vmatpush1.bf16.msra.mxu0 0
        %4471 = vmatprep.subr.bf16.mxu0 0
        %4472 = vmatpush1.bf16.msra.mxu0 0
        %4473 = vmatprep.subr.bf16.mxu0 0
        %4474 = vmatpush1.bf16.msra.mxu0 0
        %4475 = vmatprep.subr.bf16.mxu0 0
        %4476 = vmatpush1.bf16.msra.mxu0 0
        %4477 = vmatprep.subr.bf16.mxu0 0
        %4478 = vmatpush1.bf16.msra.mxu0 0
        %4479 = vmatprep.subr.bf16.mxu0 0
        %4480 = vmatpush1.bf16.msra.mxu0 0
        %4481 = vmatprep.subr.bf16.mxu0 0
        %4482 = vmatpush1.bf16.msra.mxu0 %v4465
        %4483 = vmatprep.subr.bf16.mxu0 0
        %4484 = vmatpush2.bf16.msra.mxu0 0
        %4485 = vmatprep.subr.bf16.mxu0 0
        %4486 = vmatpush2.bf16.msra.mxu0 0
        %4487 = vmatprep.subr.bf16.mxu0 0
        %4488 = vmatpush2.bf16.msra.mxu0 0
        %4489 = vmatprep.subr.bf16.mxu0 0
        %4490 = vmatpush2.bf16.msra.mxu0 0
        %4491 = vmatprep.subr.bf16.mxu0 0
        %4492 = vmatpush2.bf16.msra.mxu0 0
        %4493 = vmatprep.subr.bf16.mxu0 0
        %4494 = vmatpush2.bf16.msra.mxu0 0
        %4495 = vmatprep.subr.bf16.mxu0 0
        %4496 = vmatpush2.bf16.msra.mxu0 0
        %4497 = vmatprep.subr.bf16.mxu0 0
        %4498 = vmatpush2.bf16.msra.mxu0 0
        %4499 = vmatprep.mubr.bf16.mxu0 0
        %4500 = vmatmul.mubr.bf16.gmra.mxu0 %v1699
        %v4501 = vpop.f32.mrf.mxu0
        %v4502 = vadd.f32 0.0, %v4501
        %v4503 = vpop.f32.mrf.mxu0
        %v4504 = vpop.f32.mrf.mxu0
        %v4505 = vpop.f32.mrf.mxu0
        %4506 = vdwg.mxu0
        %v4508 = vsel %vm483, %v4323, 0
        %4510 = vmatprep.subr.bf16.mxu0 0
        %4511 = vmatpush1.bf16.msra.mxu0 0
        %4512 = vmatprep.subr.bf16.mxu0 0
        %4513 = vmatpush1.bf16.msra.mxu0 0
        %4514 = vmatprep.subr.bf16.mxu0 0
        %4515 = vmatpush1.bf16.msra.mxu0 0
        %4516 = vmatprep.subr.bf16.mxu0 0
        %4517 = vmatpush1.bf16.msra.mxu0 0
        %4518 = vmatprep.subr.bf16.mxu0 0
        %4519 = vmatpush1.bf16.msra.mxu0 0
        %4520 = vmatprep.subr.bf16.mxu0 0
        %4521 = vmatpush1.bf16.msra.mxu0 0
        %4522 = vmatprep.subr.bf16.mxu0 0
        %4523 = vmatpush1.bf16.msra.mxu0 0
        %4524 = vmatprep.subr.bf16.mxu0 0
        %4525 = vmatpush1.bf16.msra.mxu0 %v4508
        %4526 = vmatprep.subr.bf16.mxu0 0
        %4527 = vmatpush2.bf16.msra.mxu0 0
        %4528 = vmatprep.subr.bf16.mxu0 0
        %4529 = vmatpush2.bf16.msra.mxu0 0
        %4530 = vmatprep.subr.bf16.mxu0 0
        %4531 = vmatpush2.bf16.msra.mxu0 0
        %4532 = vmatprep.subr.bf16.mxu0 0
        %4533 = vmatpush2.bf16.msra.mxu0 0
        %4534 = vmatprep.subr.bf16.mxu0 0
        %4535 = vmatpush2.bf16.msra.mxu0 0
        %4536 = vmatprep.subr.bf16.mxu0 0
        %4537 = vmatpush2.bf16.msra.mxu0 0
        %4538 = vmatprep.subr.bf16.mxu0 0
        %4539 = vmatpush2.bf16.msra.mxu0 0
        %4540 = vmatprep.subr.bf16.mxu0 0
        %4541 = vmatpush2.bf16.msra.mxu0 0
        %4542 = vmatprep.mubr.bf16.mxu0 0
        %4543 = vmatmul.mubr.bf16.gmra.mxu0 %v1745
        %v4544 = vpop.f32.mrf.mxu0
        %v4545 = vadd.f32 0.0, %v4544
        %v4546 = vpop.f32.mrf.mxu0
        %v4547 = vpop.f32.mrf.mxu0
        %v4548 = vpop.f32.mrf.mxu0
        %4549 = vdwg.mxu0
        %v4551 = vsel %vm483, %v4324, 0
        %4553 = vmatprep.subr.bf16.mxu0 0
        %4554 = vmatpush1.bf16.msra.mxu0 0
        %4555 = vmatprep.subr.bf16.mxu0 0
        %4556 = vmatpush1.bf16.msra.mxu0 0
        %4557 = vmatprep.subr.bf16.mxu0 0
        %4558 = vmatpush1.bf16.msra.mxu0 0
        %4559 = vmatprep.subr.bf16.mxu0 0
        %4560 = vmatpush1.bf16.msra.mxu0 0
        %4561 = vmatprep.subr.bf16.mxu0 0
        %4562 = vmatpush1.bf16.msra.mxu0 0
        %4563 = vmatprep.subr.bf16.mxu0 0
        %4564 = vmatpush1.bf16.msra.mxu0 0
        %4565 = vmatprep.subr.bf16.mxu0 0
        %4566 = vmatpush1.bf16.msra.mxu0 0
        %4567 = vmatprep.subr.bf16.mxu0 0
        %4568 = vmatpush1.bf16.msra.mxu0 %v4551
        %4569 = vmatprep.subr.bf16.mxu0 0
        %4570 = vmatpush2.bf16.msra.mxu0 0
        %4571 = vmatprep.subr.bf16.mxu0 0
        %4572 = vmatpush2.bf16.msra.mxu0 0
        %4573 = vmatprep.subr.bf16.mxu0 0
        %4574 = vmatpush2.bf16.msra.mxu0 0
        %4575 = vmatprep.subr.bf16.mxu0 0
        %4576 = vmatpush2.bf16.msra.mxu0 0
        %4577 = vmatprep.subr.bf16.mxu0 0
        %4578 = vmatpush2.bf16.msra.mxu0 0
        %4579 = vmatprep.subr.bf16.mxu0 0
        %4580 = vmatpush2.bf16.msra.mxu0 0
        %4581 = vmatprep.subr.bf16.mxu0 0
        %4582 = vmatpush2.bf16.msra.mxu0 0
        %4583 = vmatprep.subr.bf16.mxu0 0
        %4584 = vmatpush2.bf16.msra.mxu0 0
        %4585 = vmatprep.mubr.bf16.mxu0 0
        %4586 = vmatmul.mubr.bf16.gmra.mxu0 %v1791
        %v4587 = vpop.f32.mrf.mxu0
        %v4588 = vadd.f32 0.0, %v4587
        %v4589 = vpop.f32.mrf.mxu0
        %v4590 = vpop.f32.mrf.mxu0
        %v4591 = vpop.f32.mrf.mxu0
        %4592 = vdwg.mxu0
        %v4594 = vsel %vm483, %v4325, 0
        %4596 = vmatprep.subr.bf16.mxu0 0
        %4597 = vmatpush1.bf16.msra.mxu0 0
        %4598 = vmatprep.subr.bf16.mxu0 0
        %4599 = vmatpush1.bf16.msra.mxu0 0
        %4600 = vmatprep.subr.bf16.mxu0 0
        %4601 = vmatpush1.bf16.msra.mxu0 0
        %4602 = vmatprep.subr.bf16.mxu0 0
        %4603 = vmatpush1.bf16.msra.mxu0 0
        %4604 = vmatprep.subr.bf16.mxu0 0
        %4605 = vmatpush1.bf16.msra.mxu0 0
        %4606 = vmatprep.subr.bf16.mxu0 0
        %4607 = vmatpush1.bf16.msra.mxu0 0
        %4608 = vmatprep.subr.bf16.mxu0 0
        %4609 = vmatpush1.bf16.msra.mxu0 0
        %4610 = vmatprep.subr.bf16.mxu0 0
        %4611 = vmatpush1.bf16.msra.mxu0 %v4594
        %4612 = vmatprep.subr.bf16.mxu0 0
        %4613 = vmatpush2.bf16.msra.mxu0 0
        %4614 = vmatprep.subr.bf16.mxu0 0
        %4615 = vmatpush2.bf16.msra.mxu0 0
        %4616 = vmatprep.subr.bf16.mxu0 0
        %4617 = vmatpush2.bf16.msra.mxu0 0
        %4618 = vmatprep.subr.bf16.mxu0 0
        %4619 = vmatpush2.bf16.msra.mxu0 0
        %4620 = vmatprep.subr.bf16.mxu0 0
        %4621 = vmatpush2.bf16.msra.mxu0 0
        %4622 = vmatprep.subr.bf16.mxu0 0
        %4623 = vmatpush2.bf16.msra.mxu0 0
        %4624 = vmatprep.subr.bf16.mxu0 0
        %4625 = vmatpush2.bf16.msra.mxu0 0
        %4626 = vmatprep.subr.bf16.mxu0 0
        %4627 = vmatpush2.bf16.msra.mxu0 0
        %4628 = vmatprep.mubr.bf16.mxu0 0
        %4629 = vmatmul.mubr.bf16.gmra.mxu0 %v1837
        %v4630 = vpop.f32.mrf.mxu0
        %v4631 = vadd.f32 0.0, %v4630
        %v4632 = vpop.f32.mrf.mxu0
        %v4633 = vpop.f32.mrf.mxu0
        %v4634 = vpop.f32.mrf.mxu0
        %4635 = vdwg.mxu0
        %v4637 = vsel %vm483, %v4326, 0
        %4639 = vmatprep.subr.bf16.mxu0 0
        %4640 = vmatpush1.bf16.msra.mxu0 0
        %4641 = vmatprep.subr.bf16.mxu0 0
        %4642 = vmatpush1.bf16.msra.mxu0 0
        %4643 = vmatprep.subr.bf16.mxu0 0
        %4644 = vmatpush1.bf16.msra.mxu0 0
        %4645 = vmatprep.subr.bf16.mxu0 0
        %4646 = vmatpush1.bf16.msra.mxu0 0
        %4647 = vmatprep.subr.bf16.mxu0 0
        %4648 = vmatpush1.bf16.msra.mxu0 0
        %4649 = vmatprep.subr.bf16.mxu0 0
        %4650 = vmatpush1.bf16.msra.mxu0 0
        %4651 = vmatprep.subr.bf16.mxu0 0
        %4652 = vmatpush1.bf16.msra.mxu0 0
        %4653 = vmatprep.subr.bf16.mxu0 0
        %4654 = vmatpush1.bf16.msra.mxu0 %v4637
        %4655 = vmatprep.subr.bf16.mxu0 0
        %4656 = vmatpush2.bf16.msra.mxu0 0
        %4657 = vmatprep.subr.bf16.mxu0 0
        %4658 = vmatpush2.bf16.msra.mxu0 0
        %4659 = vmatprep.subr.bf16.mxu0 0
        %4660 = vmatpush2.bf16.msra.mxu0 0
        %4661 = vmatprep.subr.bf16.mxu0 0
        %4662 = vmatpush2.bf16.msra.mxu0 0
        %4663 = vmatprep.subr.bf16.mxu0 0
        %4664 = vmatpush2.bf16.msra.mxu0 0
        %4665 = vmatprep.subr.bf16.mxu0 0
        %4666 = vmatpush2.bf16.msra.mxu0 0
        %4667 = vmatprep.subr.bf16.mxu0 0
        %4668 = vmatpush2.bf16.msra.mxu0 0
        %4669 = vmatprep.subr.bf16.mxu0 0
        %4670 = vmatpush2.bf16.msra.mxu0 0
        %4671 = vmatprep.mubr.bf16.mxu0 0
        %4672 = vmatmul.mubr.bf16.gmra.mxu0 %v1883
        %v4673 = vpop.f32.mrf.mxu0
        %v4674 = vadd.f32 0.0, %v4673
        %v4675 = vpop.f32.mrf.mxu0
        %v4676 = vpop.f32.mrf.mxu0
        %v4677 = vpop.f32.mrf.mxu0
        %4678 = vdwg.mxu0
        %v4680 = vsel %vm483, %v4327, 0
        %4682 = vmatprep.subr.bf16.mxu0 0
        %4683 = vmatpush1.bf16.msra.mxu0 0
        %4684 = vmatprep.subr.bf16.mxu0 0
        %4685 = vmatpush1.bf16.msra.mxu0 0
        %4686 = vmatprep.subr.bf16.mxu0 0
        %4687 = vmatpush1.bf16.msra.mxu0 0
        %4688 = vmatprep.subr.bf16.mxu0 0
        %4689 = vmatpush1.bf16.msra.mxu0 0
        %4690 = vmatprep.subr.bf16.mxu0 0
        %4691 = vmatpush1.bf16.msra.mxu0 0
        %4692 = vmatprep.subr.bf16.mxu0 0
        %4693 = vmatpush1.bf16.msra.mxu0 0
        %4694 = vmatprep.subr.bf16.mxu0 0
        %4695 = vmatpush1.bf16.msra.mxu0 0
        %4696 = vmatprep.subr.bf16.mxu0 0
        %4697 = vmatpush1.bf16.msra.mxu0 %v4680
        %4698 = vmatprep.subr.bf16.mxu0 0
        %4699 = vmatpush2.bf16.msra.mxu0 0
        %4700 = vmatprep.subr.bf16.mxu0 0
        %4701 = vmatpush2.bf16.msra.mxu0 0
        %4702 = vmatprep.subr.bf16.mxu0 0
        %4703 = vmatpush2.bf16.msra.mxu0 0
        %4704 = vmatprep.subr.bf16.mxu0 0
        %4705 = vmatpush2.bf16.msra.mxu0 0
        %4706 = vmatprep.subr.bf16.mxu0 0
        %4707 = vmatpush2.bf16.msra.mxu0 0
        %4708 = vmatprep.subr.bf16.mxu0 0
        %4709 = vmatpush2.bf16.msra.mxu0 0
        %4710 = vmatprep.subr.bf16.mxu0 0
        %4711 = vmatpush2.bf16.msra.mxu0 0
        %4712 = vmatprep.subr.bf16.mxu0 0
        %4713 = vmatpush2.bf16.msra.mxu0 0
        %4714 = vmatprep.mubr.bf16.mxu0 0
        %4715 = vmatmul.mubr.bf16.gmra.mxu0 %v1929
        %v4716 = vpop.f32.mrf.mxu0
        %v4717 = vadd.f32 0.0, %v4716
        %v4718 = vpop.f32.mrf.mxu0
        %v4719 = vpop.f32.mrf.mxu0
        %v4720 = vpop.f32.mrf.mxu0
        %4721 = vdwg.mxu0
        %v4723 = vsel %vm483, %v4328, 0
        %4725 = vmatprep.subr.bf16.mxu0 0
        %4726 = vmatpush1.bf16.msra.mxu0 0
        %4727 = vmatprep.subr.bf16.mxu0 0
        %4728 = vmatpush1.bf16.msra.mxu0 0
        %4729 = vmatprep.subr.bf16.mxu0 0
        %4730 = vmatpush1.bf16.msra.mxu0 0
        %4731 = vmatprep.subr.bf16.mxu0 0
        %4732 = vmatpush1.bf16.msra.mxu0 0
        %4733 = vmatprep.subr.bf16.mxu0 0
        %4734 = vmatpush1.bf16.msra.mxu0 0
        %4735 = vmatprep.subr.bf16.mxu0 0
        %4736 = vmatpush1.bf16.msra.mxu0 0
        %4737 = vmatprep.subr.bf16.mxu0 0
        %4738 = vmatpush1.bf16.msra.mxu0 0
        %4739 = vmatprep.subr.bf16.mxu0 0
        %4740 = vmatpush1.bf16.msra.mxu0 %v4723
        %4741 = vmatprep.subr.bf16.mxu0 0
        %4742 = vmatpush2.bf16.msra.mxu0 0
        %4743 = vmatprep.subr.bf16.mxu0 0
        %4744 = vmatpush2.bf16.msra.mxu0 0
        %4745 = vmatprep.subr.bf16.mxu0 0
        %4746 = vmatpush2.bf16.msra.mxu0 0
        %4747 = vmatprep.subr.bf16.mxu0 0
        %4748 = vmatpush2.bf16.msra.mxu0 0
        %4749 = vmatprep.subr.bf16.mxu0 0
        %4750 = vmatpush2.bf16.msra.mxu0 0
        %4751 = vmatprep.subr.bf16.mxu0 0
        %4752 = vmatpush2.bf16.msra.mxu0 0
        %4753 = vmatprep.subr.bf16.mxu0 0
        %4754 = vmatpush2.bf16.msra.mxu0 0
        %4755 = vmatprep.subr.bf16.mxu0 0
        %4756 = vmatpush2.bf16.msra.mxu0 0
        %4757 = vmatprep.mubr.bf16.mxu0 0
        %4758 = vmatmul.mubr.bf16.gmra.mxu0 %v1975
        %v4759 = vpop.f32.mrf.mxu0
        %v4760 = vadd.f32 0.0, %v4759
        %v4761 = vpop.f32.mrf.mxu0
        %v4762 = vpop.f32.mrf.mxu0
        %v4763 = vpop.f32.mrf.mxu0
        %4764 = vdwg.mxu0
        %v4766 = vsel %vm483, %v4329, 0
        %4768 = vmatprep.subr.bf16.mxu0 0
        %4769 = vmatpush1.bf16.msra.mxu0 0
        %4770 = vmatprep.subr.bf16.mxu0 0
        %4771 = vmatpush1.bf16.msra.mxu0 0
        %4772 = vmatprep.subr.bf16.mxu0 0
        %4773 = vmatpush1.bf16.msra.mxu0 0
        %4774 = vmatprep.subr.bf16.mxu0 0
        %4775 = vmatpush1.bf16.msra.mxu0 0
        %4776 = vmatprep.subr.bf16.mxu0 0
        %4777 = vmatpush1.bf16.msra.mxu0 0
        %4778 = vmatprep.subr.bf16.mxu0 0
        %4779 = vmatpush1.bf16.msra.mxu0 0
        %4780 = vmatprep.subr.bf16.mxu0 0
        %4781 = vmatpush1.bf16.msra.mxu0 0
        %4782 = vmatprep.subr.bf16.mxu0 0
        %4783 = vmatpush1.bf16.msra.mxu0 %v4766
        %4784 = vmatprep.subr.bf16.mxu0 0
        %4785 = vmatpush2.bf16.msra.mxu0 0
        %4786 = vmatprep.subr.bf16.mxu0 0
        %4787 = vmatpush2.bf16.msra.mxu0 0
        %4788 = vmatprep.subr.bf16.mxu0 0
        %4789 = vmatpush2.bf16.msra.mxu0 0
        %4790 = vmatprep.subr.bf16.mxu0 0
        %4791 = vmatpush2.bf16.msra.mxu0 0
        %4792 = vmatprep.subr.bf16.mxu0 0
        %4793 = vmatpush2.bf16.msra.mxu0 0
        %4794 = vmatprep.subr.bf16.mxu0 0
        %4795 = vmatpush2.bf16.msra.mxu0 0
        %4796 = vmatprep.subr.bf16.mxu0 0
        %4797 = vmatpush2.bf16.msra.mxu0 0
        %4798 = vmatprep.subr.bf16.mxu0 0
        %4799 = vmatpush2.bf16.msra.mxu0 0
        %4800 = vmatprep.mubr.bf16.mxu0 0
        %4801 = vmatmul.mubr.bf16.gmra.mxu0 %v2021
        %v4802 = vpop.f32.mrf.mxu0
        %v4803 = vadd.f32 0.0, %v4802
        %v4804 = vpop.f32.mrf.mxu0
        %v4805 = vpop.f32.mrf.mxu0
        %v4806 = vpop.f32.mrf.mxu0
        %4807 = vdwg.mxu0
        %v4809 = vsel %vm483, %v4330, 0
        %4811 = vmatprep.subr.bf16.mxu0 0
        %4812 = vmatpush1.bf16.msra.mxu0 0
        %4813 = vmatprep.subr.bf16.mxu0 0
        %4814 = vmatpush1.bf16.msra.mxu0 0
        %4815 = vmatprep.subr.bf16.mxu0 0
        %4816 = vmatpush1.bf16.msra.mxu0 0
        %4817 = vmatprep.subr.bf16.mxu0 0
        %4818 = vmatpush1.bf16.msra.mxu0 0
        %4819 = vmatprep.subr.bf16.mxu0 0
        %4820 = vmatpush1.bf16.msra.mxu0 0
        %4821 = vmatprep.subr.bf16.mxu0 0
        %4822 = vmatpush1.bf16.msra.mxu0 0
        %4823 = vmatprep.subr.bf16.mxu0 0
        %4824 = vmatpush1.bf16.msra.mxu0 0
        %4825 = vmatprep.subr.bf16.mxu0 0
        %4826 = vmatpush1.bf16.msra.mxu0 %v4809
        %4827 = vmatprep.subr.bf16.mxu0 0
        %4828 = vmatpush2.bf16.msra.mxu0 0
        %4829 = vmatprep.subr.bf16.mxu0 0
        %4830 = vmatpush2.bf16.msra.mxu0 0
        %4831 = vmatprep.subr.bf16.mxu0 0
        %4832 = vmatpush2.bf16.msra.mxu0 0
        %4833 = vmatprep.subr.bf16.mxu0 0
        %4834 = vmatpush2.bf16.msra.mxu0 0
        %4835 = vmatprep.subr.bf16.mxu0 0
        %4836 = vmatpush2.bf16.msra.mxu0 0
        %4837 = vmatprep.subr.bf16.mxu0 0
        %4838 = vmatpush2.bf16.msra.mxu0 0
        %4839 = vmatprep.subr.bf16.mxu0 0
        %4840 = vmatpush2.bf16.msra.mxu0 0
        %4841 = vmatprep.subr.bf16.mxu0 0
        %4842 = vmatpush2.bf16.msra.mxu0 0
        %4843 = vmatprep.mubr.bf16.mxu0 0
        %4844 = vmatmul.mubr.bf16.gmra.mxu0 %v2067
        %v4845 = vpop.f32.mrf.mxu0
        %v4846 = vadd.f32 0.0, %v4845
        %v4847 = vpop.f32.mrf.mxu0
        %v4848 = vpop.f32.mrf.mxu0
        %v4849 = vpop.f32.mrf.mxu0
        %4850 = vdwg.mxu0
        %v4852 = vsel %vm483, %v4331, 0
        %4854 = vmatprep.subr.bf16.mxu0 0
        %4855 = vmatpush1.bf16.msra.mxu0 0
        %4856 = vmatprep.subr.bf16.mxu0 0
        %4857 = vmatpush1.bf16.msra.mxu0 0
        %4858 = vmatprep.subr.bf16.mxu0 0
        %4859 = vmatpush1.bf16.msra.mxu0 0
        %4860 = vmatprep.subr.bf16.mxu0 0
        %4861 = vmatpush1.bf16.msra.mxu0 0
        %4862 = vmatprep.subr.bf16.mxu0 0
        %4863 = vmatpush1.bf16.msra.mxu0 0
        %4864 = vmatprep.subr.bf16.mxu0 0
        %4865 = vmatpush1.bf16.msra.mxu0 0
        %4866 = vmatprep.subr.bf16.mxu0 0
        %4867 = vmatpush1.bf16.msra.mxu0 0
        %4868 = vmatprep.subr.bf16.mxu0 0
        %4869 = vmatpush1.bf16.msra.mxu0 %v4852
        %4870 = vmatprep.subr.bf16.mxu0 0
        %4871 = vmatpush2.bf16.msra.mxu0 0
        %4872 = vmatprep.subr.bf16.mxu0 0
        %4873 = vmatpush2.bf16.msra.mxu0 0
        %4874 = vmatprep.subr.bf16.mxu0 0
        %4875 = vmatpush2.bf16.msra.mxu0 0
        %4876 = vmatprep.subr.bf16.mxu0 0
        %4877 = vmatpush2.bf16.msra.mxu0 0
        %4878 = vmatprep.subr.bf16.mxu0 0
        %4879 = vmatpush2.bf16.msra.mxu0 0
        %4880 = vmatprep.subr.bf16.mxu0 0
        %4881 = vmatpush2.bf16.msra.mxu0 0
        %4882 = vmatprep.subr.bf16.mxu0 0
        %4883 = vmatpush2.bf16.msra.mxu0 0
        %4884 = vmatprep.subr.bf16.mxu0 0
        %4885 = vmatpush2.bf16.msra.mxu0 0
        %4886 = vmatprep.mubr.bf16.mxu0 0
        %4887 = vmatmul.mubr.bf16.gmra.mxu0 %v2113
        %v4888 = vpop.f32.mrf.mxu0
        %v4889 = vadd.f32 0.0, %v4888
        %v4890 = vpop.f32.mrf.mxu0
        %v4891 = vpop.f32.mrf.mxu0
        %v4892 = vpop.f32.mrf.mxu0
        %4893 = vdwg.mxu0
        %v4895 = vsel %vm483, %v4332, 0
        %4897 = vmatprep.subr.bf16.mxu0 0
        %4898 = vmatpush1.bf16.msra.mxu0 0
        %4899 = vmatprep.subr.bf16.mxu0 0
        %4900 = vmatpush1.bf16.msra.mxu0 0
        %4901 = vmatprep.subr.bf16.mxu0 0
        %4902 = vmatpush1.bf16.msra.mxu0 0
        %4903 = vmatprep.subr.bf16.mxu0 0
        %4904 = vmatpush1.bf16.msra.mxu0 0
        %4905 = vmatprep.subr.bf16.mxu0 0
        %4906 = vmatpush1.bf16.msra.mxu0 0
        %4907 = vmatprep.subr.bf16.mxu0 0
        %4908 = vmatpush1.bf16.msra.mxu0 0
        %4909 = vmatprep.subr.bf16.mxu0 0
        %4910 = vmatpush1.bf16.msra.mxu0 0
        %4911 = vmatprep.subr.bf16.mxu0 0
        %4912 = vmatpush1.bf16.msra.mxu0 %v4895
        %4913 = vmatprep.subr.bf16.mxu0 0
        %4914 = vmatpush2.bf16.msra.mxu0 0
        %4915 = vmatprep.subr.bf16.mxu0 0
        %4916 = vmatpush2.bf16.msra.mxu0 0
        %4917 = vmatprep.subr.bf16.mxu0 0
        %4918 = vmatpush2.bf16.msra.mxu0 0
        %4919 = vmatprep.subr.bf16.mxu0 0
        %4920 = vmatpush2.bf16.msra.mxu0 0
        %4921 = vmatprep.subr.bf16.mxu0 0
        %4922 = vmatpush2.bf16.msra.mxu0 0
        %4923 = vmatprep.subr.bf16.mxu0 0
        %4924 = vmatpush2.bf16.msra.mxu0 0
        %4925 = vmatprep.subr.bf16.mxu0 0
        %4926 = vmatpush2.bf16.msra.mxu0 0
        %4927 = vmatprep.subr.bf16.mxu0 0
        %4928 = vmatpush2.bf16.msra.mxu0 0
        %4929 = vmatprep.mubr.bf16.mxu0 0
        %4930 = vmatmul.mubr.bf16.gmra.mxu0 %v2159
        %v4931 = vpop.f32.mrf.mxu0
        %v4932 = vadd.f32 0.0, %v4931
        %v4933 = vpop.f32.mrf.mxu0
        %v4934 = vpop.f32.mrf.mxu0
        %v4935 = vpop.f32.mrf.mxu0
        %4936 = vdwg.mxu0
        %v4938 = vsel %vm483, %v4333, 0
        %4940 = vmatprep.subr.bf16.mxu0 0
        %4941 = vmatpush1.bf16.msra.mxu0 0
        %4942 = vmatprep.subr.bf16.mxu0 0
        %4943 = vmatpush1.bf16.msra.mxu0 0
        %4944 = vmatprep.subr.bf16.mxu0 0
        %4945 = vmatpush1.bf16.msra.mxu0 0
        %4946 = vmatprep.subr.bf16.mxu0 0
        %4947 = vmatpush1.bf16.msra.mxu0 0
        %4948 = vmatprep.subr.bf16.mxu0 0
        %4949 = vmatpush1.bf16.msra.mxu0 0
        %4950 = vmatprep.subr.bf16.mxu0 0
        %4951 = vmatpush1.bf16.msra.mxu0 0
        %4952 = vmatprep.subr.bf16.mxu0 0
        %4953 = vmatpush1.bf16.msra.mxu0 0
        %4954 = vmatprep.subr.bf16.mxu0 0
        %4955 = vmatpush1.bf16.msra.mxu0 %v4938
        %4956 = vmatprep.subr.bf16.mxu0 0
        %4957 = vmatpush2.bf16.msra.mxu0 0
        %4958 = vmatprep.subr.bf16.mxu0 0
        %4959 = vmatpush2.bf16.msra.mxu0 0
        %4960 = vmatprep.subr.bf16.mxu0 0
        %4961 = vmatpush2.bf16.msra.mxu0 0
        %4962 = vmatprep.subr.bf16.mxu0 0
        %4963 = vmatpush2.bf16.msra.mxu0 0
        %4964 = vmatprep.subr.bf16.mxu0 0
        %4965 = vmatpush2.bf16.msra.mxu0 0
        %4966 = vmatprep.subr.bf16.mxu0 0
        %4967 = vmatpush2.bf16.msra.mxu0 0
        %4968 = vmatprep.subr.bf16.mxu0 0
        %4969 = vmatpush2.bf16.msra.mxu0 0
        %4970 = vmatprep.subr.bf16.mxu0 0
        %4971 = vmatpush2.bf16.msra.mxu0 0
        %4972 = vmatprep.mubr.bf16.mxu0 0
        %4973 = vmatmul.mubr.bf16.gmra.mxu0 %v2205
        %v4974 = vpop.f32.mrf.mxu0
        %v4975 = vadd.f32 0.0, %v4974
        %v4976 = vpop.f32.mrf.mxu0
        %v4977 = vpop.f32.mrf.mxu0
        %v4978 = vpop.f32.mrf.mxu0
        %4979 = vdwg.mxu0
        %v4981 = vsel %vm483, %v4334, 0
        %4983 = vmatprep.subr.bf16.mxu0 0
        %4984 = vmatpush1.bf16.msra.mxu0 0
        %4985 = vmatprep.subr.bf16.mxu0 0
        %4986 = vmatpush1.bf16.msra.mxu0 0
        %4987 = vmatprep.subr.bf16.mxu0 0
        %4988 = vmatpush1.bf16.msra.mxu0 0
        %4989 = vmatprep.subr.bf16.mxu0 0
        %4990 = vmatpush1.bf16.msra.mxu0 0
        %4991 = vmatprep.subr.bf16.mxu0 0
        %4992 = vmatpush1.bf16.msra.mxu0 0
        %4993 = vmatprep.subr.bf16.mxu0 0
        %4994 = vmatpush1.bf16.msra.mxu0 0
        %4995 = vmatprep.subr.bf16.mxu0 0
        %4996 = vmatpush1.bf16.msra.mxu0 0
        %4997 = vmatprep.subr.bf16.mxu0 0
        %4998 = vmatpush1.bf16.msra.mxu0 %v4981
        %4999 = vmatprep.subr.bf16.mxu0 0
        %5000 = vmatpush2.bf16.msra.mxu0 0
        %5001 = vmatprep.subr.bf16.mxu0 0
        %5002 = vmatpush2.bf16.msra.mxu0 0
        %5003 = vmatprep.subr.bf16.mxu0 0
        %5004 = vmatpush2.bf16.msra.mxu0 0
        %5005 = vmatprep.subr.bf16.mxu0 0
        %5006 = vmatpush2.bf16.msra.mxu0 0
        %5007 = vmatprep.subr.bf16.mxu0 0
        %5008 = vmatpush2.bf16.msra.mxu0 0
        %5009 = vmatprep.subr.bf16.mxu0 0
        %5010 = vmatpush2.bf16.msra.mxu0 0
        %5011 = vmatprep.subr.bf16.mxu0 0
        %5012 = vmatpush2.bf16.msra.mxu0 0
        %5013 = vmatprep.subr.bf16.mxu0 0
        %5014 = vmatpush2.bf16.msra.mxu0 0
        %5015 = vmatprep.mubr.bf16.mxu0 0
        %5016 = vmatmul.mubr.bf16.gmra.mxu0 %v2251
        %v5017 = vpop.f32.mrf.mxu0
        %v5018 = vadd.f32 0.0, %v5017
        %v5019 = vpop.f32.mrf.mxu0
        %v5020 = vpop.f32.mrf.mxu0
        %v5021 = vpop.f32.mrf.mxu0
        %5022 = vdwg.mxu0
        %v5023 = vlaneseq
        %v5024 = vshrl.u32 %v5023, 7
        %v5025 = vsub.s32 4, %v5024
        %v5026 = vrot.slane %v417, %v5025
        %v5027 = vadd.f32 %v4373, %v5026
        %v5028 = vadd.f32 %v4416, %v5026
        %v5029 = vadd.f32 %v4459, %v5026
        %v5030 = vadd.f32 %v4502, %v5026
        %v5031 = vadd.f32 %v4545, %v5026
        %v5032 = vadd.f32 %v4588, %v5026
        %v5033 = vadd.f32 %v4631, %v5026
        %v5034 = vadd.f32 %v4674, %v5026
        %v5035 = vadd.f32 %v4717, %v5026
        %v5036 = vadd.f32 %v4760, %v5026
        %v5037 = vadd.f32 %v4803, %v5026
        %v5038 = vadd.f32 %v4846, %v5026
        %v5039 = vadd.f32 %v4889, %v5026
        %v5040 = vadd.f32 %v4932, %v5026
        %v5041 = vadd.f32 %v4975, %v5026
        %v5042 = vadd.f32 %v5018, %v5026
        %5043 = vst [vmem:[%s281] sm:$0xff] %v3225
        %5044 = vst [vmem:[%s281 + $0x8] sm:$0xff] %v3226
        %5045 = vst [vmem:[%s281 + $0x10] sm:$0xff] %v3227
        %5046 = vst [vmem:[%s281 + $0x18] sm:$0xff] %v3228
        %5047 = vst [vmem:[%s281 + $0x20] sm:$0xff] %v3229
        %5048 = vst [vmem:[%s281 + $0x28] sm:$0xff] %v3230
        %5049 = vst [vmem:[%s281 + $0x30] sm:$0xff] %v3231
        %5050 = vst [vmem:[%s281 + $0x38] sm:$0xff] %v3232
        %5051 = vst [vmem:[%s281 + $0x40] sm:$0xff] %v3233
        %5052 = vst [vmem:[%s281 + $0x48] sm:$0xff] %v3234
        %5053 = vst [vmem:[%s281 + $0x50] sm:$0xff] %v3235
        %5054 = vst [vmem:[%s281 + $0x58] sm:$0xff] %v3236
        %5055 = vst [vmem:[%s281 + $0x60] sm:$0xff] %v3237
        %5056 = vst [vmem:[%s281 + $0x68] sm:$0xff] %v3238
        %5057 = vst [vmem:[%s281 + $0x70] sm:$0xff] %v3239
        %5058 = vst [vmem:[%s281 + $0x78] sm:$0xff] %v3240
        %5059 = vst [vmem:[%s288] sm:$0xff] %v4126
        %5060 = vst [vmem:[%s288 + $0x8] sm:$0xff] %v4127
        %5061 = vst [vmem:[%s288 + $0x10] sm:$0xff] %v4128
        %5062 = vst [vmem:[%s288 + $0x18] sm:$0xff] %v4129
        %5063 = vst [vmem:[%s288 + $0x20] sm:$0xff] %v4130
        %5064 = vst [vmem:[%s288 + $0x28] sm:$0xff] %v4131
        %5065 = vst [vmem:[%s288 + $0x30] sm:$0xff] %v4132
        %5066 = vst [vmem:[%s288 + $0x38] sm:$0xff] %v4133
        %5067 = vst [vmem:[%s288 + $0x40] sm:$0xff] %v4134
        %5068 = vst [vmem:[%s288 + $0x48] sm:$0xff] %v4135
        %5069 = vst [vmem:[%s288 + $0x50] sm:$0xff] %v4136
        %5070 = vst [vmem:[%s288 + $0x58] sm:$0xff] %v4137
        %5071 = vst [vmem:[%s288 + $0x60] sm:$0xff] %v4138
        %5072 = vst [vmem:[%s288 + $0x68] sm:$0xff] %v4139
        %5073 = vst [vmem:[%s288 + $0x70] sm:$0xff] %v4140
        %5074 = vst [vmem:[%s288 + $0x78] sm:$0xff] %v4141
        %5075 = vst [vmem:[%s295] sm:$0xff] %v5027
        %5076 = vst [vmem:[%s295 + $0x8] sm:$0xff] %v5028
        %5077 = vst [vmem:[%s295 + $0x10] sm:$0xff] %v5029
        %5078 = vst [vmem:[%s295 + $0x18] sm:$0xff] %v5030
        %5079 = vst [vmem:[%s295 + $0x20] sm:$0xff] %v5031
        %5080 = vst [vmem:[%s295 + $0x28] sm:$0xff] %v5032
        %5081 = vst [vmem:[%s295 + $0x30] sm:$0xff] %v5033
        %5082 = vst [vmem:[%s295 + $0x38] sm:$0xff] %v5034
        %5083 = vst [vmem:[%s295 + $0x40] sm:$0xff] %v5035
        %5084 = vst [vmem:[%s295 + $0x48] sm:$0xff] %v5036
        %5085 = vst [vmem:[%s295 + $0x50] sm:$0xff] %v5037
        %5086 = vst [vmem:[%s295 + $0x58] sm:$0xff] %v5038
        %5087 = vst [vmem:[%s295 + $0x60] sm:$0xff] %v5039
        %5088 = vst [vmem:[%s295 + $0x68] sm:$0xff] %v5040
        %5089 = vst [vmem:[%s295 + $0x70] sm:$0xff] %v5041
        %5090 = vst [vmem:[%s295 + $0x78] sm:$0xff] %v5042
        %s5091 = sand.u32 %s131, 1
        %s5092 = scalar_lea.sflag [#allocation3], %s5091
        %s5093 = sand.u32 %s131, 1
        %s5094 = smul.addr %s5093, 128
        %s5095 = scalar_lea.vmem [#allocation2], %s5094
        %s5096 = sand.u32 %s24, 1
        %s5097 = scalar_lea.sflag [#allocation5], %s5096
        %s5098 = sand.u32 %s157, 1
        %s5099 = smul.addr %s5098, 128
        %s5100 = scalar_lea.vmem [#allocation4], %s5099
        %s5101 = sand.u32 %s24, 1
        %s5102 = scalar_lea.sflag [#allocation5], %s5101
        %s5103 = sand.u32 %s183, 1
        %s5104 = smul.addr %s5103, 128
        %s5105 = scalar_lea.vmem [#allocation6], %s5104
        // Predicated region
        $region37: #{tpu_custom_call.1} parent=35 // pred_check
          %p5106 = pneg %p141
        $region38: #{tpu_custom_call.1} parent=35 // pred_check_branch
          %5108 = sbr.rel (%p5106) target = $region40
        $region39: #{tpu_custom_call.1} parent=35 // pred_region
          %s5109 = smul.u32 16, %s24
          %s5111 = ssub.s32 2048, 2048
          %5112 = vsyncadd %s5092, %s5111
          %s5113 = smul.addr %s5109, 128
          %s5114 = scalar_lea.hbm %s4, %s5113
          %s5115 = sshll.u32 %s5095, 4
          %s5116 = int_to_ptr.vmem [resolvable:$true] %s5115
          %5121 = dma.vmem_to_hbm [thread:$0]  %s5116, 2048, %s5114, %s5092, 128, 128, 8
        $region40: #{tpu_custom_call.1} parent=35 // pred_fallthru
          _
        // Predicated region
        $region41: #{tpu_custom_call.1} parent=35 // pred_check
          %p5122 = pneg %p167
        $region42: #{tpu_custom_call.1} parent=35 // pred_check_branch
          %5124 = sbr.rel (%p5122) target = $region44
        $region43: #{tpu_custom_call.1} parent=35 // pred_region
          %s5125 = smul.u32 16, %s24
          %s5127 = ssub.s32 2048, 2048
          %5128 = vsyncadd %s5097, %s5127
          %s5129 = smul.addr %s5125, 128
          %s5130 = scalar_lea.hbm %s5, %s5129
          %s5131 = sshll.u32 %s5100, 4
          %s5132 = int_to_ptr.vmem [resolvable:$true] %s5131
          %5137 = dma.vmem_to_hbm [thread:$0]  %s5132, 2048, %s5130, %s5097, 128, 128, 8
        $region44: #{tpu_custom_call.1} parent=35 // pred_fallthru
          _
        // Predicated region
        $region45: #{tpu_custom_call.1} parent=35 // pred_check
          %p5138 = pneg %p193
        $region46: #{tpu_custom_call.1} parent=35 // pred_check_branch
          %5140 = sbr.rel (%p5138) target = $region48
        $region47: #{tpu_custom_call.1} parent=35 // pred_region
          %s5141 = smul.u32 16, %s24
          %s5143 = ssub.s32 2048, 2048
          %5144 = vsyncadd %s5102, %s5143
          %s5145 = smul.addr %s5141, 128
          %s5146 = scalar_lea.hbm %s6, %s5145
          %s5147 = sshll.u32 %s5105, 4
          %s5148 = int_to_ptr.vmem [resolvable:$true] %s5147
          %5153 = dma.vmem_to_hbm [thread:$0]  %s5148, 2048, %s5146, %s5102, 128, 128, 8
        $region48: #{tpu_custom_call.1} parent=35 // pred_fallthru
          _
      $region36: #{tpu_custom_call.1} parent=5 // pred_fallthru
        _
      %p5154 = scmp.le.s32.totalorder 2, %s19
      // Predicated region
      $region49: #{tpu_custom_call.1} parent=5 // pred_check
        %p5155 = pneg %p5154
      $region50: #{tpu_custom_call.1} parent=5 // pred_check_branch
        %5157 = sbr.rel (%p5155) target = $region52
      $region51: #{tpu_custom_call.1} parent=5 // pred_region
        %s5158 = ssub.s32 %s19, 2
        // Predicated region
        $region53: #{tpu_custom_call.1} parent=51 // pred_check
          %p5159 = pneg %p147
        $region54: #{tpu_custom_call.1} parent=51 // pred_check_branch
          %5161 = sbr.rel (%p5159) target = $region56
        $region55: #{tpu_custom_call.1} parent=51 // pred_region
          %s5162 = sand.u32 %s132, 1
          %s5163 = scalar_lea.sflag [#allocation3], %s5162
          %s5164 = sand.u32 %s132, 1
          %s5165 = smul.addr %s5164, 128
          %s5166 = scalar_lea.vmem [#allocation2], %s5165
          %5167 = dma.done %s5163, 2048
        $region56: #{tpu_custom_call.1} parent=51 // pred_fallthru
          _
        // Predicated region
        $region57: #{tpu_custom_call.1} parent=51 // pred_check
          %p5168 = pneg %p173
        $region58: #{tpu_custom_call.1} parent=51 // pred_check_branch
          %5170 = sbr.rel (%p5168) target = $region60
        $region59: #{tpu_custom_call.1} parent=51 // pred_region
          %s5171 = sand.u32 %s25, 1
          %s5172 = scalar_lea.sflag [#allocation5], %s5171
          %s5173 = sand.u32 %s158, 1
          %s5174 = smul.addr %s5173, 128
          %s5175 = scalar_lea.vmem [#allocation4], %s5174
          %5176 = dma.done %s5172, 2048
        $region60: #{tpu_custom_call.1} parent=51 // pred_fallthru
          _
        // Predicated region
        $region61: #{tpu_custom_call.1} parent=51 // pred_check
          %p5177 = pneg %p199
        $region62: #{tpu_custom_call.1} parent=51 // pred_check_branch
          %5179 = sbr.rel (%p5177) target = $region64
        $region63: #{tpu_custom_call.1} parent=51 // pred_region
          %s5180 = sand.u32 %s25, 1
          %s5181 = scalar_lea.sflag [#allocation5], %s5180
          %s5182 = sand.u32 %s184, 1
          %s5183 = smul.addr %s5182, 128
          %s5184 = scalar_lea.vmem [#allocation6], %s5183
          %5185 = dma.done %s5181, 2048
        $region64: #{tpu_custom_call.1} parent=51 // pred_fallthru
          _
      $region52: #{tpu_custom_call.1} parent=5 // pred_fallthru
        _
    $region6: #{tpu_custom_call.1} parent=1 // loop_footer
      %s23 = sadd.s32 1, %s19
    $region7: #{tpu_custom_call.1} parent=1 // loop_footer_branch
      %18 = sbr.rel target = $region3
    $region8: #{tpu_custom_call.1} parent=1 // loop_exit
      _
    %5186 = vsyncpa [#allocation3], 1
    %s5187 = scalar_lea.sflag [#allocation3], 1
    %5188 = vsyncpa %s5187, 1
    %5189 = vsyncpa [#allocation5], 1
    %s5190 = scalar_lea.sflag [#allocation5], 1
    %5191 = vsyncpa %s5190, 1

</llo_original>
